<compile_context>
chip_gen: v7x
topology: tpu7x:2x2x1
jax: 0.10.0
libtpu: 0.0.40
codegen_flags: <defaults>
</compile_context>

<pallas_src>
import functools
import math

import jax
import jax.numpy as jnp
from jax.experimental import pallas as pl
from jax.experimental.pallas import tpu as pltpu

# ----------------------------- model configuration -----------------------------
NODE_TYPES = ("a", "b")
NUM_TYPES = len(NODE_TYPES)
EDGE_TYPES = (("a", "ab", "b"), ("b", "ba", "a"))

IN_CHANNELS = 8
HID = 32                 # hid_dim_conv
HEADS = 2                # num_heads
HEAD_DIM = HID // HEADS
NUM_CONV_LAYERS = 2      # minimum allowed by the module
POOL_SIZE = 4
OUT_CHANNELS = 4
NUM_FC_LAYERS = 2
EPS = 1e-5
NPAD = 16                # node count padded to a sublane multiple (covers 12 and 10)


def _gelu(x):
    # TODO(synk): PyTorch F.gelu default is erf-based; tanh approximation used here
    # (erf has no guaranteed Mosaic lowering); max abs difference is ~1e-3.
    c = math.sqrt(2.0 / math.pi)
    return 0.5 * x * (1.0 + jnp.tanh(c * (x + 0.044715 * x * x * x)))


# ----------------------------- Pallas kernels ----------------------------------
def _conv_kernel(x_dst_ref, x_src_ref, wq_ref, bq_ref, wkv_ref, bkv_ref,
                 mask_ref, wa_ref, ba_ref, gate_ref, gamma_ref, beta_ref,
                 wp_ref, bp_ref, o_ref, s_ref, *, has_skip, do_ln):
    """One full HGTConv layer for one destination node type (one grid step).

    x_dst_ref : (1, NPAD, din)   destination-type node features
    x_src_ref : (1, NPAD, din)   source-type node features (index_map picks 1-t)
    wq/bq     : Q projection of the destination type
    wkv/bkv   : K|V projection of the source type, relation transform + p_rel
                prior pre-composed at parameter-prep time (din, 2*HID)
    mask_ref  : (1, NPAD, NPAD)  dense adjacency mask [dst, src]
    wa/ba     : output linear;  gate: sigmoid(skip) broadcast to (1,1,HID)
    gamma/beta: LayerNorm params (used iff do_ln);  wp/bp: pool scoring linear
    o_ref     : (1, NPAD, HID)   post-(LN)+GELU node features
    s_ref     : (1, NPAD, 1)     pooling score (only consumed after last layer)
    """
    x_dst = x_dst_ref[0]
    x_src = x_src_ref[0]

    q = jnp.dot(x_dst, wq_ref[0], preferred_element_type=jnp.float32) + bq_ref[0]
    kv = jnp.dot(x_src, wkv_ref[0], preferred_element_type=jnp.float32) + bkv_ref[0]
    mask = mask_ref[0]

    scale = jnp.float32(1.0 / math.sqrt(HEAD_DIM))
    neg_inf = jnp.float32(-1e30)

    head_outs = []
    for h in range(HEADS):                      # 2 static lane slices, no relayout
        lo, hi = h * HEAD_DIM, (h + 1) * HEAD_DIM
        qh = q[:, lo:hi]
        kh = kv[:, lo:hi]
        vh = kv[:, HID + lo:HID + hi]
        s = jax.lax.dot_general(qh, kh, (((1,), (1,)), ((), ())),
                                preferred_element_type=jnp.float32) * scale
        s = jnp.where(mask > 0, s, neg_inf)
        mrow = jnp.max(s, axis=-1, keepdims=True)
        e = jnp.exp(s - mrow) * mask
        denom = jnp.sum(e, axis=-1, keepdims=True)
        alpha = e / (denom + 1e-16)             # rows with no incoming edges -> zeros
        head_outs.append(jnp.dot(alpha, vh, preferred_element_type=jnp.float32))
    agg = jnp.concatenate(head_outs, axis=-1)   # (NPAD, HID)

    out = jnp.dot(_gelu(agg), wa_ref[0], preferred_element_type=jnp.float32) + ba_ref[0]
    if has_skip:
        g = gate_ref[0]                         # (1, HID) broadcast of sigmoid(skip)
        out = g * out + (1.0 - g) * x_dst
    if do_ln:
        mu = jnp.mean(out, axis=-1, keepdims=True)
        xc = out - mu
        var = jnp.mean(xc * xc, axis=-1, keepdims=True)
        out = xc * jax.lax.rsqrt(var + EPS) * gamma_ref[0] + beta_ref[0]
    out = _gelu(out)

    o_ref[0] = out
    s_ref[0] = jnp.dot(out, wp_ref[0], preferred_element_type=jnp.float32) + bp_ref[0]


def conv_layer_call(x, mask_stack, lp, pool, *, has_skip, do_ln):
    """x: (NUM_TYPES, NPAD, din) -> (features (NUM_TYPES,NPAD,HID), scores (NUM_TYPES,NPAD,1))."""
    din = x.shape[-1]
    operands = (x, x, lp["Wq"], lp["bq"], lp["Wkv"], lp["bkv"], mask_stack,
                lp["Wa"], lp["ba"], lp["gate"], lp["gamma"], lp["beta"],
                pool["W"], pool["b"])
    in_specs = [
        pl.BlockSpec((1, NPAD, din), lambda t: (t, 0, 0)),        # x as destination
        pl.BlockSpec((1, NPAD, din), lambda t: (1 - t, 0, 0)),    # x as source (other type)
        pl.BlockSpec((1, din, HID), lambda t: (t, 0, 0)),
        pl.BlockSpec((1, 1, HID), lambda t: (t, 0, 0)),
        pl.BlockSpec((1, din, 2 * HID), lambda t: (t, 0, 0)),
        pl.BlockSpec((1, 1, 2 * HID), lambda t: (t, 0, 0)),
        pl.BlockSpec((1, NPAD, NPAD), lambda t: (t, 0, 0)),
        pl.BlockSpec((1, HID, HID), lambda t: (t, 0, 0)),
        pl.BlockSpec((1, 1, HID), lambda t: (t, 0, 0)),
        pl.BlockSpec((1, 1, HID), lambda t: (t, 0, 0)),
        pl.BlockSpec((1, 1, HID), lambda t: (t, 0, 0)),
        pl.BlockSpec((1, 1, HID), lambda t: (t, 0, 0)),
        pl.BlockSpec((1, HID, 1), lambda t: (t, 0, 0)),
        pl.BlockSpec((1, 1, 1), lambda t: (t, 0, 0)),
    ]
    out_specs = [pl.BlockSpec((1, NPAD, HID), lambda t: (t, 0, 0)),
                 pl.BlockSpec((1, NPAD, 1), lambda t: (t, 0, 0))]
    out_shape = (jax.ShapeDtypeStruct((NUM_TYPES, NPAD, HID), jnp.float32),
                 jax.ShapeDtypeStruct((NUM_TYPES, NPAD, 1), jnp.float32))
    kern = functools.partial(_conv_kernel, has_skip=has_skip, do_ln=do_ln)
    return pl.pallas_call(
        kern,
        grid=(NUM_TYPES,),
        in_specs=in_specs,
        out_specs=out_specs,
        out_shape=out_shape,
        compiler_params=pltpu.CompilerParams(dimension_semantics=("parallel",)),
    )(*operands)


def _make_mlp_kernel(n_layers):
    def kernel(*refs):
        h = refs[0][...]
        o_ref = refs[-1]
        for i in range(n_layers):
            w = refs[1 + 2 * i][...]
            b = refs[2 + 2 * i][...]
            h = jnp.dot(h, w, preferred_element_type=jnp.float32) + b
            if i < n_layers - 1:
                h = _gelu(h)
        o_ref[...] = h
    return kernel


def mlp_call(h, mlp):
    operands = [h]
    in_specs = [pl.BlockSpec(h.shape, lambda i: (0, 0))]
    for layer in mlp:
        operands += [layer["W"], layer["b"]]
        in_specs += [pl.BlockSpec(layer["W"].shape, lambda i: (0, 0)),
                     pl.BlockSpec(layer["b"].shape, lambda i: (0, 0))]
    dout = mlp[-1]["W"].shape[1]
    return pl.pallas_call(
        _make_mlp_kernel(len(mlp)),
        grid=(1,),
        in_specs=in_specs,
        out_specs=pl.BlockSpec((1, dout), lambda i: (0, 0)),
        out_shape=jax.ShapeDtypeStruct((1, dout), jnp.float32),
        compiler_params=pltpu.CompilerParams(dimension_semantics=("arbitrary",)),
    )(*operands)


# ----------------------------- forward (glue + kernel calls) -------------------
def hgt_forward(prepped, x_stack, mask_stack, valid_mask):
    x = x_stack
    score = None
    in_dims = [IN_CHANNELS] + [HID] * (NUM_CONV_LAYERS - 1)
    for l in range(NUM_CONV_LAYERS):
        last = (l == NUM_CONV_LAYERS - 1)
        x, score = conv_layer_call(
            x, mask_stack, prepped["conv"][l], prepped["pool"],
            has_skip=(in_dims[l] == HID),   # PyG skip only when in/out dims match
            do_ln=not last)                 # last layer: GELU only (no LayerNorm)

    # TODO(synk): HetSAGPooling source unavailable; SAGPool-style per-type linear
    # scoring (fused into the last conv kernel) + global top-k gated by tanh(score).
    feat = x.reshape(NUM_TYPES * NPAD, HID)
    sc = jnp.where(valid_mask, score.reshape(NUM_TYPES * NPAD), jnp.float32(-1e30))
    top_vals, top_idx = jax.lax.top_k(sc, POOL_SIZE)
    sel = feat[top_idx] * jnp.tanh(top_vals)[:, None]
    h = sel.reshape(1, POOL_SIZE * HID)

    h = mlp_call(h, prepped["mlp"])          # fused Linear+GELU / Linear+GELU / Linear
    return jnp.nan_to_num(h)


# ----------------------------- deterministic parameter init --------------------
def _kaiming_normal(key, fan_in, shape):
    gain = math.sqrt(2.0 / (1.0 + 0.01 ** 2))   # kaiming fan_in, leaky_relu
    return (gain / math.sqrt(fan_in)) * jax.random.normal(key, shape, jnp.float32)


def init_params(key):
    ks = iter(jax.random.split(key, 256))
    conv = []
    in_dims = [IN_CHANNELS] + [HID] * (NUM_CONV_LAYERS - 1)
    for l in range(NUM_CONV_LAYERS):
        din = in_dims[l]
        lp = {"Wk": {}, "bk": {}, "Wq": {}, "bq": {}, "Wv": {}, "bv": {},
              "Wa": {}, "ba": {}, "skip": {}, "a_rel": {}, "m_rel": {}, "p_rel": {}}
        for nt in NODE_TYPES:
            lp["Wk"][nt] = _kaiming_normal(next(ks), din, (din, HID))
            lp["bk"][nt] = jnp.zeros((HID,), jnp.float32)
            lp["Wq"][nt] = _kaiming_normal(next(ks), din, (din, HID))
            lp["bq"][nt] = jnp.zeros((HID,), jnp.float32)
            lp["Wv"][nt] = _kaiming_normal(next(ks), din, (din, HID))
            lp["bv"][nt] = jnp.zeros((HID,), jnp.float32)
            lp["Wa"][nt] = _kaiming_normal(next(ks), HID, (HID, HID))
            lp["ba"][nt] = jnp.zeros((HID,), jnp.float32)
            lp["skip"][nt] = jnp.float32(1.0)
        for et in EDGE_TYPES:
            lp["a_rel"][et] = _kaiming_normal(next(ks), HEAD_DIM, (HEADS, HEAD_DIM, HEAD_DIM))
            lp["m_rel"][et] = _kaiming_normal(next(ks), HEAD_DIM, (HEADS, HEAD_DIM, HEAD_DIM))
            lp["p_rel"][et] = jnp.ones((HEADS,), jnp.float32)
        conv.append(lp)

    norm = {nt: [{"gamma": jnp.ones((HID,), jnp.float32),
                  "beta": jnp.zeros((HID,), jnp.float32)}
                 for _ in range(NUM_CONV_LAYERS - 1)]
            for nt in NODE_TYPES}

    pool = {"w": {nt: _kaiming_normal(next(ks), HID, (HID, 1)) for nt in NODE_TYPES},
            "b": {nt: jnp.zeros((1,), jnp.float32) for nt in NODE_TYPES}}

    aggr_dim = HID * POOL_SIZE
    hid_fc = [max(aggr_dim // 2, OUT_CHANNELS)]
    for _ in range(NUM_FC_LAYERS - 1):
        hid_fc.append(max(hid_fc[-1] // 2, OUT_CHANNELS))
    dims = [aggr_dim] + hid_fc + [OUT_CHANNELS]
    mlp = [{"W": _kaiming_normal(next(ks), dims[i], (dims[i], dims[i + 1])),
            "b": jnp.zeros((dims[i + 1],), jnp.float32)}
           for i in range(len(dims) - 1)]

    return {"conv": conv, "norm": norm, "pool": pool, "mlp": mlp}


# ----------------------------- offline parameter prep --------------------------
def _block_diag_heads(a):
    # (H, D, D) -> (H*D, H*D) block diagonal. Only used at prep time (never in forward).
    h, d, _ = a.shape
    out = jnp.zeros((h * d, h * d), a.dtype)
    for i in range(h):
        out = out.at[i * d:(i + 1) * d, i * d:(i + 1) * d].set(a[i])
    return out


def prepare_params(params):
    """Compose relation transforms + p_rel prior into the K/V projection weights,
    stack all per-node-type parameters along a leading axis (destination order),
    and pre-broadcast scalars so the fused kernels do zero layout work."""
    prepped = {"conv": []}
    ones_h = jnp.ones((NUM_TYPES, 1, HID), jnp.float32)
    zeros_h = jnp.zeros((NUM_TYPES, 1, HID), jnp.float32)
    for l in range(NUM_CONV_LAYERS):
        lp = params["conv"][l]
        wq = jnp.stack([lp["Wq"][nt] for nt in NODE_TYPES])
        bq = jnp.stack([lp["bq"][nt].reshape(1, HID) for nt in NODE_TYPES])
        wa = jnp.stack([lp["Wa"][nt] for nt in NODE_TYPES])
        ba = jnp.stack([lp["ba"][nt].reshape(1, HID) for nt in NODE_TYPES])
        gate = jnp.stack([jnp.broadcast_to(jax.nn.sigmoid(lp["skip"][nt]), (1, HID))
                          for nt in NODE_TYPES])
        wkv_list, bkv_list = [], []
        for dst in NODE_TYPES:                       # destination order
            et = next(e for e in EDGE_TYPES if e[2] == dst)
            src = et[0]
            # fold p_rel (per-head scalar on the attention score) into the K map
            a_k = _block_diag_heads(lp["a_rel"][et] * lp["p_rel"][et][:, None, None])
            a_m = _block_diag_heads(lp["m_rel"][et])
            wk_c = lp["Wk"][src] @ a_k
            wv_c = lp["Wv"][src] @ a_m
            bk_c = lp["bk"][src] @ a_k
            bv_c = lp["bv"][src] @ a_m
            wkv_list.append(jnp.concatenate([wk_c, wv_c], axis=1))
            bkv_list.append(jnp.concatenate([bk_c, bv_c]).reshape(1, 2 * HID))
        layer = {"Wq": wq, "bq": bq, "Wkv": jnp.stack(wkv_list), "bkv": jnp.stack(bkv_list),
                 "Wa": wa, "ba": ba, "gate": gate}
        if l < NUM_CONV_LAYERS - 1:
            layer["gamma"] = jnp.stack([params["norm"][nt][l]["gamma"].reshape(1, HID)
                                        for nt in NODE_TYPES])
            layer["beta"] = jnp.stack([params["norm"][nt][l]["beta"].reshape(1, HID)
                                       for nt in NODE_TYPES])
        else:
            layer["gamma"], layer["beta"] = ones_h, zeros_h   # unused (do_ln=False)
        prepped["conv"].append(layer)

    prepped["pool"] = {"W": jnp.stack([params["pool"]["w"][nt] for nt in NODE_TYPES]),
                       "b": jnp.stack([params["pool"]["b"][nt].reshape(1, 1)
                                       for nt in NODE_TYPES])}
    prepped["mlp"] = [{"W": m["W"], "b": m["b"].reshape(1, -1)} for m in params["mlp"]]
    return prepped


# ----------------------------- main ---------------------------------------------
if __name__ == "__main__":
    key = jax.random.PRNGKey(0)
    kp, kxa, kxb, kea, keb = jax.random.split(key, 5)
    params = init_params(kp)
    prepped = prepare_params(params)         # offline: relation weights composed once

    n_nodes = {"a": 12, "b": 10}
    x_dict = {"a": jax.random.normal(kxa, (n_nodes["a"], IN_CHANNELS), jnp.float32),
              "b": jax.random.normal(kxb, (n_nodes["b"], IN_CHANNELS), jnp.float32)}

    def make_edges(k, n_src, n_dst, n_edges):
        k1, k2 = jax.random.split(k)
        src = jax.random.randint(k1, (n_edges,), 0, n_src)
        dst = jax.random.randint(k2, (n_edges,), 0, n_dst)
        return jnp.stack([src, dst])

    edge_index = {("a", "ab", "b"): make_edges(kea, n_nodes["a"], n_nodes["b"], 24),
                  ("b", "ba", "a"): make_edges(keb, n_nodes["b"], n_nodes["a"], 24)}

    # pad node features to NPAD rows and stack per node type: (NUM_TYPES, NPAD, IN)
    x_stack = jnp.stack([
        jnp.zeros((NPAD, IN_CHANNELS), jnp.float32).at[:n_nodes[nt]].set(x_dict[nt])
        for nt in NODE_TYPES])

    # dense adjacency masks [dst, src], stacked in destination-type order
    masks = []
    for dst in NODE_TYPES:
        et = next(e for e in EDGE_TYPES if e[2] == dst)
        ei = edge_index[et]
        masks.append(jnp.zeros((NPAD, NPAD), jnp.float32).at[ei[1], ei[0]].max(1.0))
    mask_stack = jnp.stack(masks)

    # validity mask over the padded, concatenated node set (excludes pad rows at pooling)
    valid_mask = jnp.concatenate([jnp.arange(NPAD) < n_nodes[nt] for nt in NODE_TYPES])

    out = jax.jit(hgt_forward)(prepped, x_stack, mask_stack, valid_mask)
    out = jax.block_until_ready(out)
    assert out.shape == (1, OUT_CHANNELS), out.shape
    assert bool(jnp.all(jnp.isfinite(out)))
    print("KERNEL_OK")
</pallas_src>

<mosaic_0001>
module attributes {stable_mosaic.version = 11 : i64} {
  func.func @_conv_kernel(%arg0: i32, %arg1: memref<1x16x32xf32, #tpu.memory_space<vmem>>, %arg2: memref<1x16x32xf32, #tpu.memory_space<vmem>>, %arg3: memref<1x32x32xf32, #tpu.memory_space<vmem>>, %arg4: memref<1x1x32xf32, #tpu.memory_space<vmem>>, %arg5: memref<1x32x64xf32, #tpu.memory_space<vmem>>, %arg6: memref<1x1x64xf32, #tpu.memory_space<vmem>>, %arg7: memref<1x16x16xf32, #tpu.memory_space<vmem>>, %arg8: memref<1x32x32xf32, #tpu.memory_space<vmem>>, %arg9: memref<1x1x32xf32, #tpu.memory_space<vmem>>, %arg10: memref<1x1x32xf32, #tpu.memory_space<vmem>>, %arg11: memref<1x1x32xf32, #tpu.memory_space<vmem>>, %arg12: memref<1x1x32xf32, #tpu.memory_space<vmem>>, %arg13: memref<1x32x1xf32, #tpu.memory_space<vmem>>, %arg14: memref<1x1x1xf32, #tpu.memory_space<vmem>>, %arg15: memref<1x16x32xf32, #tpu.memory_space<vmem>>, %arg16: memref<1x16x1xf32, #tpu.memory_space<vmem>>) attributes {dimension_semantics = [#tpu.dimension_semantics<parallel>], iteration_bounds = array<i64: 2>, scalar_prefetch = 0 : i64, scratch_operands = 0 : i64, tpu.core_type = #tpu.core_type<tc>, window_params = [{transform_indices = @transform_0, window_bounds = array<i64: 1, 16, 32>}, {transform_indices = @transform_1, window_bounds = array<i64: 1, 16, 32>}, {transform_indices = @transform_2, window_bounds = array<i64: 1, 32, 32>}, {transform_indices = @transform_3, window_bounds = array<i64: 1, 1, 32>}, {transform_indices = @transform_4, window_bounds = array<i64: 1, 32, 64>}, {transform_indices = @transform_5, window_bounds = array<i64: 1, 1, 64>}, {transform_indices = @transform_6, window_bounds = array<i64: 1, 16, 16>}, {transform_indices = @transform_7, window_bounds = array<i64: 1, 32, 32>}, {transform_indices = @transform_8, window_bounds = array<i64: 1, 1, 32>}, {transform_indices = @transform_9, window_bounds = array<i64: 1, 1, 32>}, {transform_indices = @transform_10, window_bounds = array<i64: 1, 1, 32>}, {transform_indices = @transform_11, window_bounds = array<i64: 1, 1, 32>}, {transform_indices = @transform_12, window_bounds = array<i64: 1, 32, 1>}, {transform_indices = @transform_13, window_bounds = array<i64: 1, 1, 1>}, {transform_indices = @transform_14, window_bounds = array<i64: 1, 16, 32>}, {transform_indices = @transform_15, window_bounds = array<i64: 1, 16, 1>}]} {
    %c0 = arith.constant 0 : index
    %c0_0 = arith.constant 0 : index
    %c0_1 = arith.constant 0 : index
    %0 = vector.load %arg1[%c0, %c0_0, %c0_1] : memref<1x16x32xf32, #tpu.memory_space<vmem>>, vector<1x16x32xf32>
    %1 = vector.shape_cast %0 : vector<1x16x32xf32> to vector<16x32xf32>
    %c0_2 = arith.constant 0 : index
    %c0_3 = arith.constant 0 : index
    %c0_4 = arith.constant 0 : index
    %2 = vector.load %arg2[%c0_2, %c0_3, %c0_4] : memref<1x16x32xf32, #tpu.memory_space<vmem>>, vector<1x16x32xf32>
    %3 = vector.shape_cast %2 : vector<1x16x32xf32> to vector<16x32xf32>
    %c0_5 = arith.constant 0 : index
    %c0_6 = arith.constant 0 : index
    %c0_7 = arith.constant 0 : index
    %4 = vector.load %arg3[%c0_5, %c0_6, %c0_7] : memref<1x32x32xf32, #tpu.memory_space<vmem>>, vector<1x32x32xf32>
    %5 = vector.shape_cast %4 : vector<1x32x32xf32> to vector<32x32xf32>
    %cst = arith.constant dense<0.000000e+00> : vector<16x32xf32>
    %6 = tpu.matmul %1, %5, %cst {dimension_numbers = #tpu.dot_dimension_numbers<[1], [0], [0], [1], [0, 0, 1, 1], [], []>} : vector<16x32xf32>, vector<32x32xf32>, vector<16x32xf32> -> vector<16x32xf32>
    %c0_8 = arith.constant 0 : index
    %c0_9 = arith.constant 0 : index
    %c0_10 = arith.constant 0 : index
    %7 = vector.load %arg4[%c0_8, %c0_9, %c0_10] : memref<1x1x32xf32, #tpu.memory_space<vmem>>, vector<1x1x32xf32>
    %8 = vector.shape_cast %7 : vector<1x1x32xf32> to vector<1x32xf32>
    %9 = vector.broadcast %8 : vector<1x32xf32> to vector<16x32xf32>
    %10 = arith.addf %6, %9 : vector<16x32xf32>
    %c0_11 = arith.constant 0 : index
    %c0_12 = arith.constant 0 : index
    %c0_13 = arith.constant 0 : index
    %11 = vector.load %arg5[%c0_11, %c0_12, %c0_13] : memref<1x32x64xf32, #tpu.memory_space<vmem>>, vector<1x32x64xf32>
    %12 = vector.shape_cast %11 : vector<1x32x64xf32> to vector<32x64xf32>
    %cst_14 = arith.constant dense<0.000000e+00> : vector<16x64xf32>
    %13 = tpu.matmul %3, %12, %cst_14 {dimension_numbers = #tpu.dot_dimension_numbers<[1], [0], [0], [1], [0, 0, 1, 1], [], []>} : vector<16x32xf32>, vector<32x64xf32>, vector<16x64xf32> -> vector<16x64xf32>
    %c0_15 = arith.constant 0 : index
    %c0_16 = arith.constant 0 : index
    %c0_17 = arith.constant 0 : index
    %14 = vector.load %arg6[%c0_15, %c0_16, %c0_17] : memref<1x1x64xf32, #tpu.memory_space<vmem>>, vector<1x1x64xf32>
    %15 = vector.shape_cast %14 : vector<1x1x64xf32> to vector<1x64xf32>
    %16 = vector.broadcast %15 : vector<1x64xf32> to vector<16x64xf32>
    %17 = arith.addf %13, %16 : vector<16x64xf32>
    %c0_18 = arith.constant 0 : index
    %c0_19 = arith.constant 0 : index
    %c0_20 = arith.constant 0 : index
    %18 = vector.load %arg7[%c0_18, %c0_19, %c0_20] : memref<1x16x16xf32, #tpu.memory_space<vmem>>, vector<1x16x16xf32>
    %19 = vector.shape_cast %18 : vector<1x16x16xf32> to vector<16x16xf32>
    %20 = vector.extract_strided_slice %10 {offsets = [0, 0], sizes = [16, 16], strides = [1, 1]} : vector<16x32xf32> to vector<16x16xf32>
    %21 = vector.extract_strided_slice %17 {offsets = [0, 0], sizes = [16, 16], strides = [1, 1]} : vector<16x64xf32> to vector<16x16xf32>
    %22 = vector.extract_strided_slice %17 {offsets = [0, 32], sizes = [16, 16], strides = [1, 1]} : vector<16x64xf32> to vector<16x16xf32>
    %cst_21 = arith.constant dense<0.000000e+00> : vector<16x16xf32>
    %23 = tpu.matmul %20, %21, %cst_21 {dimension_numbers = #tpu.dot_dimension_numbers<[1], [1], [0], [0], [0, 0, 1, 0], [], []>} : vector<16x16xf32>, vector<16x16xf32>, vector<16x16xf32> -> vector<16x16xf32>
    %cst_22 = arith.constant 2.500000e-01 : f32
    %24 = vector.broadcast %cst_22 : f32 to vector<16x16xf32>
    %25 = arith.mulf %23, %24 : vector<16x16xf32>
    %cst_23 = arith.constant 0.000000e+00 : f32
    %26 = vector.broadcast %cst_23 : f32 to vector<16x16xf32>
    %27 = arith.cmpf ogt, %19, %26 : vector<16x16xf32>
    %cst_24 = arith.constant -1.000000e+30 : f32
    %28 = vector.broadcast %cst_24 : f32 to vector<16x16xf32>
    %29 = arith.select %27, %25, %28 : vector<16x16xi1>, vector<16x16xf32>
    %cst_25 = arith.constant dense<0xFF800000> : vector<16xf32>
    %30 = vector.multi_reduction <maximumf>, %29, %cst_25 [1] : vector<16x16xf32> to vector<16xf32>
    %31 = vector.shape_cast %30 : vector<16xf32> to vector<16x1xf32>
    %32 = vector.broadcast %31 : vector<16x1xf32> to vector<16x16xf32>
    %33 = arith.subf %29, %32 : vector<16x16xf32>
    %34 = math.exp %33 : vector<16x16xf32>
    %35 = arith.mulf %34, %19 : vector<16x16xf32>
    %cst_26 = arith.constant dense<0.000000e+00> : vector<16xf32>
    %36 = vector.multi_reduction <add>, %35, %cst_26 [1] : vector<16x16xf32> to vector<16xf32>
    %37 = vector.shape_cast %36 : vector<16xf32> to vector<16x1xf32>
    %cst_27 = arith.constant 1.000000e-16 : f32
    %38 = vector.broadcast %cst_27 : f32 to vector<16x1xf32>
    %39 = arith.addf %37, %38 : vector<16x1xf32>
    %40 = vector.broadcast %39 : vector<16x1xf32> to vector<16x16xf32>
    %41 = arith.divf %35, %40 : vector<16x16xf32>
    %cst_28 = arith.constant dense<0.000000e+00> : vector<16x16xf32>
    %42 = tpu.matmul %41, %22, %cst_28 {dimension_numbers = #tpu.dot_dimension_numbers<[1], [0], [0], [1], [0, 0, 1, 1], [], []>} : vector<16x16xf32>, vector<16x16xf32>, vector<16x16xf32> -> vector<16x16xf32>
    %43 = vector.extract_strided_slice %10 {offsets = [0, 16], sizes = [16, 16], strides = [1, 1]} : vector<16x32xf32> to vector<16x16xf32>
    %44 = vector.extract_strided_slice %17 {offsets = [0, 16], sizes = [16, 16], strides = [1, 1]} : vector<16x64xf32> to vector<16x16xf32>
    %45 = vector.extract_strided_slice %17 {offsets = [0, 48], sizes = [16, 16], strides = [1, 1]} : vector<16x64xf32> to vector<16x16xf32>
    %cst_29 = arith.constant dense<0.000000e+00> : vector<16x16xf32>
    %46 = tpu.matmul %43, %44, %cst_29 {dimension_numbers = #tpu.dot_dimension_numbers<[1], [1], [0], [0], [0, 0, 1, 0], [], []>} : vector<16x16xf32>, vector<16x16xf32>, vector<16x16xf32> -> vector<16x16xf32>
    %cst_30 = arith.constant 2.500000e-01 : f32
    %47 = vector.broadcast %cst_30 : f32 to vector<16x16xf32>
    %48 = arith.mulf %46, %47 : vector<16x16xf32>
    %cst_31 = arith.constant 0.000000e+00 : f32
    %49 = vector.broadcast %cst_31 : f32 to vector<16x16xf32>
    %50 = arith.cmpf ogt, %19, %49 : vector<16x16xf32>
    %cst_32 = arith.constant -1.000000e+30 : f32
    %51 = vector.broadcast %cst_32 : f32 to vector<16x16xf32>
    %52 = arith.select %50, %48, %51 : vector<16x16xi1>, vector<16x16xf32>
    %cst_33 = arith.constant dense<0xFF800000> : vector<16xf32>
    %53 = vector.multi_reduction <maximumf>, %52, %cst_33 [1] : vector<16x16xf32> to vector<16xf32>
    %54 = vector.shape_cast %53 : vector<16xf32> to vector<16x1xf32>
    %55 = vector.broadcast %54 : vector<16x1xf32> to vector<16x16xf32>
    %56 = arith.subf %52, %55 : vector<16x16xf32>
    %57 = math.exp %56 : vector<16x16xf32>
    %58 = arith.mulf %57, %19 : vector<16x16xf32>
    %cst_34 = arith.constant dense<0.000000e+00> : vector<16xf32>
    %59 = vector.multi_reduction <add>, %58, %cst_34 [1] : vector<16x16xf32> to vector<16xf32>
    %60 = vector.shape_cast %59 : vector<16xf32> to vector<16x1xf32>
    %cst_35 = arith.constant 1.000000e-16 : f32
    %61 = vector.broadcast %cst_35 : f32 to vector<16x1xf32>
    %62 = arith.addf %60, %61 : vector<16x1xf32>
    %63 = vector.broadcast %62 : vector<16x1xf32> to vector<16x16xf32>
    %64 = arith.divf %58, %63 : vector<16x16xf32>
    %cst_36 = arith.constant dense<0.000000e+00> : vector<16x16xf32>
    %65 = tpu.matmul %64, %45, %cst_36 {dimension_numbers = #tpu.dot_dimension_numbers<[1], [0], [0], [1], [0, 0, 1, 1], [], []>} : vector<16x16xf32>, vector<16x16xf32>, vector<16x16xf32> -> vector<16x16xf32>
    %66 = tpu.concatenate %42, %65 in 1 : vector<16x16xf32>, vector<16x16xf32> -> vector<16x32xf32>
    %cst_37 = arith.constant 5.000000e-01 : f32
    %67 = vector.broadcast %cst_37 : f32 to vector<16x32xf32>
    %68 = arith.mulf %67, %66 : vector<16x32xf32>
    %cst_38 = arith.constant 4.471500e-02 : f32
    %69 = vector.broadcast %cst_38 : f32 to vector<16x32xf32>
    %70 = arith.mulf %69, %66 : vector<16x32xf32>
    %71 = arith.mulf %70, %66 : vector<16x32xf32>
    %72 = arith.mulf %71, %66 : vector<16x32xf32>
    %73 = arith.addf %66, %72 : vector<16x32xf32>
    %cst_39 = arith.constant 0.797884583 : f32
    %74 = vector.broadcast %cst_39 : f32 to vector<16x32xf32>
    %75 = arith.mulf %74, %73 : vector<16x32xf32>
    %76 = math.tanh %75 : vector<16x32xf32>
    %cst_40 = arith.constant 1.000000e+00 : f32
    %77 = vector.broadcast %cst_40 : f32 to vector<16x32xf32>
    %78 = arith.addf %77, %76 : vector<16x32xf32>
    %79 = arith.mulf %68, %78 : vector<16x32xf32>
    %c0_41 = arith.constant 0 : index
    %c0_42 = arith.constant 0 : index
    %c0_43 = arith.constant 0 : index
    %80 = vector.load %arg8[%c0_41, %c0_42, %c0_43] : memref<1x32x32xf32, #tpu.memory_space<vmem>>, vector<1x32x32xf32>
    %81 = vector.shape_cast %80 : vector<1x32x32xf32> to vector<32x32xf32>
    %cst_44 = arith.constant dense<0.000000e+00> : vector<16x32xf32>
    %82 = tpu.matmul %79, %81, %cst_44 {dimension_numbers = #tpu.dot_dimension_numbers<[1], [0], [0], [1], [0, 0, 1, 1], [], []>} : vector<16x32xf32>, vector<32x32xf32>, vector<16x32xf32> -> vector<16x32xf32>
    %c0_45 = arith.constant 0 : index
    %c0_46 = arith.constant 0 : index
    %c0_47 = arith.constant 0 : index
    %83 = vector.load %arg9[%c0_45, %c0_46, %c0_47] : memref<1x1x32xf32, #tpu.memory_space<vmem>>, vector<1x1x32xf32>
    %84 = vector.shape_cast %83 : vector<1x1x32xf32> to vector<1x32xf32>
    %85 = vector.broadcast %84 : vector<1x32xf32> to vector<16x32xf32>
    %86 = arith.addf %82, %85 : vector<16x32xf32>
    %c0_48 = arith.constant 0 : index
    %c0_49 = arith.constant 0 : index
    %c0_50 = arith.constant 0 : index
    %87 = vector.load %arg10[%c0_48, %c0_49, %c0_50] : memref<1x1x32xf32, #tpu.memory_space<vmem>>, vector<1x1x32xf32>
    %88 = vector.shape_cast %87 : vector<1x1x32xf32> to vector<1x32xf32>
    %89 = vector.broadcast %88 : vector<1x32xf32> to vector<16x32xf32>
    %90 = arith.mulf %89, %86 : vector<16x32xf32>
    %cst_51 = arith.constant 1.000000e+00 : f32
    %91 = vector.broadcast %cst_51 : f32 to vector<1x32xf32>
    %92 = arith.subf %91, %88 : vector<1x32xf32>
    %93 = vector.broadcast %92 : vector<1x32xf32> to vector<16x32xf32>
    %94 = arith.mulf %93, %1 : vector<16x32xf32>
    %95 = arith.addf %90, %94 : vector<16x32xf32>
    %cst_52 = arith.constant 5.000000e-01 : f32
    %96 = vector.broadcast %cst_52 : f32 to vector<16x32xf32>
    %97 = arith.mulf %96, %95 : vector<16x32xf32>
    %cst_53 = arith.constant 4.471500e-02 : f32
    %98 = vector.broadcast %cst_53 : f32 to vector<16x32xf32>
    %99 = arith.mulf %98, %95 : vector<16x32xf32>
    %100 = arith.mulf %99, %95 : vector<16x32xf32>
    %101 = arith.mulf %100, %95 : vector<16x32xf32>
    %102 = arith.addf %95, %101 : vector<16x32xf32>
    %cst_54 = arith.constant 0.797884583 : f32
    %103 = vector.broadcast %cst_54 : f32 to vector<16x32xf32>
    %104 = arith.mulf %103, %102 : vector<16x32xf32>
    %105 = math.tanh %104 : vector<16x32xf32>
    %cst_55 = arith.constant 1.000000e+00 : f32
    %106 = vector.broadcast %cst_55 : f32 to vector<16x32xf32>
    %107 = arith.addf %106, %105 : vector<16x32xf32>
    %108 = arith.mulf %97, %107 : vector<16x32xf32>
    %c0_56 = arith.constant 0 : index
    %c0_57 = arith.constant 0 : index
    %c0_58 = arith.constant 0 : index
    %109 = vector.load %arg15[%c0_56, %c0_57, %c0_58] : memref<1x16x32xf32, #tpu.memory_space<vmem>>, vector<1x16x32xf32>
    %110 = vector.shape_cast %109 : vector<1x16x32xf32> to vector<16x32xf32>
    %111 = vector.shape_cast %108 : vector<16x32xf32> to vector<1x16x32xf32>
    tpu.vector_store %arg15[%c0_56, %c0_57, %c0_58], %111 {strides = array<i32>} : memref<1x16x32xf32, #tpu.memory_space<vmem>>, vector<1x16x32xf32>,
    %c0_59 = arith.constant 0 : index
    %c0_60 = arith.constant 0 : index
    %c0_61 = arith.constant 0 : index
    %112 = vector.load %arg13[%c0_59, %c0_60, %c0_61] : memref<1x32x1xf32, #tpu.memory_space<vmem>>, vector<1x32x1xf32>
    %113 = vector.shape_cast %112 : vector<1x32x1xf32> to vector<32x1xf32>
    %cst_62 = arith.constant dense<0.000000e+00> : vector<16x1xf32>
    %114 = tpu.matmul %108, %113, %cst_62 {dimension_numbers = #tpu.dot_dimension_numbers<[1], [0], [0], [1], [0, 0, 1, 1], [], []>} : vector<16x32xf32>, vector<32x1xf32>, vector<16x1xf32> -> vector<16x1xf32>
    %c0_63 = arith.constant 0 : index
    %c0_64 = arith.constant 0 : index
    %c0_65 = arith.constant 0 : index
    %115 = vector.load %arg14[%c0_63, %c0_64, %c0_65] : memref<1x1x1xf32, #tpu.memory_space<vmem>>, vector<1x1x1xf32>
    %116 = vector.shape_cast %115 : vector<1x1x1xf32> to vector<1x1xf32>
    %117 = vector.broadcast %116 : vector<1x1xf32> to vector<16x1xf32>
    %118 = arith.addf %114, %117 : vector<16x1xf32>
    %c0_66 = arith.constant 0 : index
    %c0_67 = arith.constant 0 : index
    %c0_68 = arith.constant 0 : index
    %119 = vector.load %arg16[%c0_66, %c0_67, %c0_68] : memref<1x16x1xf32, #tpu.memory_space<vmem>>, vector<1x16x1xf32>
    %120 = vector.shape_cast %119 : vector<1x16x1xf32> to vector<16x1xf32>
    %121 = vector.shape_cast %118 : vector<16x1xf32> to vector<1x16x1xf32>
    tpu.vector_store %arg16[%c0_66, %c0_67, %c0_68], %121 {strides = array<i32>} : memref<1x16x1xf32, #tpu.memory_space<vmem>>, vector<1x16x1xf32>,
    return
  }
  func.func @transform_0(%arg0: i32) -> (i32, i32, i32) {
    %c0_i32 = arith.constant 0 : i32
    %c0_i32_0 = arith.constant 0 : i32
    %c0_i32_1 = arith.constant 0 : i32
    return %arg0, %c0_i32, %c0_i32_0 : i32, i32, i32
  }
  func.func @transform_1(%arg0: i32) -> (i32, i32, i32) {
    %c1_i32 = arith.constant 1 : i32
    %0 = arith.subi %c1_i32, %arg0 : i32
    %c0_i32 = arith.constant 0 : i32
    %c0_i32_0 = arith.constant 0 : i32
    %c0_i32_1 = arith.constant 0 : i32
    return %0, %c0_i32, %c0_i32_0 : i32, i32, i32
  }
  func.func @transform_2(%arg0: i32) -> (i32, i32, i32) {
    %c0_i32 = arith.constant 0 : i32
    %c0_i32_0 = arith.constant 0 : i32
    %c0_i32_1 = arith.constant 0 : i32
    return %arg0, %c0_i32, %c0_i32_0 : i32, i32, i32
  }
  func.func @transform_3(%arg0: i32) -> (i32, i32, i32) {
    %c0_i32 = arith.constant 0 : i32
    %c0_i32_0 = arith.constant 0 : i32
    %c0_i32_1 = arith.constant 0 : i32
    return %arg0, %c0_i32, %c0_i32_0 : i32, i32, i32
  }
  func.func @transform_4(%arg0: i32) -> (i32, i32, i32) {
    %c0_i32 = arith.constant 0 : i32
    %c0_i32_0 = arith.constant 0 : i32
    %c0_i32_1 = arith.constant 0 : i32
    return %arg0, %c0_i32, %c0_i32_0 : i32, i32, i32
  }
  func.func @transform_5(%arg0: i32) -> (i32, i32, i32) {
    %c0_i32 = arith.constant 0 : i32
    %c0_i32_0 = arith.constant 0 : i32
    %c0_i32_1 = arith.constant 0 : i32
    return %arg0, %c0_i32, %c0_i32_0 : i32, i32, i32
  }
  func.func @transform_6(%arg0: i32) -> (i32, i32, i32) {
    %c0_i32 = arith.constant 0 : i32
    %c0_i32_0 = arith.constant 0 : i32
    %c0_i32_1 = arith.constant 0 : i32
    return %arg0, %c0_i32, %c0_i32_0 : i32, i32, i32
  }
  func.func @transform_7(%arg0: i32) -> (i32, i32, i32) {
    %c0_i32 = arith.constant 0 : i32
    %c0_i32_0 = arith.constant 0 : i32
    %c0_i32_1 = arith.constant 0 : i32
    return %arg0, %c0_i32, %c0_i32_0 : i32, i32, i32
  }
  func.func @transform_8(%arg0: i32) -> (i32, i32, i32) {
    %c0_i32 = arith.constant 0 : i32
    %c0_i32_0 = arith.constant 0 : i32
    %c0_i32_1 = arith.constant 0 : i32
    return %arg0, %c0_i32, %c0_i32_0 : i32, i32, i32
  }
  func.func @transform_9(%arg0: i32) -> (i32, i32, i32) {
    %c0_i32 = arith.constant 0 : i32
    %c0_i32_0 = arith.constant 0 : i32
    %c0_i32_1 = arith.constant 0 : i32
    return %arg0, %c0_i32, %c0_i32_0 : i32, i32, i32
  }
  func.func @transform_10(%arg0: i32) -> (i32, i32, i32) {
    %c0_i32 = arith.constant 0 : i32
    %c0_i32_0 = arith.constant 0 : i32
    %c0_i32_1 = arith.constant 0 : i32
    return %arg0, %c0_i32, %c0_i32_0 : i32, i32, i32
  }
  func.func @transform_11(%arg0: i32) -> (i32, i32, i32) {
    %c0_i32 = arith.constant 0 : i32
    %c0_i32_0 = arith.constant 0 : i32
    %c0_i32_1 = arith.constant 0 : i32
    return %arg0, %c0_i32, %c0_i32_0 : i32, i32, i32
  }
  func.func @transform_12(%arg0: i32) -> (i32, i32, i32) {
    %c0_i32 = arith.constant 0 : i32
    %c0_i32_0 = arith.constant 0 : i32
    %c0_i32_1 = arith.constant 0 : i32
    return %arg0, %c0_i32, %c0_i32_0 : i32, i32, i32
  }
  func.func @transform_13(%arg0: i32) -> (i32, i32, i32) {
    %c0_i32 = arith.constant 0 : i32
    %c0_i32_0 = arith.constant 0 : i32
    %c0_i32_1 = arith.constant 0 : i32
    return %arg0, %c0_i32, %c0_i32_0 : i32, i32, i32
  }
  func.func @transform_14(%arg0: i32) -> (i32, i32, i32) {
    %c0_i32 = arith.constant 0 : i32
    %c0_i32_0 = arith.constant 0 : i32
    %c0_i32_1 = arith.constant 0 : i32
    return %arg0, %c0_i32, %c0_i32_0 : i32, i32, i32
  }
  func.func @transform_15(%arg0: i32) -> (i32, i32, i32) {
    %c0_i32 = arith.constant 0 : i32
    %c0_i32_0 = arith.constant 0 : i32
    %c0_i32_1 = arith.constant 0 : i32
    return %arg0, %c0_i32, %c0_i32_0 : i32, i32, i32
  }
}

module attributes {stable_mosaic.version = 11 : i64} {
  func.func @_conv_kernel(%arg0: i32, %arg1: memref<1x16x8xf32, #tpu.memory_space<vmem>>, %arg2: memref<1x16x8xf32, #tpu.memory_space<vmem>>, %arg3: memref<1x8x32xf32, #tpu.memory_space<vmem>>, %arg4: memref<1x1x32xf32, #tpu.memory_space<vmem>>, %arg5: memref<1x8x64xf32, #tpu.memory_space<vmem>>, %arg6: memref<1x1x64xf32, #tpu.memory_space<vmem>>, %arg7: memref<1x16x16xf32, #tpu.memory_space<vmem>>, %arg8: memref<1x32x32xf32, #tpu.memory_space<vmem>>, %arg9: memref<1x1x32xf32, #tpu.memory_space<vmem>>, %arg10: memref<1x1x32xf32, #tpu.memory_space<vmem>>, %arg11: memref<1x1x32xf32, #tpu.memory_space<vmem>>, %arg12: memref<1x1x32xf32, #tpu.memory_space<vmem>>, %arg13: memref<1x32x1xf32, #tpu.memory_space<vmem>>, %arg14: memref<1x1x1xf32, #tpu.memory_space<vmem>>, %arg15: memref<1x16x32xf32, #tpu.memory_space<vmem>>, %arg16: memref<1x16x1xf32, #tpu.memory_space<vmem>>) attributes {dimension_semantics = [#tpu.dimension_semantics<parallel>], iteration_bounds = array<i64: 2>, scalar_prefetch = 0 : i64, scratch_operands = 0 : i64, tpu.core_type = #tpu.core_type<tc>, window_params = [{transform_indices = @transform_0, window_bounds = array<i64: 1, 16, 8>}, {transform_indices = @transform_1, window_bounds = array<i64: 1, 16, 8>}, {transform_indices = @transform_2, window_bounds = array<i64: 1, 8, 32>}, {transform_indices = @transform_3, window_bounds = array<i64: 1, 1, 32>}, {transform_indices = @transform_4, window_bounds = array<i64: 1, 8, 64>}, {transform_indices = @transform_5, window_bounds = array<i64: 1, 1, 64>}, {transform_indices = @transform_6, window_bounds = array<i64: 1, 16, 16>}, {transform_indices = @transform_7, window_bounds = array<i64: 1, 32, 32>}, {transform_indices = @transform_8, window_bounds = array<i64: 1, 1, 32>}, {transform_indices = @transform_9, window_bounds = array<i64: 1, 1, 32>}, {transform_indices = @transform_10, window_bounds = array<i64: 1, 1, 32>}, {transform_indices = @transform_11, window_bounds = array<i64: 1, 1, 32>}, {transform_indices = @transform_12, window_bounds = array<i64: 1, 32, 1>}, {transform_indices = @transform_13, window_bounds = array<i64: 1, 1, 1>}, {transform_indices = @transform_14, window_bounds = array<i64: 1, 16, 32>}, {transform_indices = @transform_15, window_bounds = array<i64: 1, 16, 1>}]} {
    %c0 = arith.constant 0 : index
    %c0_0 = arith.constant 0 : index
    %c0_1 = arith.constant 0 : index
    %0 = vector.load %arg1[%c0, %c0_0, %c0_1] : memref<1x16x8xf32, #tpu.memory_space<vmem>>, vector<1x16x8xf32>
    %1 = vector.shape_cast %0 : vector<1x16x8xf32> to vector<16x8xf32>
    %c0_2 = arith.constant 0 : index
    %c0_3 = arith.constant 0 : index
    %c0_4 = arith.constant 0 : index
    %2 = vector.load %arg2[%c0_2, %c0_3, %c0_4] : memref<1x16x8xf32, #tpu.memory_space<vmem>>, vector<1x16x8xf32>
    %3 = vector.shape_cast %2 : vector<1x16x8xf32> to vector<16x8xf32>
    %c0_5 = arith.constant 0 : index
    %c0_6 = arith.constant 0 : index
    %c0_7 = arith.constant 0 : index
    %4 = vector.load %arg3[%c0_5, %c0_6, %c0_7] : memref<1x8x32xf32, #tpu.memory_space<vmem>>, vector<1x8x32xf32>
    %5 = vector.shape_cast %4 : vector<1x8x32xf32> to vector<8x32xf32>
    %cst = arith.constant dense<0.000000e+00> : vector<16x32xf32>
    %6 = tpu.matmul %1, %5, %cst {dimension_numbers = #tpu.dot_dimension_numbers<[1], [0], [0], [1], [0, 0, 1, 1], [], []>} : vector<16x8xf32>, vector<8x32xf32>, vector<16x32xf32> -> vector<16x32xf32>
    %c0_8 = arith.constant 0 : index
    %c0_9 = arith.constant 0 : index
    %c0_10 = arith.constant 0 : index
    %7 = vector.load %arg4[%c0_8, %c0_9, %c0_10] : memref<1x1x32xf32, #tpu.memory_space<vmem>>, vector<1x1x32xf32>
    %8 = vector.shape_cast %7 : vector<1x1x32xf32> to vector<1x32xf32>
    %9 = vector.broadcast %8 : vector<1x32xf32> to vector<16x32xf32>
    %10 = arith.addf %6, %9 : vector<16x32xf32>
    %c0_11 = arith.constant 0 : index
    %c0_12 = arith.constant 0 : index
    %c0_13 = arith.constant 0 : index
    %11 = vector.load %arg5[%c0_11, %c0_12, %c0_13] : memref<1x8x64xf32, #tpu.memory_space<vmem>>, vector<1x8x64xf32>
    %12 = vector.shape_cast %11 : vector<1x8x64xf32> to vector<8x64xf32>
    %cst_14 = arith.constant dense<0.000000e+00> : vector<16x64xf32>
    %13 = tpu.matmul %3, %12, %cst_14 {dimension_numbers = #tpu.dot_dimension_numbers<[1], [0], [0], [1], [0, 0, 1, 1], [], []>} : vector<16x8xf32>, vector<8x64xf32>, vector<16x64xf32> -> vector<16x64xf32>
    %c0_15 = arith.constant 0 : index
    %c0_16 = arith.constant 0 : index
    %c0_17 = arith.constant 0 : index
    %14 = vector.load %arg6[%c0_15, %c0_16, %c0_17] : memref<1x1x64xf32, #tpu.memory_space<vmem>>, vector<1x1x64xf32>
    %15 = vector.shape_cast %14 : vector<1x1x64xf32> to vector<1x64xf32>
    %16 = vector.broadcast %15 : vector<1x64xf32> to vector<16x64xf32>
    %17 = arith.addf %13, %16 : vector<16x64xf32>
    %c0_18 = arith.constant 0 : index
    %c0_19 = arith.constant 0 : index
    %c0_20 = arith.constant 0 : index
    %18 = vector.load %arg7[%c0_18, %c0_19, %c0_20] : memref<1x16x16xf32, #tpu.memory_space<vmem>>, vector<1x16x16xf32>
    %19 = vector.shape_cast %18 : vector<1x16x16xf32> to vector<16x16xf32>
    %20 = vector.extract_strided_slice %10 {offsets = [0, 0], sizes = [16, 16], strides = [1, 1]} : vector<16x32xf32> to vector<16x16xf32>
    %21 = vector.extract_strided_slice %17 {offsets = [0, 0], sizes = [16, 16], strides = [1, 1]} : vector<16x64xf32> to vector<16x16xf32>
    %22 = vector.extract_strided_slice %17 {offsets = [0, 32], sizes = [16, 16], strides = [1, 1]} : vector<16x64xf32> to vector<16x16xf32>
    %cst_21 = arith.constant dense<0.000000e+00> : vector<16x16xf32>
    %23 = tpu.matmul %20, %21, %cst_21 {dimension_numbers = #tpu.dot_dimension_numbers<[1], [1], [0], [0], [0, 0, 1, 0], [], []>} : vector<16x16xf32>, vector<16x16xf32>, vector<16x16xf32> -> vector<16x16xf32>
    %cst_22 = arith.constant 2.500000e-01 : f32
    %24 = vector.broadcast %cst_22 : f32 to vector<16x16xf32>
    %25 = arith.mulf %23, %24 : vector<16x16xf32>
    %cst_23 = arith.constant 0.000000e+00 : f32
    %26 = vector.broadcast %cst_23 : f32 to vector<16x16xf32>
    %27 = arith.cmpf ogt, %19, %26 : vector<16x16xf32>
    %cst_24 = arith.constant -1.000000e+30 : f32
    %28 = vector.broadcast %cst_24 : f32 to vector<16x16xf32>
    %29 = arith.select %27, %25, %28 : vector<16x16xi1>, vector<16x16xf32>
    %cst_25 = arith.constant dense<0xFF800000> : vector<16xf32>
    %30 = vector.multi_reduction <maximumf>, %29, %cst_25 [1] : vector<16x16xf32> to vector<16xf32>
    %31 = vector.shape_cast %30 : vector<16xf32> to vector<16x1xf32>
    %32 = vector.broadcast %31 : vector<16x1xf32> to vector<16x16xf32>
    %33 = arith.subf %29, %32 : vector<16x16xf32>
    %34 = math.exp %33 : vector<16x16xf32>
    %35 = arith.mulf %34, %19 : vector<16x16xf32>
    %cst_26 = arith.constant dense<0.000000e+00> : vector<16xf32>
    %36 = vector.multi_reduction <add>, %35, %cst_26 [1] : vector<16x16xf32> to vector<16xf32>
    %37 = vector.shape_cast %36 : vector<16xf32> to vector<16x1xf32>
    %cst_27 = arith.constant 1.000000e-16 : f32
    %38 = vector.broadcast %cst_27 : f32 to vector<16x1xf32>
    %39 = arith.addf %37, %38 : vector<16x1xf32>
    %40 = vector.broadcast %39 : vector<16x1xf32> to vector<16x16xf32>
    %41 = arith.divf %35, %40 : vector<16x16xf32>
    %cst_28 = arith.constant dense<0.000000e+00> : vector<16x16xf32>
    %42 = tpu.matmul %41, %22, %cst_28 {dimension_numbers = #tpu.dot_dimension_numbers<[1], [0], [0], [1], [0, 0, 1, 1], [], []>} : vector<16x16xf32>, vector<16x16xf32>, vector<16x16xf32> -> vector<16x16xf32>
    %43 = vector.extract_strided_slice %10 {offsets = [0, 16], sizes = [16, 16], strides = [1, 1]} : vector<16x32xf32> to vector<16x16xf32>
    %44 = vector.extract_strided_slice %17 {offsets = [0, 16], sizes = [16, 16], strides = [1, 1]} : vector<16x64xf32> to vector<16x16xf32>
    %45 = vector.extract_strided_slice %17 {offsets = [0, 48], sizes = [16, 16], strides = [1, 1]} : vector<16x64xf32> to vector<16x16xf32>
    %cst_29 = arith.constant dense<0.000000e+00> : vector<16x16xf32>
    %46 = tpu.matmul %43, %44, %cst_29 {dimension_numbers = #tpu.dot_dimension_numbers<[1], [1], [0], [0], [0, 0, 1, 0], [], []>} : vector<16x16xf32>, vector<16x16xf32>, vector<16x16xf32> -> vector<16x16xf32>
    %cst_30 = arith.constant 2.500000e-01 : f32
    %47 = vector.broadcast %cst_30 : f32 to vector<16x16xf32>
    %48 = arith.mulf %46, %47 : vector<16x16xf32>
    %cst_31 = arith.constant 0.000000e+00 : f32
    %49 = vector.broadcast %cst_31 : f32 to vector<16x16xf32>
    %50 = arith.cmpf ogt, %19, %49 : vector<16x16xf32>
    %cst_32 = arith.constant -1.000000e+30 : f32
    %51 = vector.broadcast %cst_32 : f32 to vector<16x16xf32>
    %52 = arith.select %50, %48, %51 : vector<16x16xi1>, vector<16x16xf32>
    %cst_33 = arith.constant dense<0xFF800000> : vector<16xf32>
    %53 = vector.multi_reduction <maximumf>, %52, %cst_33 [1] : vector<16x16xf32> to vector<16xf32>
    %54 = vector.shape_cast %53 : vector<16xf32> to vector<16x1xf32>
    %55 = vector.broadcast %54 : vector<16x1xf32> to vector<16x16xf32>
    %56 = arith.subf %52, %55 : vector<16x16xf32>
    %57 = math.exp %56 : vector<16x16xf32>
    %58 = arith.mulf %57, %19 : vector<16x16xf32>
    %cst_34 = arith.constant dense<0.000000e+00> : vector<16xf32>
    %59 = vector.multi_reduction <add>, %58, %cst_34 [1] : vector<16x16xf32> to vector<16xf32>
    %60 = vector.shape_cast %59 : vector<16xf32> to vector<16x1xf32>
    %cst_35 = arith.constant 1.000000e-16 : f32
    %61 = vector.broadcast %cst_35 : f32 to vector<16x1xf32>
    %62 = arith.addf %60, %61 : vector<16x1xf32>
    %63 = vector.broadcast %62 : vector<16x1xf32> to vector<16x16xf32>
    %64 = arith.divf %58, %63 : vector<16x16xf32>
    %cst_36 = arith.constant dense<0.000000e+00> : vector<16x16xf32>
    %65 = tpu.matmul %64, %45, %cst_36 {dimension_numbers = #tpu.dot_dimension_numbers<[1], [0], [0], [1], [0, 0, 1, 1], [], []>} : vector<16x16xf32>, vector<16x16xf32>, vector<16x16xf32> -> vector<16x16xf32>
    %66 = tpu.concatenate %42, %65 in 1 : vector<16x16xf32>, vector<16x16xf32> -> vector<16x32xf32>
    %cst_37 = arith.constant 5.000000e-01 : f32
    %67 = vector.broadcast %cst_37 : f32 to vector<16x32xf32>
    %68 = arith.mulf %67, %66 : vector<16x32xf32>
    %cst_38 = arith.constant 4.471500e-02 : f32
    %69 = vector.broadcast %cst_38 : f32 to vector<16x32xf32>
    %70 = arith.mulf %69, %66 : vector<16x32xf32>
    %71 = arith.mulf %70, %66 : vector<16x32xf32>
    %72 = arith.mulf %71, %66 : vector<16x32xf32>
    %73 = arith.addf %66, %72 : vector<16x32xf32>
    %cst_39 = arith.constant 0.797884583 : f32
    %74 = vector.broadcast %cst_39 : f32 to vector<16x32xf32>
    %75 = arith.mulf %74, %73 : vector<16x32xf32>
    %76 = math.tanh %75 : vector<16x32xf32>
    %cst_40 = arith.constant 1.000000e+00 : f32
    %77 = vector.broadcast %cst_40 : f32 to vector<16x32xf32>
    %78 = arith.addf %77, %76 : vector<16x32xf32>
    %79 = arith.mulf %68, %78 : vector<16x32xf32>
    %c0_41 = arith.constant 0 : index
    %c0_42 = arith.constant 0 : index
    %c0_43 = arith.constant 0 : index
    %80 = vector.load %arg8[%c0_41, %c0_42, %c0_43] : memref<1x32x32xf32, #tpu.memory_space<vmem>>, vector<1x32x32xf32>
    %81 = vector.shape_cast %80 : vector<1x32x32xf32> to vector<32x32xf32>
    %cst_44 = arith.constant dense<0.000000e+00> : vector<16x32xf32>
    %82 = tpu.matmul %79, %81, %cst_44 {dimension_numbers = #tpu.dot_dimension_numbers<[1], [0], [0], [1], [0, 0, 1, 1], [], []>} : vector<16x32xf32>, vector<32x32xf32>, vector<16x32xf32> -> vector<16x32xf32>
    %c0_45 = arith.constant 0 : index
    %c0_46 = arith.constant 0 : index
    %c0_47 = arith.constant 0 : index
    %83 = vector.load %arg9[%c0_45, %c0_46, %c0_47] : memref<1x1x32xf32, #tpu.memory_space<vmem>>, vector<1x1x32xf32>
    %84 = vector.shape_cast %83 : vector<1x1x32xf32> to vector<1x32xf32>
    %85 = vector.broadcast %84 : vector<1x32xf32> to vector<16x32xf32>
    %86 = arith.addf %82, %85 : vector<16x32xf32>
    %cst_48 = arith.constant dense<0.000000e+00> : vector<16xf32>
    %87 = vector.multi_reduction <add>, %86, %cst_48 [1] : vector<16x32xf32> to vector<16xf32>
    %88 = vector.shape_cast %87 : vector<16xf32> to vector<16x1xf32>
    %cst_49 = arith.constant 3.200000e+01 : f32
    %89 = vector.broadcast %cst_49 : f32 to vector<16x1xf32>
    %90 = arith.divf %88, %89 : vector<16x1xf32>
    %91 = vector.broadcast %90 : vector<16x1xf32> to vector<16x32xf32>
    %92 = arith.subf %86, %91 : vector<16x32xf32>
    %93 = arith.mulf %92, %92 : vector<16x32xf32>
    %cst_50 = arith.constant dense<0.000000e+00> : vector<16xf32>
    %94 = vector.multi_reduction <add>, %93, %cst_50 [1] : vector<16x32xf32> to vector<16xf32>
    %95 = vector.shape_cast %94 : vector<16xf32> to vector<16x1xf32>
    %cst_51 = arith.constant 3.200000e+01 : f32
    %96 = vector.broadcast %cst_51 : f32 to vector<16x1xf32>
    %97 = arith.divf %95, %96 : vector<16x1xf32>
    %cst_52 = arith.constant 9.99999974E-6 : f32
    %98 = vector.broadcast %cst_52 : f32 to vector<16x1xf32>
    %99 = arith.addf %97, %98 : vector<16x1xf32>
    %100 = math.rsqrt %99 : vector<16x1xf32>
    %101 = vector.broadcast %100 : vector<16x1xf32> to vector<16x32xf32>
    %102 = arith.mulf %92, %101 : vector<16x32xf32>
    %c0_53 = arith.constant 0 : index
    %c0_54 = arith.constant 0 : index
    %c0_55 = arith.constant 0 : index
    %103 = vector.load %arg11[%c0_53, %c0_54, %c0_55] : memref<1x1x32xf32, #tpu.memory_space<vmem>>, vector<1x1x32xf32>
    %104 = vector.shape_cast %103 : vector<1x1x32xf32> to vector<1x32xf32>
    %105 = vector.broadcast %104 : vector<1x32xf32> to vector<16x32xf32>
    %106 = arith.mulf %102, %105 : vector<16x32xf32>
    %c0_56 = arith.constant 0 : index
    %c0_57 = arith.constant 0 : index
    %c0_58 = arith.constant 0 : index
    %107 = vector.load %arg12[%c0_56, %c0_57, %c0_58] : memref<1x1x32xf32, #tpu.memory_space<vmem>>, vector<1x1x32xf32>
    %108 = vector.shape_cast %107 : vector<1x1x32xf32> to vector<1x32xf32>
    %109 = vector.broadcast %108 : vector<1x32xf32> to vector<16x32xf32>
    %110 = arith.addf %106, %109 : vector<16x32xf32>
    %cst_59 = arith.constant 5.000000e-01 : f32
    %111 = vector.broadcast %cst_59 : f32 to vector<16x32xf32>
    %112 = arith.mulf %111, %110 : vector<16x32xf32>
    %cst_60 = arith.constant 4.471500e-02 : f32
    %113 = vector.broadcast %cst_60 : f32 to vector<16x32xf32>
    %114 = arith.mulf %113, %110 : vector<16x32xf32>
    %115 = arith.mulf %114, %110 : vector<16x32xf32>
    %116 = arith.mulf %115, %110 : vector<16x32xf32>
    %117 = arith.addf %110, %116 : vector<16x32xf32>
    %cst_61 = arith.constant 0.797884583 : f32
    %118 = vector.broadcast %cst_61 : f32 to vector<16x32xf32>
    %119 = arith.mulf %118, %117 : vector<16x32xf32>
    %120 = math.tanh %119 : vector<16x32xf32>
    %cst_62 = arith.constant 1.000000e+00 : f32
    %121 = vector.broadcast %cst_62 : f32 to vector<16x32xf32>
    %122 = arith.addf %121, %120 : vector<16x32xf32>
    %123 = arith.mulf %112, %122 : vector<16x32xf32>
    %c0_63 = arith.constant 0 : index
    %c0_64 = arith.constant 0 : index
    %c0_65 = arith.constant 0 : index
    %124 = vector.load %arg15[%c0_63, %c0_64, %c0_65] : memref<1x16x32xf32, #tpu.memory_space<vmem>>, vector<1x16x32xf32>
    %125 = vector.shape_cast %124 : vector<1x16x32xf32> to vector<16x32xf32>
    %126 = vector.shape_cast %123 : vector<16x32xf32> to vector<1x16x32xf32>
    tpu.vector_store %arg15[%c0_63, %c0_64, %c0_65], %126 {strides = array<i32>} : memref<1x16x32xf32, #tpu.memory_space<vmem>>, vector<1x16x32xf32>,
    %c0_66 = arith.constant 0 : index
    %c0_67 = arith.constant 0 : index
    %c0_68 = arith.constant 0 : index
    %127 = vector.load %arg13[%c0_66, %c0_67, %c0_68] : memref<1x32x1xf32, #tpu.memory_space<vmem>>, vector<1x32x1xf32>
    %128 = vector.shape_cast %127 : vector<1x32x1xf32> to vector<32x1xf32>
    %cst_69 = arith.constant dense<0.000000e+00> : vector<16x1xf32>
    %129 = tpu.matmul %123, %128, %cst_69 {dimension_numbers = #tpu.dot_dimension_numbers<[1], [0], [0], [1], [0, 0, 1, 1], [], []>} : vector<16x32xf32>, vector<32x1xf32>, vector<16x1xf32> -> vector<16x1xf32>
    %c0_70 = arith.constant 0 : index
    %c0_71 = arith.constant 0 : index
    %c0_72 = arith.constant 0 : index
    %130 = vector.load %arg14[%c0_70, %c0_71, %c0_72] : memref<1x1x1xf32, #tpu.memory_space<vmem>>, vector<1x1x1xf32>
    %131 = vector.shape_cast %130 : vector<1x1x1xf32> to vector<1x1xf32>
    %132 = vector.broadcast %131 : vector<1x1xf32> to vector<16x1xf32>
    %133 = arith.addf %129, %132 : vector<16x1xf32>
    %c0_73 = arith.constant 0 : index
    %c0_74 = arith.constant 0 : index
    %c0_75 = arith.constant 0 : index
    %134 = vector.load %arg16[%c0_73, %c0_74, %c0_75] : memref<1x16x1xf32, #tpu.memory_space<vmem>>, vector<1x16x1xf32>
    %135 = vector.shape_cast %134 : vector<1x16x1xf32> to vector<16x1xf32>
    %136 = vector.shape_cast %133 : vector<16x1xf32> to vector<1x16x1xf32>
    tpu.vector_store %arg16[%c0_73, %c0_74, %c0_75], %136 {strides = array<i32>} : memref<1x16x1xf32, #tpu.memory_space<vmem>>, vector<1x16x1xf32>,
    return
  }
  func.func @transform_0(%arg0: i32) -> (i32, i32, i32) {
    %c0_i32 = arith.constant 0 : i32
    %c0_i32_0 = arith.constant 0 : i32
    %c0_i32_1 = arith.constant 0 : i32
    return %arg0, %c0_i32, %c0_i32_0 : i32, i32, i32
  }
  func.func @transform_1(%arg0: i32) -> (i32, i32, i32) {
    %c1_i32 = arith.constant 1 : i32
    %0 = arith.subi %c1_i32, %arg0 : i32
    %c0_i32 = arith.constant 0 : i32
    %c0_i32_0 = arith.constant 0 : i32
    %c0_i32_1 = arith.constant 0 : i32
    return %0, %c0_i32, %c0_i32_0 : i32, i32, i32
  }
  func.func @transform_2(%arg0: i32) -> (i32, i32, i32) {
    %c0_i32 = arith.constant 0 : i32
    %c0_i32_0 = arith.constant 0 : i32
    %c0_i32_1 = arith.constant 0 : i32
    return %arg0, %c0_i32, %c0_i32_0 : i32, i32, i32
  }
  func.func @transform_3(%arg0: i32) -> (i32, i32, i32) {
    %c0_i32 = arith.constant 0 : i32
    %c0_i32_0 = arith.constant 0 : i32
    %c0_i32_1 = arith.constant 0 : i32
    return %arg0, %c0_i32, %c0_i32_0 : i32, i32, i32
  }
  func.func @transform_4(%arg0: i32) -> (i32, i32, i32) {
    %c0_i32 = arith.constant 0 : i32
    %c0_i32_0 = arith.constant 0 : i32
    %c0_i32_1 = arith.constant 0 : i32
    return %arg0, %c0_i32, %c0_i32_0 : i32, i32, i32
  }
  func.func @transform_5(%arg0: i32) -> (i32, i32, i32) {
    %c0_i32 = arith.constant 0 : i32
    %c0_i32_0 = arith.constant 0 : i32
    %c0_i32_1 = arith.constant 0 : i32
    return %arg0, %c0_i32, %c0_i32_0 : i32, i32, i32
  }
  func.func @transform_6(%arg0: i32) -> (i32, i32, i32) {
    %c0_i32 = arith.constant 0 : i32
    %c0_i32_0 = arith.constant 0 : i32
    %c0_i32_1 = arith.constant 0 : i32
    return %arg0, %c0_i32, %c0_i32_0 : i32, i32, i32
  }
  func.func @transform_7(%arg0: i32) -> (i32, i32, i32) {
    %c0_i32 = arith.constant 0 : i32
    %c0_i32_0 = arith.constant 0 : i32
    %c0_i32_1 = arith.constant 0 : i32
    return %arg0, %c0_i32, %c0_i32_0 : i32, i32, i32
  }
  func.func @transform_8(%arg0: i32) -> (i32, i32, i32) {
    %c0_i32 = arith.constant 0 : i32
    %c0_i32_0 = arith.constant 0 : i32
    %c0_i32_1 = arith.constant 0 : i32
    return %arg0, %c0_i32, %c0_i32_0 : i32, i32, i32
  }
  func.func @transform_9(%arg0: i32) -> (i32, i32, i32) {
    %c0_i32 = arith.constant 0 : i32
    %c0_i32_0 = arith.constant 0 : i32
    %c0_i32_1 = arith.constant 0 : i32
    return %arg0, %c0_i32, %c0_i32_0 : i32, i32, i32
  }
  func.func @transform_10(%arg0: i32) -> (i32, i32, i32) {
    %c0_i32 = arith.constant 0 : i32
    %c0_i32_0 = arith.constant 0 : i32
    %c0_i32_1 = arith.constant 0 : i32
    return %arg0, %c0_i32, %c0_i32_0 : i32, i32, i32
  }
  func.func @transform_11(%arg0: i32) -> (i32, i32, i32) {
    %c0_i32 = arith.constant 0 : i32
    %c0_i32_0 = arith.constant 0 : i32
    %c0_i32_1 = arith.constant 0 : i32
    return %arg0, %c0_i32, %c0_i32_0 : i32, i32, i32
  }
  func.func @transform_12(%arg0: i32) -> (i32, i32, i32) {
    %c0_i32 = arith.constant 0 : i32
    %c0_i32_0 = arith.constant 0 : i32
    %c0_i32_1 = arith.constant 0 : i32
    return %arg0, %c0_i32, %c0_i32_0 : i32, i32, i32
  }
  func.func @transform_13(%arg0: i32) -> (i32, i32, i32) {
    %c0_i32 = arith.constant 0 : i32
    %c0_i32_0 = arith.constant 0 : i32
    %c0_i32_1 = arith.constant 0 : i32
    return %arg0, %c0_i32, %c0_i32_0 : i32, i32, i32
  }
  func.func @transform_14(%arg0: i32) -> (i32, i32, i32) {
    %c0_i32 = arith.constant 0 : i32
    %c0_i32_0 = arith.constant 0 : i32
    %c0_i32_1 = arith.constant 0 : i32
    return %arg0, %c0_i32, %c0_i32_0 : i32, i32, i32
  }
  func.func @transform_15(%arg0: i32) -> (i32, i32, i32) {
    %c0_i32 = arith.constant 0 : i32
    %c0_i32_0 = arith.constant 0 : i32
    %c0_i32_1 = arith.constant 0 : i32
    return %arg0, %c0_i32, %c0_i32_0 : i32, i32, i32
  }
}

module attributes {stable_mosaic.version = 11 : i64} {
  func.func @kernel(%arg0: i32, %arg1: memref<1x128xf32, #tpu.memory_space<vmem>>, %arg2: memref<128x64xf32, #tpu.memory_space<vmem>>, %arg3: memref<1x64xf32, #tpu.memory_space<vmem>>, %arg4: memref<64x32xf32, #tpu.memory_space<vmem>>, %arg5: memref<1x32xf32, #tpu.memory_space<vmem>>, %arg6: memref<32x4xf32, #tpu.memory_space<vmem>>, %arg7: memref<1x4xf32, #tpu.memory_space<vmem>>, %arg8: memref<1x4xf32, #tpu.memory_space<vmem>>) attributes {dimension_semantics = [#tpu.dimension_semantics<arbitrary>], iteration_bounds = array<i64: 1>, scalar_prefetch = 0 : i64, scratch_operands = 0 : i64, tpu.core_type = #tpu.core_type<tc>, window_params = [{pipeline_mode = #tpu.pipeline_mode<synchronous>, transform_indices = @transform_0, window_bounds = array<i64: 1, 128>}, {pipeline_mode = #tpu.pipeline_mode<synchronous>, transform_indices = @transform_1, window_bounds = array<i64: 128, 64>}, {pipeline_mode = #tpu.pipeline_mode<synchronous>, transform_indices = @transform_2, window_bounds = array<i64: 1, 64>}, {pipeline_mode = #tpu.pipeline_mode<synchronous>, transform_indices = @transform_3, window_bounds = array<i64: 64, 32>}, {pipeline_mode = #tpu.pipeline_mode<synchronous>, transform_indices = @transform_4, window_bounds = array<i64: 1, 32>}, {pipeline_mode = #tpu.pipeline_mode<synchronous>, transform_indices = @transform_5, window_bounds = array<i64: 32, 4>}, {pipeline_mode = #tpu.pipeline_mode<synchronous>, transform_indices = @transform_6, window_bounds = array<i64: 1, 4>}, {pipeline_mode = #tpu.pipeline_mode<synchronous>, transform_indices = @transform_7, window_bounds = array<i64: 1, 4>}]} {
    %c0 = arith.constant 0 : index
    %c0_0 = arith.constant 0 : index
    %0 = vector.load %arg1[%c0, %c0_0] : memref<1x128xf32, #tpu.memory_space<vmem>>, vector<1x128xf32>
    %c0_1 = arith.constant 0 : index
    %c0_2 = arith.constant 0 : index
    %1 = vector.load %arg2[%c0_1, %c0_2] : memref<128x64xf32, #tpu.memory_space<vmem>>, vector<128x64xf32>
    %c0_3 = arith.constant 0 : index
    %c0_4 = arith.constant 0 : index
    %2 = vector.load %arg3[%c0_3, %c0_4] : memref<1x64xf32, #tpu.memory_space<vmem>>, vector<1x64xf32>
    %cst = arith.constant dense<0.000000e+00> : vector<1x64xf32>
    %3 = tpu.matmul %0, %1, %cst {dimension_numbers = #tpu.dot_dimension_numbers<[1], [0], [0], [1], [0, 0, 1, 1], [], []>} : vector<1x128xf32>, vector<128x64xf32>, vector<1x64xf32> -> vector<1x64xf32>
    %4 = arith.addf %3, %2 : vector<1x64xf32>
    %cst_5 = arith.constant 5.000000e-01 : f32
    %5 = vector.broadcast %cst_5 : f32 to vector<1x64xf32>
    %6 = arith.mulf %5, %4 : vector<1x64xf32>
    %cst_6 = arith.constant 4.471500e-02 : f32
    %7 = vector.broadcast %cst_6 : f32 to vector<1x64xf32>
    %8 = arith.mulf %7, %4 : vector<1x64xf32>
    %9 = arith.mulf %8, %4 : vector<1x64xf32>
    %10 = arith.mulf %9, %4 : vector<1x64xf32>
    %11 = arith.addf %4, %10 : vector<1x64xf32>
    %cst_7 = arith.constant 0.797884583 : f32
    %12 = vector.broadcast %cst_7 : f32 to vector<1x64xf32>
    %13 = arith.mulf %12, %11 : vector<1x64xf32>
    %14 = math.tanh %13 : vector<1x64xf32>
    %cst_8 = arith.constant 1.000000e+00 : f32
    %15 = vector.broadcast %cst_8 : f32 to vector<1x64xf32>
    %16 = arith.addf %15, %14 : vector<1x64xf32>
    %17 = arith.mulf %6, %16 : vector<1x64xf32>
    %c0_9 = arith.constant 0 : index
    %c0_10 = arith.constant 0 : index
    %18 = vector.load %arg4[%c0_9, %c0_10] : memref<64x32xf32, #tpu.memory_space<vmem>>, vector<64x32xf32>
    %c0_11 = arith.constant 0 : index
    %c0_12 = arith.constant 0 : index
    %19 = vector.load %arg5[%c0_11, %c0_12] : memref<1x32xf32, #tpu.memory_space<vmem>>, vector<1x32xf32>
    %cst_13 = arith.constant dense<0.000000e+00> : vector<1x32xf32>
    %20 = tpu.matmul %17, %18, %cst_13 {dimension_numbers = #tpu.dot_dimension_numbers<[1], [0], [0], [1], [0, 0, 1, 1], [], []>} : vector<1x64xf32>, vector<64x32xf32>, vector<1x32xf32> -> vector<1x32xf32>
    %21 = arith.addf %20, %19 : vector<1x32xf32>
    %cst_14 = arith.constant 5.000000e-01 : f32
    %22 = vector.broadcast %cst_14 : f32 to vector<1x32xf32>
    %23 = arith.mulf %22, %21 : vector<1x32xf32>
    %cst_15 = arith.constant 4.471500e-02 : f32
    %24 = vector.broadcast %cst_15 : f32 to vector<1x32xf32>
    %25 = arith.mulf %24, %21 : vector<1x32xf32>
    %26 = arith.mulf %25, %21 : vector<1x32xf32>
    %27 = arith.mulf %26, %21 : vector<1x32xf32>
    %28 = arith.addf %21, %27 : vector<1x32xf32>
    %cst_16 = arith.constant 0.797884583 : f32
    %29 = vector.broadcast %cst_16 : f32 to vector<1x32xf32>
    %30 = arith.mulf %29, %28 : vector<1x32xf32>
    %31 = math.tanh %30 : vector<1x32xf32>
    %cst_17 = arith.constant 1.000000e+00 : f32
    %32 = vector.broadcast %cst_17 : f32 to vector<1x32xf32>
    %33 = arith.addf %32, %31 : vector<1x32xf32>
    %34 = arith.mulf %23, %33 : vector<1x32xf32>
    %c0_18 = arith.constant 0 : index
    %c0_19 = arith.constant 0 : index
    %35 = vector.load %arg6[%c0_18, %c0_19] : memref<32x4xf32, #tpu.memory_space<vmem>>, vector<32x4xf32>
    %c0_20 = arith.constant 0 : index
    %c0_21 = arith.constant 0 : index
    %36 = vector.load %arg7[%c0_20, %c0_21] : memref<1x4xf32, #tpu.memory_space<vmem>>, vector<1x4xf32>
    %cst_22 = arith.constant dense<0.000000e+00> : vector<1x4xf32>
    %37 = tpu.matmul %34, %35, %cst_22 {dimension_numbers = #tpu.dot_dimension_numbers<[1], [0], [0], [1], [0, 0, 1, 1], [], []>} : vector<1x32xf32>, vector<32x4xf32>, vector<1x4xf32> -> vector<1x4xf32>
    %38 = arith.addf %37, %36 : vector<1x4xf32>
    %c0_23 = arith.constant 0 : index
    %c0_24 = arith.constant 0 : index
    %39 = vector.load %arg8[%c0_23, %c0_24] : memref<1x4xf32, #tpu.memory_space<vmem>>, vector<1x4xf32>
    tpu.vector_store %arg8[%c0_23, %c0_24], %38 {strides = array<i32>} : memref<1x4xf32, #tpu.memory_space<vmem>>, vector<1x4xf32>,
    return
  }
  func.func @transform_0(%arg0: i32) -> (i32, i32) {
    %c0_i32 = arith.constant 0 : i32
    %c0_i32_0 = arith.constant 0 : i32
    %c0_i32_1 = arith.constant 0 : i32
    return %c0_i32, %c0_i32_0 : i32, i32
  }
  func.func @transform_1(%arg0: i32) -> (i32, i32) {
    %c0_i32 = arith.constant 0 : i32
    %c0_i32_0 = arith.constant 0 : i32
    %c0_i32_1 = arith.constant 0 : i32
    return %c0_i32, %c0_i32_0 : i32, i32
  }
  func.func @transform_2(%arg0: i32) -> (i32, i32) {
    %c0_i32 = arith.constant 0 : i32
    %c0_i32_0 = arith.constant 0 : i32
    %c0_i32_1 = arith.constant 0 : i32
    return %c0_i32, %c0_i32_0 : i32, i32
  }
  func.func @transform_3(%arg0: i32) -> (i32, i32) {
    %c0_i32 = arith.constant 0 : i32
    %c0_i32_0 = arith.constant 0 : i32
    %c0_i32_1 = arith.constant 0 : i32
    return %c0_i32, %c0_i32_0 : i32, i32
  }
  func.func @transform_4(%arg0: i32) -> (i32, i32) {
    %c0_i32 = arith.constant 0 : i32
    %c0_i32_0 = arith.constant 0 : i32
    %c0_i32_1 = arith.constant 0 : i32
    return %c0_i32, %c0_i32_0 : i32, i32
  }
  func.func @transform_5(%arg0: i32) -> (i32, i32) {
    %c0_i32 = arith.constant 0 : i32
    %c0_i32_0 = arith.constant 0 : i32
    %c0_i32_1 = arith.constant 0 : i32
    return %c0_i32, %c0_i32_0 : i32, i32
  }
  func.func @transform_6(%arg0: i32) -> (i32, i32) {
    %c0_i32 = arith.constant 0 : i32
    %c0_i32_0 = arith.constant 0 : i32
    %c0_i32_1 = arith.constant 0 : i32
    return %c0_i32, %c0_i32_0 : i32, i32
  }
  func.func @transform_7(%arg0: i32) -> (i32, i32) {
    %c0_i32 = arith.constant 0 : i32
    %c0_i32_0 = arith.constant 0 : i32
    %c0_i32_1 = arith.constant 0 : i32
    return %c0_i32, %c0_i32_0 : i32, i32
  }
}

</mosaic_0001>

<llo_original>
// kernel: hgt_forward.4
$region0: #{hgt_forward.4}
  #allocation0 [shape = 'u32[]', space=smem, size = 0x4, offset = 0x4, fixed_abs, tag = 'smem constant byte address 0x4 - core index']
  #allocation1 [shape = 'u32[144,128]{1,0:T(1,128)}', space=vmem, size = 0x12000, scoped, tag = 'internal scratch']
  %s0 = inlined_call_operand.vmem [shape: f32[2,16,32], index: 0, kind: input, shape index: {}, may-alias: {0,1}]
  %s1 = inlined_call_operand.vmem [shape: f32[2,16,32], index: 1, kind: input, shape index: {}, may-alias: {0,1}]
  %s2 = inlined_call_operand.vmem [shape: f32[2,32,32], index: 2, kind: input, shape index: {}]
  %s3 = inlined_call_operand.vmem [shape: f32[2,1,32], index: 3, kind: input, shape index: {}]
  %s4 = inlined_call_operand.vmem [shape: f32[2,32,64], index: 4, kind: input, shape index: {}]
  %s5 = inlined_call_operand.vmem [shape: f32[2,1,64], index: 5, kind: input, shape index: {}]
  %s6 = inlined_call_operand.vmem [shape: f32[2,16,16], index: 6, kind: input, shape index: {}]
  %s7 = inlined_call_operand.vmem [shape: f32[2,32,32], index: 7, kind: input, shape index: {}]
  %s8 = inlined_call_operand.vmem [shape: f32[2,1,32], index: 8, kind: input, shape index: {}]
  %s9 = inlined_call_operand.vmem [shape: f32[2,1,32], index: 9, kind: input, shape index: {}]
  %s10 = inlined_call_operand.vmem [shape: f32[2,1,32], index: 10, kind: input, shape index: {}]
  %s11 = inlined_call_operand.vmem [shape: f32[2,1,32], index: 11, kind: input, shape index: {}]
  %s12 = inlined_call_operand.vmem [shape: f32[2,32,1], index: 12, kind: input, shape index: {}]
  %s13 = inlined_call_operand.vmem [shape: f32[2,1,1], index: 13, kind: input, shape index: {}]
  %s14 = inlined_call_operand.vmem [shape: f32[2,16,32], index: 14, kind: output, shape index: {0}]
  %s15 = inlined_call_operand.vmem [shape: f32[2,16,1], index: 15, kind: output, shape index: {1}]
  %16 = xla_tuple %s14, %s15
  %s17 = sld [smem:[#allocation0]]
  $region97: #{hgt_forward.4} parent=0
    _
  %s19 = ssub.s32 1, %s17
  %s20 = scalar_select 0, %s19, %s17
  loop: start=0, step=1, limit=4
  $region2: #{hgt_forward.4} parent=0 // loop_pre_header
    _
  $region3: #{hgt_forward.4} parent=0 // loop_header
    %s22 = sphi 0, %s26
    %p23 = scmp.ge.s32.totalorder %s22, 4
    %s32 = sphi 0, %s34
    %s35 = sphi 0, %s32
    %s36 = sphi 0, %s35
    %s52 = sphi 0, %s36
    %s60 = sphi 0, %s62
    %s63 = sphi 0, %s60
    %s64 = sphi 0, %s63
    %s80 = sphi 0, %s64
    %s86 = sphi 0, %s88
    %s89 = sphi 0, %s86
    %s90 = sphi 0, %s89
    %s106 = sphi 0, %s90
    %s112 = sphi 0, %s114
    %s115 = sphi 0, %s112
    %s116 = sphi 0, %s115
    %s132 = sphi 0, %s116
    %s138 = sphi 0, %s140
    %s141 = sphi 0, %s138
    %s142 = sphi 0, %s141
    %s158 = sphi 0, %s142
    %s164 = sphi 0, %s166
    %s167 = sphi 0, %s164
    %s168 = sphi 0, %s167
    %s184 = sphi 0, %s168
    %s190 = sphi 0, %s192
    %s193 = sphi 0, %s190
    %s194 = sphi 0, %s193
    %s210 = sphi 0, %s194
    %s216 = sphi 0, %s218
    %s219 = sphi 0, %s216
    %s220 = sphi 0, %s219
    %s236 = sphi 0, %s220
    %s242 = sphi 0, %s244
    %s245 = sphi 0, %s242
    %s246 = sphi 0, %s245
    %s262 = sphi 0, %s246
    %s268 = sphi 0, %s270
    %s271 = sphi 0, %s268
    %s272 = sphi 0, %s271
    %s288 = sphi 0, %s272
    %s294 = sphi 0, %s296
    %s297 = sphi 0, %s294
    %s298 = sphi 0, %s297
    %s314 = sphi 0, %s298
    %s320 = sphi 0, %s322
    %s323 = sphi 0, %s320
    %s324 = sphi 0, %s323
    %s340 = sphi 0, %s324
    %s346 = sphi 0, %s348
    %s349 = sphi 0, %s346
    %s350 = sphi 0, %s349
    %s366 = sphi 0, %s350
    %s372 = sphi 0, %s374
    %s375 = sphi 0, %s372
    %s376 = sphi 0, %s375
    %s392 = sphi 0, %s376
    %s398 = sphi 0, %s400
    %s401 = sphi 0, %s398
    %s402 = sphi 0, %s401
    %s418 = sphi 0, %s402
    %s424 = sphi 0, %s426
    %s427 = sphi 0, %s424
    %s428 = sphi 0, %s427
    %s444 = sphi 0, %s428
  $region4: #{hgt_forward.4} parent=0 // loop_header_branch
    %25 = sbr.rel (%p23) target = $region8
  $region5: #{hgt_forward.4} parent=0 // loop_body
    %s27 = ssub.s32 %s22, 1
    %s28 = ssub.s32 %s22, 2
    %s29 = sadd.s32 %s22, 1
    %s30 = ssub.s32 %s22, %s29
    %p31 = scmp.eq.s32.totalorder %s30, 0
    %s33 = sadd.s32 %s32, 1
    %s34 = scalar_select %p31, %s32, %s33
    %p37 = pneg %p31
    %p38 = scmp.eq.s32.totalorder %s22, 1
    %p39 = por %p37, %p38
    %p40 = scmp.ne.s32.totalorder %s32, %s35
    %p41 = scmp.eq.s32.totalorder %s22, 0
    %p42 = por %p40, %p41
    %p43 = scmp.ne.s32.totalorder %s32, %s35
    %p44 = scmp.eq.s32.totalorder %s27, 1
    %p45 = por %p43, %p44
    %p46 = scmp.ne.s32.totalorder %s35, %s36
    %p47 = scmp.eq.s32.totalorder %s27, 0
    %p48 = por %p46, %p47
    %p49 = scmp.ne.s32.totalorder %s35, %s36
    %p50 = scmp.eq.s32.totalorder %s28, 1
    %p51 = por %p49, %p50
    %p53 = scmp.ne.s32.totalorder %s36, %s52
    %p54 = scmp.eq.s32.totalorder %s28, 0
    %p55 = por %p53, %p54
    %s56 = ssub.s32 1, %s22
    %s57 = ssub.s32 1, %s29
    %s58 = ssub.s32 %s56, %s57
    %p59 = scmp.eq.s32.totalorder %s58, 0
    %s61 = sadd.s32 %s60, 1
    %s62 = scalar_select %p59, %s60, %s61
    %p65 = pneg %p59
    %p66 = scmp.eq.s32.totalorder %s22, 1
    %p67 = por %p65, %p66
    %p68 = scmp.ne.s32.totalorder %s60, %s63
    %p69 = scmp.eq.s32.totalorder %s22, 0
    %p70 = por %p68, %p69
    %p71 = scmp.ne.s32.totalorder %s60, %s63
    %p72 = scmp.eq.s32.totalorder %s27, 1
    %p73 = por %p71, %p72
    %p74 = scmp.ne.s32.totalorder %s63, %s64
    %p75 = scmp.eq.s32.totalorder %s27, 0
    %p76 = por %p74, %p75
    %p77 = scmp.ne.s32.totalorder %s63, %s64
    %p78 = scmp.eq.s32.totalorder %s28, 1
    %p79 = por %p77, %p78
    %p81 = scmp.ne.s32.totalorder %s64, %s80
    %p82 = scmp.eq.s32.totalorder %s28, 0
    %p83 = por %p81, %p82
    %s84 = ssub.s32 %s22, %s29
    %p85 = scmp.eq.s32.totalorder %s84, 0
    %s87 = sadd.s32 %s86, 1
    %s88 = scalar_select %p85, %s86, %s87
    %p91 = pneg %p85
    %p92 = scmp.eq.s32.totalorder %s22, 1
    %p93 = por %p91, %p92
    %p94 = scmp.ne.s32.totalorder %s86, %s89
    %p95 = scmp.eq.s32.totalorder %s22, 0
    %p96 = por %p94, %p95
    %p97 = scmp.ne.s32.totalorder %s86, %s89
    %p98 = scmp.eq.s32.totalorder %s27, 1
    %p99 = por %p97, %p98
    %p100 = scmp.ne.s32.totalorder %s89, %s90
    %p101 = scmp.eq.s32.totalorder %s27, 0
    %p102 = por %p100, %p101
    %p103 = scmp.ne.s32.totalorder %s89, %s90
    %p104 = scmp.eq.s32.totalorder %s28, 1
    %p105 = por %p103, %p104
    %p107 = scmp.ne.s32.totalorder %s90, %s106
    %p108 = scmp.eq.s32.totalorder %s28, 0
    %p109 = por %p107, %p108
    %s110 = ssub.s32 %s22, %s29
    %p111 = scmp.eq.s32.totalorder %s110, 0
    %s113 = sadd.s32 %s112, 1
    %s114 = scalar_select %p111, %s112, %s113
    %p117 = pneg %p111
    %p118 = scmp.eq.s32.totalorder %s22, 1
    %p119 = por %p117, %p118
    %p120 = scmp.ne.s32.totalorder %s112, %s115
    %p121 = scmp.eq.s32.totalorder %s22, 0
    %p122 = por %p120, %p121
    %p123 = scmp.ne.s32.totalorder %s112, %s115
    %p124 = scmp.eq.s32.totalorder %s27, 1
    %p125 = por %p123, %p124
    %p126 = scmp.ne.s32.totalorder %s115, %s116
    %p127 = scmp.eq.s32.totalorder %s27, 0
    %p128 = por %p126, %p127
    %p129 = scmp.ne.s32.totalorder %s115, %s116
    %p130 = scmp.eq.s32.totalorder %s28, 1
    %p131 = por %p129, %p130
    %p133 = scmp.ne.s32.totalorder %s116, %s132
    %p134 = scmp.eq.s32.totalorder %s28, 0
    %p135 = por %p133, %p134
    %s136 = ssub.s32 %s22, %s29
    %p137 = scmp.eq.s32.totalorder %s136, 0
    %s139 = sadd.s32 %s138, 1
    %s140 = scalar_select %p137, %s138, %s139
    %p143 = pneg %p137
    %p144 = scmp.eq.s32.totalorder %s22, 1
    %p145 = por %p143, %p144
    %p146 = scmp.ne.s32.totalorder %s138, %s141
    %p147 = scmp.eq.s32.totalorder %s22, 0
    %p148 = por %p146, %p147
    %p149 = scmp.ne.s32.totalorder %s138, %s141
    %p150 = scmp.eq.s32.totalorder %s27, 1
    %p151 = por %p149, %p150
    %p152 = scmp.ne.s32.totalorder %s141, %s142
    %p153 = scmp.eq.s32.totalorder %s27, 0
    %p154 = por %p152, %p153
    %p155 = scmp.ne.s32.totalorder %s141, %s142
    %p156 = scmp.eq.s32.totalorder %s28, 1
    %p157 = por %p155, %p156
    %p159 = scmp.ne.s32.totalorder %s142, %s158
    %p160 = scmp.eq.s32.totalorder %s28, 0
    %p161 = por %p159, %p160
    %s162 = ssub.s32 %s22, %s29
    %p163 = scmp.eq.s32.totalorder %s162, 0
    %s165 = sadd.s32 %s164, 1
    %s166 = scalar_select %p163, %s164, %s165
    %p169 = pneg %p163
    %p170 = scmp.eq.s32.totalorder %s22, 1
    %p171 = por %p169, %p170
    %p172 = scmp.ne.s32.totalorder %s164, %s167
    %p173 = scmp.eq.s32.totalorder %s22, 0
    %p174 = por %p172, %p173
    %p175 = scmp.ne.s32.totalorder %s164, %s167
    %p176 = scmp.eq.s32.totalorder %s27, 1
    %p177 = por %p175, %p176
    %p178 = scmp.ne.s32.totalorder %s167, %s168
    %p179 = scmp.eq.s32.totalorder %s27, 0
    %p180 = por %p178, %p179
    %p181 = scmp.ne.s32.totalorder %s167, %s168
    %p182 = scmp.eq.s32.totalorder %s28, 1
    %p183 = por %p181, %p182
    %p185 = scmp.ne.s32.totalorder %s168, %s184
    %p186 = scmp.eq.s32.totalorder %s28, 0
    %p187 = por %p185, %p186
    %s188 = ssub.s32 %s22, %s29
    %p189 = scmp.eq.s32.totalorder %s188, 0
    %s191 = sadd.s32 %s190, 1
    %s192 = scalar_select %p189, %s190, %s191
    %p195 = pneg %p189
    %p196 = scmp.eq.s32.totalorder %s22, 1
    %p197 = por %p195, %p196
    %p198 = scmp.ne.s32.totalorder %s190, %s193
    %p199 = scmp.eq.s32.totalorder %s22, 0
    %p200 = por %p198, %p199
    %p201 = scmp.ne.s32.totalorder %s190, %s193
    %p202 = scmp.eq.s32.totalorder %s27, 1
    %p203 = por %p201, %p202
    %p204 = scmp.ne.s32.totalorder %s193, %s194
    %p205 = scmp.eq.s32.totalorder %s27, 0
    %p206 = por %p204, %p205
    %p207 = scmp.ne.s32.totalorder %s193, %s194
    %p208 = scmp.eq.s32.totalorder %s28, 1
    %p209 = por %p207, %p208
    %p211 = scmp.ne.s32.totalorder %s194, %s210
    %p212 = scmp.eq.s32.totalorder %s28, 0
    %p213 = por %p211, %p212
    %s214 = ssub.s32 %s22, %s29
    %p215 = scmp.eq.s32.totalorder %s214, 0
    %s217 = sadd.s32 %s216, 1
    %s218 = scalar_select %p215, %s216, %s217
    %p221 = pneg %p215
    %p222 = scmp.eq.s32.totalorder %s22, 1
    %p223 = por %p221, %p222
    %p224 = scmp.ne.s32.totalorder %s216, %s219
    %p225 = scmp.eq.s32.totalorder %s22, 0
    %p226 = por %p224, %p225
    %p227 = scmp.ne.s32.totalorder %s216, %s219
    %p228 = scmp.eq.s32.totalorder %s27, 1
    %p229 = por %p227, %p228
    %p230 = scmp.ne.s32.totalorder %s219, %s220
    %p231 = scmp.eq.s32.totalorder %s27, 0
    %p232 = por %p230, %p231
    %p233 = scmp.ne.s32.totalorder %s219, %s220
    %p234 = scmp.eq.s32.totalorder %s28, 1
    %p235 = por %p233, %p234
    %p237 = scmp.ne.s32.totalorder %s220, %s236
    %p238 = scmp.eq.s32.totalorder %s28, 0
    %p239 = por %p237, %p238
    %s240 = ssub.s32 %s22, %s29
    %p241 = scmp.eq.s32.totalorder %s240, 0
    %s243 = sadd.s32 %s242, 1
    %s244 = scalar_select %p241, %s242, %s243
    %p247 = pneg %p241
    %p248 = scmp.eq.s32.totalorder %s22, 1
    %p249 = por %p247, %p248
    %p250 = scmp.ne.s32.totalorder %s242, %s245
    %p251 = scmp.eq.s32.totalorder %s22, 0
    %p252 = por %p250, %p251
    %p253 = scmp.ne.s32.totalorder %s242, %s245
    %p254 = scmp.eq.s32.totalorder %s27, 1
    %p255 = por %p253, %p254
    %p256 = scmp.ne.s32.totalorder %s245, %s246
    %p257 = scmp.eq.s32.totalorder %s27, 0
    %p258 = por %p256, %p257
    %p259 = scmp.ne.s32.totalorder %s245, %s246
    %p260 = scmp.eq.s32.totalorder %s28, 1
    %p261 = por %p259, %p260
    %p263 = scmp.ne.s32.totalorder %s246, %s262
    %p264 = scmp.eq.s32.totalorder %s28, 0
    %p265 = por %p263, %p264
    %s266 = ssub.s32 %s22, %s29
    %p267 = scmp.eq.s32.totalorder %s266, 0
    %s269 = sadd.s32 %s268, 1
    %s270 = scalar_select %p267, %s268, %s269
    %p273 = pneg %p267
    %p274 = scmp.eq.s32.totalorder %s22, 1
    %p275 = por %p273, %p274
    %p276 = scmp.ne.s32.totalorder %s268, %s271
    %p277 = scmp.eq.s32.totalorder %s22, 0
    %p278 = por %p276, %p277
    %p279 = scmp.ne.s32.totalorder %s268, %s271
    %p280 = scmp.eq.s32.totalorder %s27, 1
    %p281 = por %p279, %p280
    %p282 = scmp.ne.s32.totalorder %s271, %s272
    %p283 = scmp.eq.s32.totalorder %s27, 0
    %p284 = por %p282, %p283
    %p285 = scmp.ne.s32.totalorder %s271, %s272
    %p286 = scmp.eq.s32.totalorder %s28, 1
    %p287 = por %p285, %p286
    %p289 = scmp.ne.s32.totalorder %s272, %s288
    %p290 = scmp.eq.s32.totalorder %s28, 0
    %p291 = por %p289, %p290
    %s292 = ssub.s32 %s22, %s29
    %p293 = scmp.eq.s32.totalorder %s292, 0
    %s295 = sadd.s32 %s294, 1
    %s296 = scalar_select %p293, %s294, %s295
    %p299 = pneg %p293
    %p300 = scmp.eq.s32.totalorder %s22, 1
    %p301 = por %p299, %p300
    %p302 = scmp.ne.s32.totalorder %s294, %s297
    %p303 = scmp.eq.s32.totalorder %s22, 0
    %p304 = por %p302, %p303
    %p305 = scmp.ne.s32.totalorder %s294, %s297
    %p306 = scmp.eq.s32.totalorder %s27, 1
    %p307 = por %p305, %p306
    %p308 = scmp.ne.s32.totalorder %s297, %s298
    %p309 = scmp.eq.s32.totalorder %s27, 0
    %p310 = por %p308, %p309
    %p311 = scmp.ne.s32.totalorder %s297, %s298
    %p312 = scmp.eq.s32.totalorder %s28, 1
    %p313 = por %p311, %p312
    %p315 = scmp.ne.s32.totalorder %s298, %s314
    %p316 = scmp.eq.s32.totalorder %s28, 0
    %p317 = por %p315, %p316
    %s318 = ssub.s32 %s22, %s29
    %p319 = scmp.eq.s32.totalorder %s318, 0
    %s321 = sadd.s32 %s320, 1
    %s322 = scalar_select %p319, %s320, %s321
    %p325 = pneg %p319
    %p326 = scmp.eq.s32.totalorder %s22, 1
    %p327 = por %p325, %p326
    %p328 = scmp.ne.s32.totalorder %s320, %s323
    %p329 = scmp.eq.s32.totalorder %s22, 0
    %p330 = por %p328, %p329
    %p331 = scmp.ne.s32.totalorder %s320, %s323
    %p332 = scmp.eq.s32.totalorder %s27, 1
    %p333 = por %p331, %p332
    %p334 = scmp.ne.s32.totalorder %s323, %s324
    %p335 = scmp.eq.s32.totalorder %s27, 0
    %p336 = por %p334, %p335
    %p337 = scmp.ne.s32.totalorder %s323, %s324
    %p338 = scmp.eq.s32.totalorder %s28, 1
    %p339 = por %p337, %p338
    %p341 = scmp.ne.s32.totalorder %s324, %s340
    %p342 = scmp.eq.s32.totalorder %s28, 0
    %p343 = por %p341, %p342
    %s344 = ssub.s32 %s22, %s29
    %p345 = scmp.eq.s32.totalorder %s344, 0
    %s347 = sadd.s32 %s346, 1
    %s348 = scalar_select %p345, %s346, %s347
    %p351 = pneg %p345
    %p352 = scmp.eq.s32.totalorder %s22, 1
    %p353 = por %p351, %p352
    %p354 = scmp.ne.s32.totalorder %s346, %s349
    %p355 = scmp.eq.s32.totalorder %s22, 0
    %p356 = por %p354, %p355
    %p357 = scmp.ne.s32.totalorder %s346, %s349
    %p358 = scmp.eq.s32.totalorder %s27, 1
    %p359 = por %p357, %p358
    %p360 = scmp.ne.s32.totalorder %s349, %s350
    %p361 = scmp.eq.s32.totalorder %s27, 0
    %p362 = por %p360, %p361
    %p363 = scmp.ne.s32.totalorder %s349, %s350
    %p364 = scmp.eq.s32.totalorder %s28, 1
    %p365 = por %p363, %p364
    %p367 = scmp.ne.s32.totalorder %s350, %s366
    %p368 = scmp.eq.s32.totalorder %s28, 0
    %p369 = por %p367, %p368
    %s370 = ssub.s32 %s22, %s29
    %p371 = scmp.eq.s32.totalorder %s370, 0
    %s373 = sadd.s32 %s372, 1
    %s374 = scalar_select %p371, %s372, %s373
    %p377 = pneg %p371
    %p378 = scmp.eq.s32.totalorder %s22, 1
    %p379 = por %p377, %p378
    %p380 = scmp.ne.s32.totalorder %s372, %s375
    %p381 = scmp.eq.s32.totalorder %s22, 0
    %p382 = por %p380, %p381
    %p383 = scmp.ne.s32.totalorder %s372, %s375
    %p384 = scmp.eq.s32.totalorder %s27, 1
    %p385 = por %p383, %p384
    %p386 = scmp.ne.s32.totalorder %s375, %s376
    %p387 = scmp.eq.s32.totalorder %s27, 0
    %p388 = por %p386, %p387
    %p389 = scmp.ne.s32.totalorder %s375, %s376
    %p390 = scmp.eq.s32.totalorder %s28, 1
    %p391 = por %p389, %p390
    %p393 = scmp.ne.s32.totalorder %s376, %s392
    %p394 = scmp.eq.s32.totalorder %s28, 0
    %p395 = por %p393, %p394
    %s396 = ssub.s32 %s22, %s29
    %p397 = scmp.eq.s32.totalorder %s396, 0
    %s399 = sadd.s32 %s398, 1
    %s400 = scalar_select %p397, %s398, %s399
    %p403 = pneg %p397
    %p404 = scmp.eq.s32.totalorder %s22, 1
    %p405 = por %p403, %p404
    %p406 = scmp.ne.s32.totalorder %s398, %s401
    %p407 = scmp.eq.s32.totalorder %s22, 0
    %p408 = por %p406, %p407
    %p409 = scmp.ne.s32.totalorder %s398, %s401
    %p410 = scmp.eq.s32.totalorder %s27, 1
    %p411 = por %p409, %p410
    %p412 = scmp.ne.s32.totalorder %s401, %s402
    %p413 = scmp.eq.s32.totalorder %s27, 0
    %p414 = por %p412, %p413
    %p415 = scmp.ne.s32.totalorder %s401, %s402
    %p416 = scmp.eq.s32.totalorder %s28, 1
    %p417 = por %p415, %p416
    %p419 = scmp.ne.s32.totalorder %s402, %s418
    %p420 = scmp.eq.s32.totalorder %s28, 0
    %p421 = por %p419, %p420
    %s422 = ssub.s32 %s22, %s29
    %p423 = scmp.eq.s32.totalorder %s422, 0
    %s425 = sadd.s32 %s424, 1
    %s426 = scalar_select %p423, %s424, %s425
    %p429 = pneg %p423
    %p430 = scmp.eq.s32.totalorder %s22, 1
    %p431 = por %p429, %p430
    %p432 = scmp.ne.s32.totalorder %s424, %s427
    %p433 = scmp.eq.s32.totalorder %s22, 0
    %p434 = por %p432, %p433
    %p435 = scmp.ne.s32.totalorder %s424, %s427
    %p436 = scmp.eq.s32.totalorder %s27, 1
    %p437 = por %p435, %p436
    %p438 = scmp.ne.s32.totalorder %s427, %s428
    %p439 = scmp.eq.s32.totalorder %s27, 0
    %p440 = por %p438, %p439
    %p441 = scmp.ne.s32.totalorder %s427, %s428
    %p442 = scmp.eq.s32.totalorder %s28, 1
    %p443 = por %p441, %p442
    %p445 = scmp.ne.s32.totalorder %s428, %s444
    %p446 = scmp.eq.s32.totalorder %s28, 0
    %p447 = por %p445, %p446
    %p448 = scmp.le.s32.totalorder 1, %s22
    %p449 = scmp.lt.s32.totalorder %s22, 3
    %p450 = pnand %p448, %p449
    %p451 = pneg %p450
    // Predicated region
    $region9: #{hgt_forward.4} parent=5 // pred_check
      _
    $region10: #{hgt_forward.4} parent=5 // pred_check_branch
      %453 = sbr.rel (%p450) target = $region12
    $region11: #{hgt_forward.4} parent=5 // pred_region
      %s454 = ssub.s32 %s22, 1
    $region12: #{hgt_forward.4} parent=5 // pred_fallthru
      _
    %p455 = scmp.lt.s32.totalorder %s22, 2
    // Predicated region
    $region13: #{hgt_forward.4} parent=5 // pred_check
      %p456 = pneg %p455
    $region14: #{hgt_forward.4} parent=5 // pred_check_branch
      %458 = sbr.rel (%p456) target = $region16
    $region15: #{hgt_forward.4} parent=5 // pred_region
      // Predicated region
      $region17: #{hgt_forward.4} parent=15 // pred_check
        %p459 = pneg %p42
      $region18: #{hgt_forward.4} parent=15 // pred_check_branch
        %461 = sbr.rel (%p459) target = $region20
      $region19: #{hgt_forward.4} parent=15 // pred_region
        %p462 = scmp.lt.s32.totalorder %s22, 1
        %s463 = scalar_select %p462, %s22, 1
        %s464 = smul.addr %s463, 2
        %s465 = smul.addr %s464, 8
        %s466 = scalar_lea.vmem %s0, %s465
      $region20: #{hgt_forward.4} parent=15 // pred_fallthru
        _
      // Predicated region
      $region21: #{hgt_forward.4} parent=15 // pred_check
        %p467 = pneg %p70
      $region22: #{hgt_forward.4} parent=15 // pred_check_branch
        %469 = sbr.rel (%p467) target = $region24
      $region23: #{hgt_forward.4} parent=15 // pred_region
        %s470 = ssub.s32 1, %s22
        %p471 = scmp.lt.s32.totalorder %s470, 1
        %s472 = scalar_select %p471, %s470, 1
        %s473 = smul.addr %s472, 2
        %s474 = smul.addr %s473, 8
        %s475 = scalar_lea.vmem %s1, %s474
        %s476 = ssub.s32 1, %s22
      $region24: #{hgt_forward.4} parent=15 // pred_fallthru
        _
      // Predicated region
      $region25: #{hgt_forward.4} parent=15 // pred_check
        %p477 = pneg %p96
      $region26: #{hgt_forward.4} parent=15 // pred_check_branch
        %479 = sbr.rel (%p477) target = $region28
      $region27: #{hgt_forward.4} parent=15 // pred_region
        %p480 = scmp.lt.s32.totalorder %s22, 1
        %s481 = scalar_select %p480, %s22, 1
        %s482 = smul.addr %s481, 4
        %s483 = smul.addr %s482, 8
        %s484 = scalar_lea.vmem %s2, %s483
      $region28: #{hgt_forward.4} parent=15 // pred_fallthru
        _
      // Predicated region
      $region29: #{hgt_forward.4} parent=15 // pred_check
        %p485 = pneg %p122
      $region30: #{hgt_forward.4} parent=15 // pred_check_branch
        %487 = sbr.rel (%p485) target = $region32
      $region31: #{hgt_forward.4} parent=15 // pred_region
        %p488 = scmp.lt.s32.totalorder %s22, 1
        %s489 = scalar_select %p488, %s22, 1
        %s490 = scalar_lea.vmem %s3, %s489
      $region32: #{hgt_forward.4} parent=15 // pred_fallthru
        _
      // Predicated region
      $region33: #{hgt_forward.4} parent=15 // pred_check
        %p491 = pneg %p148
      $region34: #{hgt_forward.4} parent=15 // pred_check_branch
        %493 = sbr.rel (%p491) target = $region36
      $region35: #{hgt_forward.4} parent=15 // pred_region
        %p494 = scmp.lt.s32.totalorder %s22, 1
        %s495 = scalar_select %p494, %s22, 1
        %s496 = smul.addr %s495, 4
        %s497 = smul.addr %s496, 8
        %s498 = scalar_lea.vmem %s4, %s497
      $region36: #{hgt_forward.4} parent=15 // pred_fallthru
        _
      // Predicated region
      $region37: #{hgt_forward.4} parent=15 // pred_check
        %p499 = pneg %p174
      $region38: #{hgt_forward.4} parent=15 // pred_check_branch
        %501 = sbr.rel (%p499) target = $region40
      $region39: #{hgt_forward.4} parent=15 // pred_region
        %p502 = scmp.lt.s32.totalorder %s22, 1
        %s503 = scalar_select %p502, %s22, 1
        %s504 = scalar_lea.vmem %s5, %s503
      $region40: #{hgt_forward.4} parent=15 // pred_fallthru
        _
      // Predicated region
      $region41: #{hgt_forward.4} parent=15 // pred_check
        %p505 = pneg %p200
      $region42: #{hgt_forward.4} parent=15 // pred_check_branch
        %507 = sbr.rel (%p505) target = $region44
      $region43: #{hgt_forward.4} parent=15 // pred_region
        %p508 = scmp.lt.s32.totalorder %s22, 1
        %s509 = scalar_select %p508, %s22, 1
        %s510 = smul.addr %s509, 2
        %s511 = smul.addr %s510, 8
        %s512 = scalar_lea.vmem %s6, %s511
      $region44: #{hgt_forward.4} parent=15 // pred_fallthru
        _
      // Predicated region
      $region45: #{hgt_forward.4} parent=15 // pred_check
        %p513 = pneg %p226
      $region46: #{hgt_forward.4} parent=15 // pred_check_branch
        %515 = sbr.rel (%p513) target = $region48
      $region47: #{hgt_forward.4} parent=15 // pred_region
        %p516 = scmp.lt.s32.totalorder %s22, 1
        %s517 = scalar_select %p516, %s22, 1
        %s518 = smul.addr %s517, 4
        %s519 = smul.addr %s518, 8
        %s520 = scalar_lea.vmem %s7, %s519
      $region48: #{hgt_forward.4} parent=15 // pred_fallthru
        _
      // Predicated region
      $region49: #{hgt_forward.4} parent=15 // pred_check
        %p521 = pneg %p252
      $region50: #{hgt_forward.4} parent=15 // pred_check_branch
        %523 = sbr.rel (%p521) target = $region52
      $region51: #{hgt_forward.4} parent=15 // pred_region
        %p524 = scmp.lt.s32.totalorder %s22, 1
        %s525 = scalar_select %p524, %s22, 1
        %s526 = scalar_lea.vmem %s8, %s525
      $region52: #{hgt_forward.4} parent=15 // pred_fallthru
        _
      // Predicated region
      $region53: #{hgt_forward.4} parent=15 // pred_check
        %p527 = pneg %p278
      $region54: #{hgt_forward.4} parent=15 // pred_check_branch
        %529 = sbr.rel (%p527) target = $region56
      $region55: #{hgt_forward.4} parent=15 // pred_region
        %p530 = scmp.lt.s32.totalorder %s22, 1
        %s531 = scalar_select %p530, %s22, 1
        %s532 = scalar_lea.vmem %s9, %s531
      $region56: #{hgt_forward.4} parent=15 // pred_fallthru
        _
      // Predicated region
      $region57: #{hgt_forward.4} parent=15 // pred_check
        %p533 = pneg %p304
      $region58: #{hgt_forward.4} parent=15 // pred_check_branch
        %535 = sbr.rel (%p533) target = $region60
      $region59: #{hgt_forward.4} parent=15 // pred_region
        %p536 = scmp.lt.s32.totalorder %s22, 1
        %s537 = scalar_select %p536, %s22, 1
        %s538 = scalar_lea.vmem %s10, %s537
      $region60: #{hgt_forward.4} parent=15 // pred_fallthru
        _
      // Predicated region
      $region61: #{hgt_forward.4} parent=15 // pred_check
        %p539 = pneg %p330
      $region62: #{hgt_forward.4} parent=15 // pred_check_branch
        %541 = sbr.rel (%p539) target = $region64
      $region63: #{hgt_forward.4} parent=15 // pred_region
        %p542 = scmp.lt.s32.totalorder %s22, 1
        %s543 = scalar_select %p542, %s22, 1
        %s544 = scalar_lea.vmem %s11, %s543
      $region64: #{hgt_forward.4} parent=15 // pred_fallthru
        _
      // Predicated region
      $region65: #{hgt_forward.4} parent=15 // pred_check
        %p545 = pneg %p356
      $region66: #{hgt_forward.4} parent=15 // pred_check_branch
        %547 = sbr.rel (%p545) target = $region68
      $region67: #{hgt_forward.4} parent=15 // pred_region
        %p548 = scmp.lt.s32.totalorder %s22, 1
        %s549 = scalar_select %p548, %s22, 1
        %s550 = smul.addr %s549, 4
        %s551 = smul.addr %s550, 8
        %s552 = scalar_lea.vmem %s12, %s551
      $region68: #{hgt_forward.4} parent=15 // pred_fallthru
        _
      // Predicated region
      $region69: #{hgt_forward.4} parent=15 // pred_check
        %p553 = pneg %p382
      $region70: #{hgt_forward.4} parent=15 // pred_check_branch
        %555 = sbr.rel (%p553) target = $region72
      $region71: #{hgt_forward.4} parent=15 // pred_region
        %p556 = scmp.lt.s32.totalorder %s22, 1
        %s557 = scalar_select %p556, %s22, 1
        %s558 = scalar_lea.vmem %s13, %s557
      $region72: #{hgt_forward.4} parent=15 // pred_fallthru
        _
    $region16: #{hgt_forward.4} parent=5 // pred_fallthru
      _
    %p559 = scmp.le.s32.totalorder 1, %s22
    %p560 = scmp.lt.s32.totalorder %s22, 3
    %p561 = pnand %p559, %p560
    %p562 = pneg %p561
    // Predicated region
    $region73: #{hgt_forward.4} parent=5 // pred_check
      _
    $region74: #{hgt_forward.4} parent=5 // pred_check_branch
      %564 = sbr.rel (%p561) target = $region76
    $region75: #{hgt_forward.4} parent=5 // pred_region
      %s565 = ssub.s32 %s22, 1
      %p566 = scmp.lt.s32.totalorder %s27, 1
      %s567 = scalar_select %p566, %s27, 1
      %s568 = smul.addr %s567, 2
      %s569 = smul.addr %s568, 8
      %s570 = scalar_lea.vmem %s0, %s569
      %p571 = pneg %p48
      %p572 = pneg %p45
      %s573 = ssub.s32 1, %s27
      %p574 = scmp.lt.s32.totalorder %s573, 1
      %s575 = scalar_select %p574, %s573, 1
      %s576 = smul.addr %s575, 2
      %s577 = smul.addr %s576, 8
      %s578 = scalar_lea.vmem %s1, %s577
      %p579 = pneg %p76
      %p580 = pneg %p73
      %p581 = scmp.lt.s32.totalorder %s27, 1
      %s582 = scalar_select %p581, %s27, 1
      %s583 = smul.addr %s582, 4
      %s584 = smul.addr %s583, 8
      %s585 = scalar_lea.vmem %s2, %s584
      %p586 = pneg %p102
      %p587 = pneg %p99
      %p588 = scmp.lt.s32.totalorder %s27, 1
      %s589 = scalar_select %p588, %s27, 1
      %s590 = scalar_lea.vmem %s3, %s589
      %p591 = pneg %p128
      %p592 = pneg %p125
      %p593 = scmp.lt.s32.totalorder %s27, 1
      %s594 = scalar_select %p593, %s27, 1
      %s595 = smul.addr %s594, 4
      %s596 = smul.addr %s595, 8
      %s597 = scalar_lea.vmem %s4, %s596
      %p598 = pneg %p154
      %p599 = pneg %p151
      %p600 = scmp.lt.s32.totalorder %s27, 1
      %s601 = scalar_select %p600, %s27, 1
      %s602 = scalar_lea.vmem %s5, %s601
      %p603 = pneg %p180
      %p604 = pneg %p177
      %p605 = scmp.lt.s32.totalorder %s27, 1
      %s606 = scalar_select %p605, %s27, 1
      %s607 = smul.addr %s606, 2
      %s608 = smul.addr %s607, 8
      %s609 = scalar_lea.vmem %s6, %s608
      %p610 = pneg %p206
      %p611 = pneg %p203
      %p612 = scmp.lt.s32.totalorder %s27, 1
      %s613 = scalar_select %p612, %s27, 1
      %s614 = smul.addr %s613, 4
      %s615 = smul.addr %s614, 8
      %s616 = scalar_lea.vmem %s7, %s615
      %p617 = pneg %p232
      %p618 = pneg %p229
      %p619 = scmp.lt.s32.totalorder %s27, 1
      %s620 = scalar_select %p619, %s27, 1
      %s621 = scalar_lea.vmem %s8, %s620
      %p622 = pneg %p258
      %p623 = pneg %p255
      %p624 = scmp.lt.s32.totalorder %s27, 1
      %s625 = scalar_select %p624, %s27, 1
      %s626 = scalar_lea.vmem %s9, %s625
      %p627 = pneg %p284
      %p628 = pneg %p281
      %p629 = scmp.lt.s32.totalorder %s27, 1
      %s630 = scalar_select %p629, %s27, 1
      %s631 = scalar_lea.vmem %s10, %s630
      %p632 = pneg %p310
      %p633 = pneg %p307
      %p634 = scmp.lt.s32.totalorder %s27, 1
      %s635 = scalar_select %p634, %s27, 1
      %s636 = scalar_lea.vmem %s11, %s635
      %p637 = pneg %p336
      %p638 = pneg %p333
      %p639 = scmp.lt.s32.totalorder %s27, 1
      %s640 = scalar_select %p639, %s27, 1
      %s641 = smul.addr %s640, 4
      %s642 = smul.addr %s641, 8
      %s643 = scalar_lea.vmem %s12, %s642
      %p644 = pneg %p362
      %p645 = pneg %p359
      %p646 = scmp.lt.s32.totalorder %s27, 1
      %s647 = scalar_select %p646, %s27, 1
      %s648 = scalar_lea.vmem %s13, %s647
      %p649 = pneg %p388
      %p650 = pneg %p385
      %p651 = pneg %p414
      %p652 = pneg %p411
      %p653 = scmp.lt.s32.totalorder %s27, 1
      %s654 = scalar_select %p653, %s27, 1
      %s655 = smul.addr %s654, 2
      %s656 = smul.addr %s655, 8
      %s657 = scalar_lea.vmem %s14, %s656
      %p658 = pneg %p440
      %p659 = pneg %p437
      %p660 = scmp.lt.s32.totalorder %s27, 1
      %s661 = scalar_select %p660, %s27, 1
      %s662 = smul.addr %s661, 2
      %s663 = smul.addr %s662, 8
      %s664 = scalar_lea.vmem %s15, %s663
      %p665 = scmp.lt.s32.totalorder %s27, 1
      %s666 = scalar_select %p665, %s27, 1
      %s667 = smul.addr %s666, 2
      %s668 = smul.addr %s667, 8
      %s669 = scalar_lea.vmem %s0, %s668
      %s670 = ssub.s32 1, %s27
      %p671 = scmp.lt.s32.totalorder %s670, 1
      %s672 = scalar_select %p671, %s670, 1
      %s673 = smul.addr %s672, 2
      %s674 = smul.addr %s673, 8
      %s675 = scalar_lea.vmem %s1, %s674
      %s676 = ssub.s32 1, %s27
      %p677 = scmp.lt.s32.totalorder %s27, 1
      %s678 = scalar_select %p677, %s27, 1
      %s679 = smul.addr %s678, 4
      %s680 = smul.addr %s679, 8
      %s681 = scalar_lea.vmem %s2, %s680
      %p682 = scmp.lt.s32.totalorder %s27, 1
      %s683 = scalar_select %p682, %s27, 1
      %s684 = scalar_lea.vmem %s3, %s683
      %p685 = scmp.lt.s32.totalorder %s27, 1
      %s686 = scalar_select %p685, %s27, 1
      %s687 = smul.addr %s686, 4
      %s688 = smul.addr %s687, 8
      %s689 = scalar_lea.vmem %s4, %s688
      %p690 = scmp.lt.s32.totalorder %s27, 1
      %s691 = scalar_select %p690, %s27, 1
      %s692 = scalar_lea.vmem %s5, %s691
      %p693 = scmp.lt.s32.totalorder %s27, 1
      %s694 = scalar_select %p693, %s27, 1
      %s695 = smul.addr %s694, 2
      %s696 = smul.addr %s695, 8
      %s697 = scalar_lea.vmem %s6, %s696
      %p698 = scmp.lt.s32.totalorder %s27, 1
      %s699 = scalar_select %p698, %s27, 1
      %s700 = smul.addr %s699, 4
      %s701 = smul.addr %s700, 8
      %s702 = scalar_lea.vmem %s7, %s701
      %p703 = scmp.lt.s32.totalorder %s27, 1
      %s704 = scalar_select %p703, %s27, 1
      %s705 = scalar_lea.vmem %s8, %s704
      %p706 = scmp.lt.s32.totalorder %s27, 1
      %s707 = scalar_select %p706, %s27, 1
      %s708 = scalar_lea.vmem %s9, %s707
      %p709 = scmp.lt.s32.totalorder %s27, 1
      %s710 = scalar_select %p709, %s27, 1
      %s711 = scalar_lea.vmem %s10, %s710
      %p712 = scmp.lt.s32.totalorder %s27, 1
      %s713 = scalar_select %p712, %s27, 1
      %s714 = scalar_lea.vmem %s11, %s713
      %p715 = scmp.lt.s32.totalorder %s27, 1
      %s716 = scalar_select %p715, %s27, 1
      %s717 = smul.addr %s716, 4
      %s718 = smul.addr %s717, 8
      %s719 = scalar_lea.vmem %s12, %s718
      %p720 = scmp.lt.s32.totalorder %s27, 1
      %s721 = scalar_select %p720, %s27, 1
      %s722 = scalar_lea.vmem %s13, %s721
      %p723 = scmp.lt.s32.totalorder %s27, 1
      %s724 = scalar_select %p723, %s27, 1
      %s725 = smul.addr %s724, 2
      %s726 = smul.addr %s725, 8
      %s727 = scalar_lea.vmem %s14, %s726
      %p728 = scmp.lt.s32.totalorder %s27, 1
      %s729 = scalar_select %p728, %s27, 1
      %s730 = smul.addr %s729, 2
      %s731 = smul.addr %s730, 8
      %s732 = scalar_lea.vmem %s15, %s731
      %v733 = vld [vmem:[%s669] sm:$0xff]
      %v734 = vld [vmem:[%s669 + $0x8] sm:$0xff]
      %v735 = vld [vmem:[%s675] sm:$0xff]
      %v736 = vld [vmem:[%s675 + $0x8] sm:$0xff]
      %v737 = vld [vmem:[%s681] sm:$0xff]
      %v738 = vld [vmem:[%s681 + $0x8] sm:$0xff]
      %v739 = vld [vmem:[%s681 + $0x10] sm:$0xff]
      %v740 = vld [vmem:[%s681 + $0x18] sm:$0xff]
      %v741 = vld [vmem:[%s684] sm:$0x1]
      %v743 = vlaneseq
      %v744 = vshrl.u32 %v743, 7
      %v745 = vsub.s32 0, %v744
      %v746 = vrot.slane %v741, %v745
      %vm748 = vcmask 261120
      %v750 = vsel %vm748, %v733, 0
      %v753 = vsel %vm748, %v734, 0
      %755 = vmatprep.subr.mxu0 0.0
      %756 = vmatpush1.msra.mxu0 %v737
      %757 = vmatprep.subr.mxu0 0.0
      %758 = vmatpush1.msra.mxu0 %v738
      %759 = vmatprep.subr.mxu0 0.0
      %760 = vmatpush1.msra.mxu0 %v739
      %761 = vmatprep.subr.mxu0 0.0
      %762 = vmatpush1.msra.mxu0 %v740
      %763 = vmatprep.subr.mxu0 0.0
      %764 = vmatpush1.msra.mxu0 0.0
      %765 = vmatprep.subr.mxu0 0.0
      %766 = vmatpush1.msra.mxu0 0.0
      %767 = vmatprep.subr.mxu0 0.0
      %768 = vmatpush1.msra.mxu0 0.0
      %769 = vmatprep.subr.mxu0 0.0
      %770 = vmatpush1.msra.mxu0 0.0
      %771 = vmatprep.subr.mxu0 0.0
      %772 = vmatpush1.msra.mxu0 0.0
      %773 = vmatprep.subr.mxu0 0.0
      %774 = vmatpush1.msra.mxu0 0.0
      %775 = vmatprep.subr.mxu0 0.0
      %776 = vmatpush1.msra.mxu0 0.0
      %777 = vmatprep.subr.mxu0 0.0
      %778 = vmatpush1.msra.mxu0 0.0
      %779 = vmatprep.subr.mxu0 0.0
      %780 = vmatpush1.msra.mxu0 0.0
      %781 = vmatprep.subr.mxu0 0.0
      %782 = vmatpush1.msra.mxu0 0.0
      %783 = vmatprep.subr.mxu0 0.0
      %784 = vmatpush1.msra.mxu0 0.0
      %785 = vmatprep.subr.mxu0 0.0
      %786 = vmatpush1.msra.mxu0 0.0
      %787 = vmatprep.subr.mxu0 0.0
      %788 = vmatpush1.msra.mxu0 0.0
      %789 = vmatprep.subr.mxu0 0.0
      %790 = vmatpush1.msra.mxu0 0.0
      %791 = vmatprep.subr.mxu0 0.0
      %792 = vmatpush1.msra.mxu0 0.0
      %793 = vmatprep.subr.mxu0 0.0
      %794 = vmatpush1.msra.mxu0 0.0
      %795 = vmatprep.subr.mxu0 0.0
      %796 = vmatpush1.msra.mxu0 0.0
      %797 = vmatprep.subr.mxu0 0.0
      %798 = vmatpush1.msra.mxu0 0.0
      %799 = vmatprep.subr.mxu0 0.0
      %800 = vmatpush1.msra.mxu0 0.0
      %801 = vmatprep.subr.mxu0 0.0
      %802 = vmatpush1.msra.mxu0 0.0
      %803 = vmatprep.subr.mxu0 0.0
      %804 = vmatpush1.msra.mxu0 0.0
      %805 = vmatprep.subr.mxu0 0.0
      %806 = vmatpush1.msra.mxu0 0.0
      %807 = vmatprep.subr.mxu0 0.0
      %808 = vmatpush1.msra.mxu0 0.0
      %809 = vmatprep.subr.mxu0 0.0
      %810 = vmatpush1.msra.mxu0 0.0
      %811 = vmatprep.subr.mxu0 0.0
      %812 = vmatpush1.msra.mxu0 0.0
      %813 = vmatprep.subr.mxu0 0.0
      %814 = vmatpush1.msra.mxu0 0.0
      %815 = vmatprep.subr.mxu0 0.0
      %816 = vmatpush1.msra.mxu0 0.0
      %817 = vmatprep.subr.mxu0 0.0
      %818 = vmatpush1.msra.mxu0 0.0
      %819 = vmatprep.mubr.f32.mxu0 0.0
      %820 = vmatmul.mubr.f32.gmra.mrb[0].mxu0 %v750
      %v821 = vpop.f32.mrb[0].mxu0
      %v822 = vadd.f32 %v746, %v821
      %v823 = vpop.f32.mrb[0].mxu0
      %824 = vmatprep.mubr.f32.mxu0 0.0
      %825 = vmatmul.mubr.f32.gmra.mrb[0].mxu0 %v753
      %v826 = vpop.f32.mrb[0].mxu0
      %v827 = vadd.f32 %v746, %v826
      %v828 = vpop.f32.mrb[0].mxu0
      %829 = vdwg.mxu0
      %v830 = vld [vmem:[%s689] sm:$0xff]
      %v831 = vld [vmem:[%s689 + $0x8] sm:$0xff]
      %v832 = vld [vmem:[%s689 + $0x10] sm:$0xff]
      %v833 = vld [vmem:[%s689 + $0x18] sm:$0xff]
      %v834 = vld [vmem:[%s692] sm:$0x1]
      %v836 = vlaneseq
      %v837 = vshrl.u32 %v836, 7
      %v838 = vsub.s32 0, %v837
      %v839 = vrot.slane %v834, %v838
      %v842 = vsel %vm748, %v735, 0
      %v845 = vsel %vm748, %v736, 0
      %847 = vmatprep.subr.mxu0 0.0
      %848 = vmatpush1.msra.mxu0 %v830
      %849 = vmatprep.subr.mxu0 0.0
      %850 = vmatpush1.msra.mxu0 %v831
      %851 = vmatprep.subr.mxu0 0.0
      %852 = vmatpush1.msra.mxu0 %v832
      %853 = vmatprep.subr.mxu0 0.0
      %854 = vmatpush1.msra.mxu0 %v833
      %855 = vmatprep.subr.mxu0 0.0
      %856 = vmatpush1.msra.mxu0 0.0
      %857 = vmatprep.subr.mxu0 0.0
      %858 = vmatpush1.msra.mxu0 0.0
      %859 = vmatprep.subr.mxu0 0.0
      %860 = vmatpush1.msra.mxu0 0.0
      %861 = vmatprep.subr.mxu0 0.0
      %862 = vmatpush1.msra.mxu0 0.0
      %863 = vmatprep.subr.mxu0 0.0
      %864 = vmatpush1.msra.mxu0 0.0
      %865 = vmatprep.subr.mxu0 0.0
      %866 = vmatpush1.msra.mxu0 0.0
      %867 = vmatprep.subr.mxu0 0.0
      %868 = vmatpush1.msra.mxu0 0.0
      %869 = vmatprep.subr.mxu0 0.0
      %870 = vmatpush1.msra.mxu0 0.0
      %871 = vmatprep.subr.mxu0 0.0
      %872 = vmatpush1.msra.mxu0 0.0
      %873 = vmatprep.subr.mxu0 0.0
      %874 = vmatpush1.msra.mxu0 0.0
      %875 = vmatprep.subr.mxu0 0.0
      %876 = vmatpush1.msra.mxu0 0.0
      %877 = vmatprep.subr.mxu0 0.0
      %878 = vmatpush1.msra.mxu0 0.0
      %879 = vmatprep.subr.mxu0 0.0
      %880 = vmatpush1.msra.mxu0 0.0
      %881 = vmatprep.subr.mxu0 0.0
      %882 = vmatpush1.msra.mxu0 0.0
      %883 = vmatprep.subr.mxu0 0.0
      %884 = vmatpush1.msra.mxu0 0.0
      %885 = vmatprep.subr.mxu0 0.0
      %886 = vmatpush1.msra.mxu0 0.0
      %887 = vmatprep.subr.mxu0 0.0
      %888 = vmatpush1.msra.mxu0 0.0
      %889 = vmatprep.subr.mxu0 0.0
      %890 = vmatpush1.msra.mxu0 0.0
      %891 = vmatprep.subr.mxu0 0.0
      %892 = vmatpush1.msra.mxu0 0.0
      %893 = vmatprep.subr.mxu0 0.0
      %894 = vmatpush1.msra.mxu0 0.0
      %895 = vmatprep.subr.mxu0 0.0
      %896 = vmatpush1.msra.mxu0 0.0
      %897 = vmatprep.subr.mxu0 0.0
      %898 = vmatpush1.msra.mxu0 0.0
      %899 = vmatprep.subr.mxu0 0.0
      %900 = vmatpush1.msra.mxu0 0.0
      %901 = vmatprep.subr.mxu0 0.0
      %902 = vmatpush1.msra.mxu0 0.0
      %903 = vmatprep.subr.mxu0 0.0
      %904 = vmatpush1.msra.mxu0 0.0
      %905 = vmatprep.subr.mxu0 0.0
      %906 = vmatpush1.msra.mxu0 0.0
      %907 = vmatprep.subr.mxu0 0.0
      %908 = vmatpush1.msra.mxu0 0.0
      %909 = vmatprep.subr.mxu0 0.0
      %910 = vmatpush1.msra.mxu0 0.0
      %911 = vmatprep.mubr.f32.mxu0 0.0
      %912 = vmatmul.mubr.f32.gmra.mrb[0].mxu0 %v842
      %v913 = vpop.f32.mrb[0].mxu0
      %v914 = vadd.f32 %v839, %v913
      %v915 = vpop.f32.mrb[0].mxu0
      %916 = vmatprep.mubr.f32.mxu0 0.0
      %917 = vmatmul.mubr.f32.gmra.mrb[0].mxu0 %v845
      %v918 = vpop.f32.mrb[0].mxu0
      %v919 = vadd.f32 %v839, %v918
      %v920 = vpop.f32.mrb[0].mxu0
      %921 = vdwg.mxu0
      %v922 = vld [vmem:[%s697] sm:$0xff]
      %v923 = vld [vmem:[%s697 + $0x8] sm:$0xff]
      %vm924 = vcmask 130048
      %v926 = vsel %vm924, %v822, 0
      %v929 = vsel %vm924, %v827, 0
      %v932 = vsel %vm924, %v914, 0
      %v935 = vsel %vm924, %v919, 0
      %937 = vmatprep.subr.mxu0 0.0
      %938 = vmatpush1.xpose.msra.mxu0 %v932
      %939 = vmatprep.subr.mxu0 0.0
      %940 = vmatpush1.xpose.msra.mxu0 %v935
      %941 = vmatprep.subr.mxu0 0.0
      %942 = vmatpush1.xpose.msra.mxu0 0.0
      %943 = vmatprep.subr.mxu0 0.0
      %944 = vmatpush1.xpose.msra.mxu0 0.0
      %945 = vmatprep.subr.mxu0 0.0
      %946 = vmatpush1.xpose.msra.mxu0 0.0
      %947 = vmatprep.subr.mxu0 0.0
      %948 = vmatpush1.xpose.msra.mxu0 0.0
      %949 = vmatprep.subr.mxu0 0.0
      %950 = vmatpush1.xpose.msra.mxu0 0.0
      %951 = vmatprep.subr.mxu0 0.0
      %952 = vmatpush1.xpose.msra.mxu0 0.0
      %953 = vmatprep.subr.mxu0 0.0
      %954 = vmatpush1.xpose.msra.mxu0 0.0
      %955 = vmatprep.subr.mxu0 0.0
      %956 = vmatpush1.xpose.msra.mxu0 0.0
      %957 = vmatprep.subr.mxu0 0.0
      %958 = vmatpush1.xpose.msra.mxu0 0.0
      %959 = vmatprep.subr.mxu0 0.0
      %960 = vmatpush1.xpose.msra.mxu0 0.0
      %961 = vmatprep.subr.mxu0 0.0
      %962 = vmatpush1.xpose.msra.mxu0 0.0
      %963 = vmatprep.subr.mxu0 0.0
      %964 = vmatpush1.xpose.msra.mxu0 0.0
      %965 = vmatprep.subr.mxu0 0.0
      %966 = vmatpush1.xpose.msra.mxu0 0.0
      %967 = vmatprep.subr.mxu0 0.0
      %968 = vmatpush1.xpose.msra.mxu0 0.0
      %969 = vmatprep.subr.mxu0 0.0
      %970 = vmatpush1.xpose.msra.mxu0 0.0
      %971 = vmatprep.subr.mxu0 0.0
      %972 = vmatpush1.xpose.msra.mxu0 0.0
      %973 = vmatprep.subr.mxu0 0.0
      %974 = vmatpush1.xpose.msra.mxu0 0.0
      %975 = vmatprep.subr.mxu0 0.0
      %976 = vmatpush1.xpose.msra.mxu0 0.0
      %977 = vmatprep.subr.mxu0 0.0
      %978 = vmatpush1.xpose.msra.mxu0 0.0
      %979 = vmatprep.subr.mxu0 0.0
      %980 = vmatpush1.xpose.msra.mxu0 0.0
      %981 = vmatprep.subr.mxu0 0.0
      %982 = vmatpush1.xpose.msra.mxu0 0.0
      %983 = vmatprep.subr.mxu0 0.0
      %984 = vmatpush1.xpose.msra.mxu0 0.0
      %985 = vmatprep.subr.mxu0 0.0
      %986 = vmatpush1.xpose.msra.mxu0 0.0
      %987 = vmatprep.subr.mxu0 0.0
      %988 = vmatpush1.xpose.msra.mxu0 0.0
      %989 = vmatprep.subr.mxu0 0.0
      %990 = vmatpush1.xpose.msra.mxu0 0.0
      %991 = vmatprep.subr.mxu0 0.0
      %992 = vmatpush1.xpose.msra.mxu0 0.0
      %993 = vmatprep.subr.mxu0 0.0
      %994 = vmatpush1.xpose.msra.mxu0 0.0
      %995 = vmatprep.subr.mxu0 0.0
      %996 = vmatpush1.xpose.msra.mxu0 0.0
      %997 = vmatprep.subr.mxu0 0.0
      %998 = vmatpush1.xpose.msra.mxu0 0.0
      %999 = vmatprep.subr.mxu0 0.0
      %1000 = vmatpush1.xpose.msra.mxu0 0.0
      %1001 = vmatprep.mubr.f32.mxu0 0.0
      %1002 = vmatmul.mubr.f32.gmra.mrb[0].mxu0 %v926
      %v1003 = vpop.f32.mrb[0].mxu0
      %v1004 = vadd.f32 0.0, %v1003
      %v1005 = vpop.f32.mrb[0].mxu0
      %1006 = vmatprep.mubr.f32.mxu0 0.0
      %1007 = vmatmul.mubr.f32.gmra.mrb[0].mxu0 %v929
      %v1008 = vpop.f32.mrb[0].mxu0
      %v1009 = vadd.f32 0.0, %v1008
      %v1010 = vpop.f32.mrb[0].mxu0
      %1011 = vdwg.mxu0
      %v1012 = vmul.f32 %v1004, 0.25
      %v1013 = vmul.f32 %v1009, 0.25
      %vm1014 = vcmp.gt.f32.partialorder %v922, 0.0
      %vm1015 = vcmp.gt.f32.partialorder %v923, 0.0
      %v1016 = vsel %vm1014, %v1012, -1e+30
      %v1017 = vsel %vm1015, %v1013, -1e+30
      %v1018 = vsel %vm924, %v1016, -inf
      %1019 = vmax.xlane.f32.xlu0 %v1018
      %v1020 = vpop.xlane.xlu0 %1019
      %v1021 = vsel %vm924, %v1017, -inf
      %1022 = vmax.xlane.f32.xlu0 %v1021
      %v1023 = vpop.xlane.xlu0 %1022
      %v1024 = vsub.f32 %v1016, %v1020
      %v1025 = vsub.f32 %v1017, %v1023
      %v1026 = vmul.f32 %v1024, 1.442695
      %v1027 = vpow.pop %v1026
      %v1028 = vmul.f32 %v1025, 1.442695
      %v1029 = vpow.pop %v1028
      %v1030 = vmul.f32 %v1027, %v922
      %v1031 = vmul.f32 %v1029, %v923
      %v1032 = vsel %vm924, %v1030, 0.0
      %1033 = vadd.xlane.f32.xlu0 %v1032
      %v1034 = vpop.xlane.xlu0 %1033
      %v1035 = vsel %vm924, %v1031, 0.0
      %1036 = vadd.xlane.f32.xlu0 %v1035
      %v1037 = vpop.xlane.xlu0 %1036
      %v1038 = vadd.f32 %v1034, 1e-16
      %v1039 = vadd.f32 %v1037, 1e-16
      %v1040 = vrcp.pop %v1038
      %v1041 = vmul.f32 %v1030, %v1040
      %v1042 = vrcp.pop %v1039
      %v1043 = vmul.f32 %v1031, %v1042
      %1044 = vrot.lane.b32.xlu0 %v914, 96
      %v1045 = vpop.permute.xlu0 %1044
      %1046 = vrot.lane.b32.xlu0 %v919, 96
      %v1047 = vpop.permute.xlu0 %1046
      %v1051 = vsel %vm924, %v1041, 0
      %v1054 = vsel %vm924, %v1043, 0
      %1056 = vmatprep.subr.mxu0 0.0
      %1057 = vmatpush1.msra.mxu0 %v1045
      %1058 = vmatprep.subr.mxu0 0.0
      %1059 = vmatpush1.msra.mxu0 %v1047
      %1060 = vmatprep.subr.mxu0 0.0
      %1061 = vmatpush1.msra.mxu0 0.0
      %1062 = vmatprep.subr.mxu0 0.0
      %1063 = vmatpush1.msra.mxu0 0.0
      %1064 = vmatprep.subr.mxu0 0.0
      %1065 = vmatpush1.msra.mxu0 0.0
      %1066 = vmatprep.subr.mxu0 0.0
      %1067 = vmatpush1.msra.mxu0 0.0
      %1068 = vmatprep.subr.mxu0 0.0
      %1069 = vmatpush1.msra.mxu0 0.0
      %1070 = vmatprep.subr.mxu0 0.0
      %1071 = vmatpush1.msra.mxu0 0.0
      %1072 = vmatprep.subr.mxu0 0.0
      %1073 = vmatpush1.msra.mxu0 0.0
      %1074 = vmatprep.subr.mxu0 0.0
      %1075 = vmatpush1.msra.mxu0 0.0
      %1076 = vmatprep.subr.mxu0 0.0
      %1077 = vmatpush1.msra.mxu0 0.0
      %1078 = vmatprep.subr.mxu0 0.0
      %1079 = vmatpush1.msra.mxu0 0.0
      %1080 = vmatprep.subr.mxu0 0.0
      %1081 = vmatpush1.msra.mxu0 0.0
      %1082 = vmatprep.subr.mxu0 0.0
      %1083 = vmatpush1.msra.mxu0 0.0
      %1084 = vmatprep.subr.mxu0 0.0
      %1085 = vmatpush1.msra.mxu0 0.0
      %1086 = vmatprep.subr.mxu0 0.0
      %1087 = vmatpush1.msra.mxu0 0.0
      %1088 = vmatprep.subr.mxu0 0.0
      %1089 = vmatpush1.msra.mxu0 0.0
      %1090 = vmatprep.subr.mxu0 0.0
      %1091 = vmatpush1.msra.mxu0 0.0
      %1092 = vmatprep.subr.mxu0 0.0
      %1093 = vmatpush1.msra.mxu0 0.0
      %1094 = vmatprep.subr.mxu0 0.0
      %1095 = vmatpush1.msra.mxu0 0.0
      %1096 = vmatprep.subr.mxu0 0.0
      %1097 = vmatpush1.msra.mxu0 0.0
      %1098 = vmatprep.subr.mxu0 0.0
      %1099 = vmatpush1.msra.mxu0 0.0
      %1100 = vmatprep.subr.mxu0 0.0
      %1101 = vmatpush1.msra.mxu0 0.0
      %1102 = vmatprep.subr.mxu0 0.0
      %1103 = vmatpush1.msra.mxu0 0.0
      %1104 = vmatprep.subr.mxu0 0.0
      %1105 = vmatpush1.msra.mxu0 0.0
      %1106 = vmatprep.subr.mxu0 0.0
      %1107 = vmatpush1.msra.mxu0 0.0
      %1108 = vmatprep.subr.mxu0 0.0
      %1109 = vmatpush1.msra.mxu0 0.0
      %1110 = vmatprep.subr.mxu0 0.0
      %1111 = vmatpush1.msra.mxu0 0.0
      %1112 = vmatprep.subr.mxu0 0.0
      %1113 = vmatpush1.msra.mxu0 0.0
      %1114 = vmatprep.subr.mxu0 0.0
      %1115 = vmatpush1.msra.mxu0 0.0
      %1116 = vmatprep.subr.mxu0 0.0
      %1117 = vmatpush1.msra.mxu0 0.0
      %1118 = vmatprep.subr.mxu0 0.0
      %1119 = vmatpush1.msra.mxu0 0.0
      %1120 = vmatprep.mubr.f32.mxu0 0.0
      %1121 = vmatmul.mubr.f32.gmra.mrb[0].mxu0 %v1051
      %v1122 = vpop.f32.mrb[0].mxu0
      %v1123 = vadd.f32 0.0, %v1122
      %v1124 = vpop.f32.mrb[0].mxu0
      %1125 = vmatprep.mubr.f32.mxu0 0.0
      %1126 = vmatmul.mubr.f32.gmra.mrb[0].mxu0 %v1054
      %v1127 = vpop.f32.mrb[0].mxu0
      %v1128 = vadd.f32 0.0, %v1127
      %v1129 = vpop.f32.mrb[0].mxu0
      %1130 = vdwg.mxu0
      %1131 = vrot.lane.b32.xlu0 %v822, 112
      %v1132 = vpop.permute.xlu0 %1131
      %1133 = vrot.lane.b32.xlu0 %v827, 112
      %v1134 = vpop.permute.xlu0 %1133
      %1135 = vrot.lane.b32.xlu0 %v914, 112
      %v1136 = vpop.permute.xlu0 %1135
      %1137 = vrot.lane.b32.xlu0 %v919, 112
      %v1138 = vpop.permute.xlu0 %1137
      %v1139 = vsel %vm924, %v1132, 0
      %v1141 = vsel %vm924, %v1134, 0
      %v1143 = vsel %vm924, %v1136, 0
      %v1145 = vsel %vm924, %v1138, 0
      %1147 = vmatprep.subr.mxu0 0.0
      %1148 = vmatpush1.xpose.msra.mxu0 %v1143
      %1149 = vmatprep.subr.mxu0 0.0
      %1150 = vmatpush1.xpose.msra.mxu0 %v1145
      %1151 = vmatprep.subr.mxu0 0.0
      %1152 = vmatpush1.xpose.msra.mxu0 0.0
      %1153 = vmatprep.subr.mxu0 0.0
      %1154 = vmatpush1.xpose.msra.mxu0 0.0
      %1155 = vmatprep.subr.mxu0 0.0
      %1156 = vmatpush1.xpose.msra.mxu0 0.0
      %1157 = vmatprep.subr.mxu0 0.0
      %1158 = vmatpush1.xpose.msra.mxu0 0.0
      %1159 = vmatprep.subr.mxu0 0.0
      %1160 = vmatpush1.xpose.msra.mxu0 0.0
      %1161 = vmatprep.subr.mxu0 0.0
      %1162 = vmatpush1.xpose.msra.mxu0 0.0
      %1163 = vmatprep.subr.mxu0 0.0
      %1164 = vmatpush1.xpose.msra.mxu0 0.0
      %1165 = vmatprep.subr.mxu0 0.0
      %1166 = vmatpush1.xpose.msra.mxu0 0.0
      %1167 = vmatprep.subr.mxu0 0.0
      %1168 = vmatpush1.xpose.msra.mxu0 0.0
      %1169 = vmatprep.subr.mxu0 0.0
      %1170 = vmatpush1.xpose.msra.mxu0 0.0
      %1171 = vmatprep.subr.mxu0 0.0
      %1172 = vmatpush1.xpose.msra.mxu0 0.0
      %1173 = vmatprep.subr.mxu0 0.0
      %1174 = vmatpush1.xpose.msra.mxu0 0.0
      %1175 = vmatprep.subr.mxu0 0.0
      %1176 = vmatpush1.xpose.msra.mxu0 0.0
      %1177 = vmatprep.subr.mxu0 0.0
      %1178 = vmatpush1.xpose.msra.mxu0 0.0
      %1179 = vmatprep.subr.mxu0 0.0
      %1180 = vmatpush1.xpose.msra.mxu0 0.0
      %1181 = vmatprep.subr.mxu0 0.0
      %1182 = vmatpush1.xpose.msra.mxu0 0.0
      %1183 = vmatprep.subr.mxu0 0.0
      %1184 = vmatpush1.xpose.msra.mxu0 0.0
      %1185 = vmatprep.subr.mxu0 0.0
      %1186 = vmatpush1.xpose.msra.mxu0 0.0
      %1187 = vmatprep.subr.mxu0 0.0
      %1188 = vmatpush1.xpose.msra.mxu0 0.0
      %1189 = vmatprep.subr.mxu0 0.0
      %1190 = vmatpush1.xpose.msra.mxu0 0.0
      %1191 = vmatprep.subr.mxu0 0.0
      %1192 = vmatpush1.xpose.msra.mxu0 0.0
      %1193 = vmatprep.subr.mxu0 0.0
      %1194 = vmatpush1.xpose.msra.mxu0 0.0
      %1195 = vmatprep.subr.mxu0 0.0
      %1196 = vmatpush1.xpose.msra.mxu0 0.0
      %1197 = vmatprep.subr.mxu0 0.0
      %1198 = vmatpush1.xpose.msra.mxu0 0.0
      %1199 = vmatprep.subr.mxu0 0.0
      %1200 = vmatpush1.xpose.msra.mxu0 0.0
      %1201 = vmatprep.subr.mxu0 0.0
      %1202 = vmatpush1.xpose.msra.mxu0 0.0
      %1203 = vmatprep.subr.mxu0 0.0
      %1204 = vmatpush1.xpose.msra.mxu0 0.0
      %1205 = vmatprep.subr.mxu0 0.0
      %1206 = vmatpush1.xpose.msra.mxu0 0.0
      %1207 = vmatprep.subr.mxu0 0.0
      %1208 = vmatpush1.xpose.msra.mxu0 0.0
      %1209 = vmatprep.subr.mxu0 0.0
      %1210 = vmatpush1.xpose.msra.mxu0 0.0
      %1211 = vmatprep.mubr.f32.mxu0 0.0
      %1212 = vmatmul.mubr.f32.gmra.mrb[0].mxu0 %v1139
      %v1213 = vpop.f32.mrb[0].mxu0
      %v1214 = vadd.f32 0.0, %v1213
      %v1215 = vpop.f32.mrb[0].mxu0
      %1216 = vmatprep.mubr.f32.mxu0 0.0
      %1217 = vmatmul.mubr.f32.gmra.mrb[0].mxu0 %v1141
      %v1218 = vpop.f32.mrb[0].mxu0
      %v1219 = vadd.f32 0.0, %v1218
      %v1220 = vpop.f32.mrb[0].mxu0
      %1221 = vdwg.mxu0
      %v1222 = vmul.f32 %v1214, 0.25
      %v1223 = vmul.f32 %v1219, 0.25
      %v1224 = vsel %vm1014, %v1222, -1e+30
      %v1225 = vsel %vm1015, %v1223, -1e+30
      %v1226 = vsel %vm924, %v1224, -inf
      %1227 = vmax.xlane.f32.xlu0 %v1226
      %v1228 = vpop.xlane.xlu0 %1227
      %v1229 = vsel %vm924, %v1225, -inf
      %1230 = vmax.xlane.f32.xlu0 %v1229
      %v1231 = vpop.xlane.xlu0 %1230
      %v1232 = vsub.f32 %v1224, %v1228
      %v1233 = vsub.f32 %v1225, %v1231
      %v1234 = vmul.f32 %v1232, 1.442695
      %v1235 = vpow.pop %v1234
      %v1236 = vmul.f32 %v1233, 1.442695
      %v1237 = vpow.pop %v1236
      %v1238 = vmul.f32 %v1235, %v922
      %v1239 = vmul.f32 %v1237, %v923
      %v1240 = vsel %vm924, %v1238, 0.0
      %1241 = vadd.xlane.f32.xlu0 %v1240
      %v1242 = vpop.xlane.xlu0 %1241
      %v1243 = vsel %vm924, %v1239, 0.0
      %1244 = vadd.xlane.f32.xlu0 %v1243
      %v1245 = vpop.xlane.xlu0 %1244
      %v1246 = vadd.f32 %v1242, 1e-16
      %v1247 = vadd.f32 %v1245, 1e-16
      %v1248 = vrcp.pop %v1246
      %v1249 = vmul.f32 %v1238, %v1248
      %v1250 = vrcp.pop %v1247
      %v1251 = vmul.f32 %v1239, %v1250
      %1252 = vrot.lane.b32.xlu0 %v914, 80
      %v1253 = vpop.permute.xlu0 %1252
      %1254 = vrot.lane.b32.xlu0 %v919, 80
      %v1255 = vpop.permute.xlu0 %1254
      %v1259 = vsel %vm924, %v1249, 0
      %v1262 = vsel %vm924, %v1251, 0
      %1264 = vmatprep.subr.mxu0 0.0
      %1265 = vmatpush1.msra.mxu0 %v1253
      %1266 = vmatprep.subr.mxu0 0.0
      %1267 = vmatpush1.msra.mxu0 %v1255
      %1268 = vmatprep.subr.mxu0 0.0
      %1269 = vmatpush1.msra.mxu0 0.0
      %1270 = vmatprep.subr.mxu0 0.0
      %1271 = vmatpush1.msra.mxu0 0.0
      %1272 = vmatprep.subr.mxu0 0.0
      %1273 = vmatpush1.msra.mxu0 0.0
      %1274 = vmatprep.subr.mxu0 0.0
      %1275 = vmatpush1.msra.mxu0 0.0
      %1276 = vmatprep.subr.mxu0 0.0
      %1277 = vmatpush1.msra.mxu0 0.0
      %1278 = vmatprep.subr.mxu0 0.0
      %1279 = vmatpush1.msra.mxu0 0.0
      %1280 = vmatprep.subr.mxu0 0.0
      %1281 = vmatpush1.msra.mxu0 0.0
      %1282 = vmatprep.subr.mxu0 0.0
      %1283 = vmatpush1.msra.mxu0 0.0
      %1284 = vmatprep.subr.mxu0 0.0
      %1285 = vmatpush1.msra.mxu0 0.0
      %1286 = vmatprep.subr.mxu0 0.0
      %1287 = vmatpush1.msra.mxu0 0.0
      %1288 = vmatprep.subr.mxu0 0.0
      %1289 = vmatpush1.msra.mxu0 0.0
      %1290 = vmatprep.subr.mxu0 0.0
      %1291 = vmatpush1.msra.mxu0 0.0
      %1292 = vmatprep.subr.mxu0 0.0
      %1293 = vmatpush1.msra.mxu0 0.0
      %1294 = vmatprep.subr.mxu0 0.0
      %1295 = vmatpush1.msra.mxu0 0.0
      %1296 = vmatprep.subr.mxu0 0.0
      %1297 = vmatpush1.msra.mxu0 0.0
      %1298 = vmatprep.subr.mxu0 0.0
      %1299 = vmatpush1.msra.mxu0 0.0
      %1300 = vmatprep.subr.mxu0 0.0
      %1301 = vmatpush1.msra.mxu0 0.0
      %1302 = vmatprep.subr.mxu0 0.0
      %1303 = vmatpush1.msra.mxu0 0.0
      %1304 = vmatprep.subr.mxu0 0.0
      %1305 = vmatpush1.msra.mxu0 0.0
      %1306 = vmatprep.subr.mxu0 0.0
      %1307 = vmatpush1.msra.mxu0 0.0
      %1308 = vmatprep.subr.mxu0 0.0
      %1309 = vmatpush1.msra.mxu0 0.0
      %1310 = vmatprep.subr.mxu0 0.0
      %1311 = vmatpush1.msra.mxu0 0.0
      %1312 = vmatprep.subr.mxu0 0.0
      %1313 = vmatpush1.msra.mxu0 0.0
      %1314 = vmatprep.subr.mxu0 0.0
      %1315 = vmatpush1.msra.mxu0 0.0
      %1316 = vmatprep.subr.mxu0 0.0
      %1317 = vmatpush1.msra.mxu0 0.0
      %1318 = vmatprep.subr.mxu0 0.0
      %1319 = vmatpush1.msra.mxu0 0.0
      %1320 = vmatprep.subr.mxu0 0.0
      %1321 = vmatpush1.msra.mxu0 0.0
      %1322 = vmatprep.subr.mxu0 0.0
      %1323 = vmatpush1.msra.mxu0 0.0
      %1324 = vmatprep.subr.mxu0 0.0
      %1325 = vmatpush1.msra.mxu0 0.0
      %1326 = vmatprep.subr.mxu0 0.0
      %1327 = vmatpush1.msra.mxu0 0.0
      %1328 = vmatprep.mubr.f32.mxu0 0.0
      %1329 = vmatmul.mubr.f32.gmra.mrb[0].mxu0 %v1259
      %v1330 = vpop.f32.mrb[0].mxu0
      %v1331 = vadd.f32 0.0, %v1330
      %v1332 = vpop.f32.mrb[0].mxu0
      %1333 = vmatprep.mubr.f32.mxu0 0.0
      %1334 = vmatmul.mubr.f32.gmra.mrb[0].mxu0 %v1262
      %v1335 = vpop.f32.mrb[0].mxu0
      %v1336 = vadd.f32 0.0, %v1335
      %v1337 = vpop.f32.mrb[0].mxu0
      %1338 = vdwg.mxu0
      %1341 = vrot.lane.b32.xlu0 %v1331, 16
      %v1342 = vpop.permute.xlu0 %1341
      %1343 = vrot.lane.b32.xlu0 %v1336, 16
      %v1344 = vpop.permute.xlu0 %1343
      %v1347 = vsel %vm924, %v1123, %v1342
      %v1348 = vsel %vm924, %v1128, %v1344
      %v1349 = vmul.f32 %v1347, 0.5
      %v1350 = vmul.f32 %v1348, 0.5
      %v1351 = vmul.f32 %v1347, 0.044715
      %v1352 = vmul.f32 %v1348, 0.044715
      %v1353 = vmul.f32 %v1351, %v1347
      %v1354 = vmul.f32 %v1352, %v1348
      %v1355 = vmul.f32 %v1353, %v1347
      %v1356 = vmul.f32 %v1354, %v1348
      %v1357 = vadd.f32 %v1347, %v1355
      %v1358 = vadd.f32 %v1348, %v1356
      %v1359 = vmul.f32 %v1357, 0.7978846
      %v1360 = vmul.f32 %v1358, 0.7978846
      %v1361 = vtanh.pop %v1359
      %v1362 = vtanh.pop %v1360
      %v1363 = vadd.f32 %v1361, 1.0
      %v1364 = vadd.f32 %v1362, 1.0
      %v1365 = vmul.f32 %v1349, %v1363
      %v1366 = vmul.f32 %v1350, %v1364
      %v1367 = vld [vmem:[%s702] sm:$0xff]
      %v1368 = vld [vmem:[%s702 + $0x8] sm:$0xff]
      %v1369 = vld [vmem:[%s702 + $0x10] sm:$0xff]
      %v1370 = vld [vmem:[%s702 + $0x18] sm:$0xff]
      %v1371 = vld [vmem:[%s705] sm:$0x1]
      %v1373 = vlaneseq
      %v1374 = vshrl.u32 %v1373, 7
      %v1375 = vsub.s32 0, %v1374
      %v1376 = vrot.slane %v1371, %v1375
      %v1379 = vsel %vm748, %v1365, 0
      %v1382 = vsel %vm748, %v1366, 0
      %1384 = vmatprep.subr.mxu0 0.0
      %1385 = vmatpush1.msra.mxu0 %v1367
      %1386 = vmatprep.subr.mxu0 0.0
      %1387 = vmatpush1.msra.mxu0 %v1368
      %1388 = vmatprep.subr.mxu0 0.0
      %1389 = vmatpush1.msra.mxu0 %v1369
      %1390 = vmatprep.subr.mxu0 0.0
      %1391 = vmatpush1.msra.mxu0 %v1370
      %1392 = vmatprep.subr.mxu0 0.0
      %1393 = vmatpush1.msra.mxu0 0.0
      %1394 = vmatprep.subr.mxu0 0.0
      %1395 = vmatpush1.msra.mxu0 0.0
      %1396 = vmatprep.subr.mxu0 0.0
      %1397 = vmatpush1.msra.mxu0 0.0
      %1398 = vmatprep.subr.mxu0 0.0
      %1399 = vmatpush1.msra.mxu0 0.0
      %1400 = vmatprep.subr.mxu0 0.0
      %1401 = vmatpush1.msra.mxu0 0.0
      %1402 = vmatprep.subr.mxu0 0.0
      %1403 = vmatpush1.msra.mxu0 0.0
      %1404 = vmatprep.subr.mxu0 0.0
      %1405 = vmatpush1.msra.mxu0 0.0
      %1406 = vmatprep.subr.mxu0 0.0
      %1407 = vmatpush1.msra.mxu0 0.0
      %1408 = vmatprep.subr.mxu0 0.0
      %1409 = vmatpush1.msra.mxu0 0.0
      %1410 = vmatprep.subr.mxu0 0.0
      %1411 = vmatpush1.msra.mxu0 0.0
      %1412 = vmatprep.subr.mxu0 0.0
      %1413 = vmatpush1.msra.mxu0 0.0
      %1414 = vmatprep.subr.mxu0 0.0
      %1415 = vmatpush1.msra.mxu0 0.0
      %1416 = vmatprep.subr.mxu0 0.0
      %1417 = vmatpush1.msra.mxu0 0.0
      %1418 = vmatprep.subr.mxu0 0.0
      %1419 = vmatpush1.msra.mxu0 0.0
      %1420 = vmatprep.subr.mxu0 0.0
      %1421 = vmatpush1.msra.mxu0 0.0
      %1422 = vmatprep.subr.mxu0 0.0
      %1423 = vmatpush1.msra.mxu0 0.0
      %1424 = vmatprep.subr.mxu0 0.0
      %1425 = vmatpush1.msra.mxu0 0.0
      %1426 = vmatprep.subr.mxu0 0.0
      %1427 = vmatpush1.msra.mxu0 0.0
      %1428 = vmatprep.subr.mxu0 0.0
      %1429 = vmatpush1.msra.mxu0 0.0
      %1430 = vmatprep.subr.mxu0 0.0
      %1431 = vmatpush1.msra.mxu0 0.0
      %1432 = vmatprep.subr.mxu0 0.0
      %1433 = vmatpush1.msra.mxu0 0.0
      %1434 = vmatprep.subr.mxu0 0.0
      %1435 = vmatpush1.msra.mxu0 0.0
      %1436 = vmatprep.subr.mxu0 0.0
      %1437 = vmatpush1.msra.mxu0 0.0
      %1438 = vmatprep.subr.mxu0 0.0
      %1439 = vmatpush1.msra.mxu0 0.0
      %1440 = vmatprep.subr.mxu0 0.0
      %1441 = vmatpush1.msra.mxu0 0.0
      %1442 = vmatprep.subr.mxu0 0.0
      %1443 = vmatpush1.msra.mxu0 0.0
      %1444 = vmatprep.subr.mxu0 0.0
      %1445 = vmatpush1.msra.mxu0 0.0
      %1446 = vmatprep.subr.mxu0 0.0
      %1447 = vmatpush1.msra.mxu0 0.0
      %1448 = vmatprep.mubr.f32.mxu0 0.0
      %1449 = vmatmul.mubr.f32.gmra.mrb[0].mxu0 %v1379
      %v1450 = vpop.f32.mrb[0].mxu0
      %v1451 = vadd.f32 %v1376, %v1450
      %v1452 = vpop.f32.mrb[0].mxu0
      %1453 = vmatprep.mubr.f32.mxu0 0.0
      %1454 = vmatmul.mubr.f32.gmra.mrb[0].mxu0 %v1382
      %v1455 = vpop.f32.mrb[0].mxu0
      %v1456 = vadd.f32 %v1376, %v1455
      %v1457 = vpop.f32.mrb[0].mxu0
      %1458 = vdwg.mxu0
      %v1459 = vld [vmem:[%s708] sm:$0x1]
      %v1461 = vlaneseq
      %v1462 = vshrl.u32 %v1461, 7
      %v1463 = vsub.s32 0, %v1462
      %v1464 = vrot.slane %v1459, %v1463
      %v1466 = vmul.f32 %v1464, %v1451
      %v1467 = vmul.f32 %v1464, %v1456
      %v1468 = vsub.f32 1.0, %v1459
      %v1470 = vlaneseq
      %v1471 = vshrl.u32 %v1470, 7
      %v1472 = vsub.s32 0, %v1471
      %v1473 = vrot.slane %v1468, %v1472
      %v1475 = vmul.f32 %v1473, %v733
      %v1476 = vmul.f32 %v1473, %v734
      %v1477 = vadd.f32 %v1466, %v1475
      %v1478 = vadd.f32 %v1467, %v1476
      %v1479 = vmul.f32 %v1477, 0.5
      %v1480 = vmul.f32 %v1478, 0.5
      %v1481 = vmul.f32 %v1477, 0.044715
      %v1482 = vmul.f32 %v1478, 0.044715
      %v1483 = vmul.f32 %v1481, %v1477
      %v1484 = vmul.f32 %v1482, %v1478
      %v1485 = vmul.f32 %v1483, %v1477
      %v1486 = vmul.f32 %v1484, %v1478
      %v1487 = vadd.f32 %v1477, %v1485
      %v1488 = vadd.f32 %v1478, %v1486
      %v1489 = vmul.f32 %v1487, 0.7978846
      %v1490 = vmul.f32 %v1488, 0.7978846
      %v1491 = vtanh.pop %v1489
      %v1492 = vtanh.pop %v1490
      %v1493 = vadd.f32 %v1491, 1.0
      %v1494 = vadd.f32 %v1492, 1.0
      %v1495 = vmul.f32 %v1479, %v1493
      %v1496 = vmul.f32 %v1480, %v1494
      %1497 = vst.msk [vmem:[%s727] sm:$0xff] %vm748, %v1495
      %1498 = vst.msk [vmem:[%s727 + $0x8] sm:$0xff] %vm748, %v1496
      %v1499 = vld [vmem:[%s719] sm:$0xff]
      %v1500 = vld [vmem:[%s719 + $0x8] sm:$0xff]
      %v1501 = vld [vmem:[%s719 + $0x10] sm:$0xff]
      %v1502 = vld [vmem:[%s719 + $0x18] sm:$0xff]
      %v1503 = vld [vmem:[%s722] sm:$0x1]
      %v1505 = vlaneseq
      %v1506 = vshrl.u32 %v1505, 7
      %v1507 = vsub.s32 0, %v1506
      %v1508 = vrot.slane %v1503, %v1507
      %v1511 = vsel %vm748, %v1495, 0
      %v1514 = vsel %vm748, %v1496, 0
      %1516 = vmatprep.subr.mxu0 0.0
      %1517 = vmatpush1.msra.mxu0 %v1499
      %1518 = vmatprep.subr.mxu0 0.0
      %1519 = vmatpush1.msra.mxu0 %v1500
      %1520 = vmatprep.subr.mxu0 0.0
      %1521 = vmatpush1.msra.mxu0 %v1501
      %1522 = vmatprep.subr.mxu0 0.0
      %1523 = vmatpush1.msra.mxu0 %v1502
      %1524 = vmatprep.subr.mxu0 0.0
      %1525 = vmatpush1.msra.mxu0 0.0
      %1526 = vmatprep.subr.mxu0 0.0
      %1527 = vmatpush1.msra.mxu0 0.0
      %1528 = vmatprep.subr.mxu0 0.0
      %1529 = vmatpush1.msra.mxu0 0.0
      %1530 = vmatprep.subr.mxu0 0.0
      %1531 = vmatpush1.msra.mxu0 0.0
      %1532 = vmatprep.subr.mxu0 0.0
      %1533 = vmatpush1.msra.mxu0 0.0
      %1534 = vmatprep.subr.mxu0 0.0
      %1535 = vmatpush1.msra.mxu0 0.0
      %1536 = vmatprep.subr.mxu0 0.0
      %1537 = vmatpush1.msra.mxu0 0.0
      %1538 = vmatprep.subr.mxu0 0.0
      %1539 = vmatpush1.msra.mxu0 0.0
      %1540 = vmatprep.subr.mxu0 0.0
      %1541 = vmatpush1.msra.mxu0 0.0
      %1542 = vmatprep.subr.mxu0 0.0
      %1543 = vmatpush1.msra.mxu0 0.0
      %1544 = vmatprep.subr.mxu0 0.0
      %1545 = vmatpush1.msra.mxu0 0.0
      %1546 = vmatprep.subr.mxu0 0.0
      %1547 = vmatpush1.msra.mxu0 0.0
      %1548 = vmatprep.subr.mxu0 0.0
      %1549 = vmatpush1.msra.mxu0 0.0
      %1550 = vmatprep.subr.mxu0 0.0
      %1551 = vmatpush1.msra.mxu0 0.0
      %1552 = vmatprep.subr.mxu0 0.0
      %1553 = vmatpush1.msra.mxu0 0.0
      %1554 = vmatprep.subr.mxu0 0.0
      %1555 = vmatpush1.msra.mxu0 0.0
      %1556 = vmatprep.subr.mxu0 0.0
      %1557 = vmatpush1.msra.mxu0 0.0
      %1558 = vmatprep.subr.mxu0 0.0
      %1559 = vmatpush1.msra.mxu0 0.0
      %1560 = vmatprep.subr.mxu0 0.0
      %1561 = vmatpush1.msra.mxu0 0.0
      %1562 = vmatprep.subr.mxu0 0.0
      %1563 = vmatpush1.msra.mxu0 0.0
      %1564 = vmatprep.subr.mxu0 0.0
      %1565 = vmatpush1.msra.mxu0 0.0
      %1566 = vmatprep.subr.mxu0 0.0
      %1567 = vmatpush1.msra.mxu0 0.0
      %1568 = vmatprep.subr.mxu0 0.0
      %1569 = vmatpush1.msra.mxu0 0.0
      %1570 = vmatprep.subr.mxu0 0.0
      %1571 = vmatpush1.msra.mxu0 0.0
      %1572 = vmatprep.subr.mxu0 0.0
      %1573 = vmatpush1.msra.mxu0 0.0
      %1574 = vmatprep.subr.mxu0 0.0
      %1575 = vmatpush1.msra.mxu0 0.0
      %1576 = vmatprep.subr.mxu0 0.0
      %1577 = vmatpush1.msra.mxu0 0.0
      %1578 = vmatprep.subr.mxu0 0.0
      %1579 = vmatpush1.msra.mxu0 0.0
      %1580 = vmatprep.mubr.f32.mxu0 0.0
      %1581 = vmatmul.mubr.f32.gmra.mrb[0].mxu0 %v1511
      %v1582 = vpop.f32.mrb[0].mxu0
      %v1583 = vadd.f32 %v1508, %v1582
      %v1584 = vpop.f32.mrb[0].mxu0
      %1585 = vmatprep.mubr.f32.mxu0 0.0
      %1586 = vmatmul.mubr.f32.gmra.mrb[0].mxu0 %v1514
      %v1587 = vpop.f32.mrb[0].mxu0
      %v1588 = vadd.f32 %v1508, %v1587
      %v1589 = vpop.f32.mrb[0].mxu0
      %1590 = vdwg.mxu0
      %vm1591 = vcmask 7168
      %1592 = vst.msk [vmem:[%s732] sm:$0xff] %vm1591, %v1583
      %1593 = vst.msk [vmem:[%s732 + $0x8] sm:$0xff] %vm1591, %v1588
      %p1594 = scmp.lt.s32.totalorder %s27, 1
      %s1595 = scalar_select %p1594, %s27, 1
      %s1596 = smul.addr %s1595, 2
      %s1597 = smul.addr %s1596, 8
      %s1598 = scalar_lea.vmem %s14, %s1597
      %p1599 = scmp.lt.s32.totalorder %s27, 1
      %s1600 = scalar_select %p1599, %s27, 1
      %s1601 = smul.addr %s1600, 2
      %s1602 = smul.addr %s1601, 8
      %s1603 = scalar_lea.vmem %s15, %s1602
      // Predicated region
      $region77: #{hgt_forward.4} parent=75 // pred_check
        %p1604 = pneg %p411
      $region78: #{hgt_forward.4} parent=75 // pred_check_branch
        %1606 = sbr.rel (%p1604) target = $region80
      $region79: #{hgt_forward.4} parent=75 // pred_region
        _
      $region80: #{hgt_forward.4} parent=75 // pred_fallthru
        _
      // Predicated region
      $region81: #{hgt_forward.4} parent=75 // pred_check
        %p1607 = pneg %p437
      $region82: #{hgt_forward.4} parent=75 // pred_check_branch
        %1609 = sbr.rel (%p1607) target = $region84
      $region83: #{hgt_forward.4} parent=75 // pred_region
        _
      $region84: #{hgt_forward.4} parent=75 // pred_fallthru
        _
    $region76: #{hgt_forward.4} parent=5 // pred_fallthru
      _
    %p1610 = scmp.le.s32.totalorder 2, %s22
    // Predicated region
    $region85: #{hgt_forward.4} parent=5 // pred_check
      %p1611 = pneg %p1610
    $region86: #{hgt_forward.4} parent=5 // pred_check_branch
      %1613 = sbr.rel (%p1611) target = $region88
    $region87: #{hgt_forward.4} parent=5 // pred_region
      %s1614 = ssub.s32 %s22, 2
      // Predicated region
      $region89: #{hgt_forward.4} parent=87 // pred_check
        %p1615 = pneg %p417
      $region90: #{hgt_forward.4} parent=87 // pred_check_branch
        %1617 = sbr.rel (%p1615) target = $region92
      $region91: #{hgt_forward.4} parent=87 // pred_region
        %p1618 = scmp.lt.s32.totalorder %s28, 1
        %s1619 = scalar_select %p1618, %s28, 1
        %s1620 = smul.addr %s1619, 2
        %s1621 = smul.addr %s1620, 8
        %s1622 = scalar_lea.vmem %s14, %s1621
      $region92: #{hgt_forward.4} parent=87 // pred_fallthru
        _
      // Predicated region
      $region93: #{hgt_forward.4} parent=87 // pred_check
        %p1623 = pneg %p443
      $region94: #{hgt_forward.4} parent=87 // pred_check_branch
        %1625 = sbr.rel (%p1623) target = $region96
      $region95: #{hgt_forward.4} parent=87 // pred_region
        %p1626 = scmp.lt.s32.totalorder %s28, 1
        %s1627 = scalar_select %p1626, %s28, 1
        %s1628 = smul.addr %s1627, 2
        %s1629 = smul.addr %s1628, 8
        %s1630 = scalar_lea.vmem %s15, %s1629
      $region96: #{hgt_forward.4} parent=87 // pred_fallthru
        _
    $region88: #{hgt_forward.4} parent=5 // pred_fallthru
      _
  $region6: #{hgt_forward.4} parent=0 // loop_footer
    %s26 = sadd.s32 1, %s22
  $region7: #{hgt_forward.4} parent=0 // loop_footer_branch
    %21 = sbr.rel target = $region3
  $region8: #{hgt_forward.4} parent=0 // loop_exit
    _

// kernel: hgt_forward.3
$region0: #{hgt_forward.3}
  #allocation0 [shape = 'u32[]', space=smem, size = 0x4, offset = 0x4, fixed_abs, tag = 'smem constant byte address 0x4 - core index']
  #allocation1 [shape = 'u32[144,128]{1,0:T(1,128)}', space=vmem, size = 0x12000, scoped, tag = 'internal scratch']
  %s0 = inlined_call_operand.vmem [shape: f32[2,16,8], index: 0, kind: input, shape index: {}, may-alias: {0,1}]
  %s1 = inlined_call_operand.vmem [shape: f32[2,16,8], index: 1, kind: input, shape index: {}, may-alias: {0,1}]
  %s2 = inlined_call_operand.vmem [shape: f32[2,8,32], index: 2, kind: input, shape index: {}]
  %s3 = inlined_call_operand.vmem [shape: f32[2,1,32], index: 3, kind: input, shape index: {}]
  %s4 = inlined_call_operand.vmem [shape: f32[2,8,64], index: 4, kind: input, shape index: {}]
  %s5 = inlined_call_operand.vmem [shape: f32[2,1,64], index: 5, kind: input, shape index: {}]
  %s6 = inlined_call_operand.vmem [shape: f32[2,16,16], index: 6, kind: input, shape index: {}]
  %s7 = inlined_call_operand.vmem [shape: f32[2,32,32], index: 7, kind: input, shape index: {}]
  %s8 = inlined_call_operand.vmem [shape: f32[2,1,32], index: 8, kind: input, shape index: {}]
  %s9 = inlined_call_operand.vmem [shape: f32[2,1,32], index: 9, kind: input, shape index: {}]
  %s10 = inlined_call_operand.vmem [shape: f32[2,1,32], index: 10, kind: input, shape index: {}]
  %s11 = inlined_call_operand.vmem [shape: f32[2,1,32], index: 11, kind: input, shape index: {}]
  %s12 = inlined_call_operand.vmem [shape: f32[2,32,1], index: 12, kind: input, shape index: {}]
  %s13 = inlined_call_operand.vmem [shape: f32[2,1,1], index: 13, kind: input, shape index: {}]
  %s14 = inlined_call_operand.vmem [shape: f32[2,16,32], index: 14, kind: output, shape index: {0}]
  %s15 = inlined_call_operand.hbm [shape: f32[2,16,1], index: 15, kind: output, shape index: {1}]
  %16 = xla_tuple %s14, %s15
  %s17 = sld [smem:[#allocation0]]
  $region97: #{hgt_forward.3} parent=0
    _
  %s19 = ssub.s32 1, %s17
  %s20 = scalar_select 0, %s19, %s17
  $region1: #{hgt_forward.3} parent=0
    #allocation2 [shape = 'u8[16384]{0}', space=vmem, size = 0x4000, scoped, tag = 'output window, operand 1']
    #allocation3 [shape = 's32[2]{0}', space=sflag, size = 0x8, scoped, tag = 'scoped memory for hgt_forward.3']
    %21 = vsyncpa [#allocation3], 0
    %s22 = scalar_lea.sflag [#allocation3], 1
    %23 = vsyncpa %s22, 0
    loop: start=0, step=1, limit=4
    $region2: #{hgt_forward.3} parent=1 // loop_pre_header
      _
    $region3: #{hgt_forward.3} parent=1 // loop_header
      %s25 = sphi 0, %s29
      %p26 = scmp.ge.s32.totalorder %s25, 4
      %s35 = sphi 0, %s37
      %s38 = sphi 0, %s35
      %s39 = sphi 0, %s38
      %s55 = sphi 0, %s39
      %s63 = sphi 0, %s65
      %s66 = sphi 0, %s63
      %s67 = sphi 0, %s66
      %s83 = sphi 0, %s67
      %s89 = sphi 0, %s91
      %s92 = sphi 0, %s89
      %s93 = sphi 0, %s92
      %s109 = sphi 0, %s93
      %s115 = sphi 0, %s117
      %s118 = sphi 0, %s115
      %s119 = sphi 0, %s118
      %s135 = sphi 0, %s119
      %s141 = sphi 0, %s143
      %s144 = sphi 0, %s141
      %s145 = sphi 0, %s144
      %s161 = sphi 0, %s145
      %s167 = sphi 0, %s169
      %s170 = sphi 0, %s167
      %s171 = sphi 0, %s170
      %s187 = sphi 0, %s171
      %s193 = sphi 0, %s195
      %s196 = sphi 0, %s193
      %s197 = sphi 0, %s196
      %s213 = sphi 0, %s197
      %s219 = sphi 0, %s221
      %s222 = sphi 0, %s219
      %s223 = sphi 0, %s222
      %s239 = sphi 0, %s223
      %s245 = sphi 0, %s247
      %s248 = sphi 0, %s245
      %s249 = sphi 0, %s248
      %s265 = sphi 0, %s249
      %s271 = sphi 0, %s273
      %s274 = sphi 0, %s271
      %s275 = sphi 0, %s274
      %s291 = sphi 0, %s275
      %s297 = sphi 0, %s299
      %s300 = sphi 0, %s297
      %s301 = sphi 0, %s300
      %s317 = sphi 0, %s301
      %s323 = sphi 0, %s325
      %s326 = sphi 0, %s323
      %s327 = sphi 0, %s326
      %s343 = sphi 0, %s327
      %s349 = sphi 0, %s351
      %s352 = sphi 0, %s349
      %s353 = sphi 0, %s352
      %s369 = sphi 0, %s353
      %s375 = sphi 0, %s377
      %s378 = sphi 0, %s375
      %s379 = sphi 0, %s378
      %s395 = sphi 0, %s379
      %s401 = sphi 0, %s403
      %s404 = sphi 0, %s401
      %s405 = sphi 0, %s404
      %s421 = sphi 0, %s405
      %s427 = sphi 0, %s429
      %s430 = sphi 0, %s427
      %s431 = sphi 0, %s430
      %s447 = sphi 0, %s431
    $region4: #{hgt_forward.3} parent=1 // loop_header_branch
      %28 = sbr.rel (%p26) target = $region8
    $region5: #{hgt_forward.3} parent=1 // loop_body
      %s30 = ssub.s32 %s25, 1
      %s31 = ssub.s32 %s25, 2
      %s32 = sadd.s32 %s25, 1
      %s33 = ssub.s32 %s25, %s32
      %p34 = scmp.eq.s32.totalorder %s33, 0
      %s36 = sadd.s32 %s35, 1
      %s37 = scalar_select %p34, %s35, %s36
      %p40 = pneg %p34
      %p41 = scmp.eq.s32.totalorder %s25, 1
      %p42 = por %p40, %p41
      %p43 = scmp.ne.s32.totalorder %s35, %s38
      %p44 = scmp.eq.s32.totalorder %s25, 0
      %p45 = por %p43, %p44
      %p46 = scmp.ne.s32.totalorder %s35, %s38
      %p47 = scmp.eq.s32.totalorder %s30, 1
      %p48 = por %p46, %p47
      %p49 = scmp.ne.s32.totalorder %s38, %s39
      %p50 = scmp.eq.s32.totalorder %s30, 0
      %p51 = por %p49, %p50
      %p52 = scmp.ne.s32.totalorder %s38, %s39
      %p53 = scmp.eq.s32.totalorder %s31, 1
      %p54 = por %p52, %p53
      %p56 = scmp.ne.s32.totalorder %s39, %s55
      %p57 = scmp.eq.s32.totalorder %s31, 0
      %p58 = por %p56, %p57
      %s59 = ssub.s32 1, %s25
      %s60 = ssub.s32 1, %s32
      %s61 = ssub.s32 %s59, %s60
      %p62 = scmp.eq.s32.totalorder %s61, 0
      %s64 = sadd.s32 %s63, 1
      %s65 = scalar_select %p62, %s63, %s64
      %p68 = pneg %p62
      %p69 = scmp.eq.s32.totalorder %s25, 1
      %p70 = por %p68, %p69
      %p71 = scmp.ne.s32.totalorder %s63, %s66
      %p72 = scmp.eq.s32.totalorder %s25, 0
      %p73 = por %p71, %p72
      %p74 = scmp.ne.s32.totalorder %s63, %s66
      %p75 = scmp.eq.s32.totalorder %s30, 1
      %p76 = por %p74, %p75
      %p77 = scmp.ne.s32.totalorder %s66, %s67
      %p78 = scmp.eq.s32.totalorder %s30, 0
      %p79 = por %p77, %p78
      %p80 = scmp.ne.s32.totalorder %s66, %s67
      %p81 = scmp.eq.s32.totalorder %s31, 1
      %p82 = por %p80, %p81
      %p84 = scmp.ne.s32.totalorder %s67, %s83
      %p85 = scmp.eq.s32.totalorder %s31, 0
      %p86 = por %p84, %p85
      %s87 = ssub.s32 %s25, %s32
      %p88 = scmp.eq.s32.totalorder %s87, 0
      %s90 = sadd.s32 %s89, 1
      %s91 = scalar_select %p88, %s89, %s90
      %p94 = pneg %p88
      %p95 = scmp.eq.s32.totalorder %s25, 1
      %p96 = por %p94, %p95
      %p97 = scmp.ne.s32.totalorder %s89, %s92
      %p98 = scmp.eq.s32.totalorder %s25, 0
      %p99 = por %p97, %p98
      %p100 = scmp.ne.s32.totalorder %s89, %s92
      %p101 = scmp.eq.s32.totalorder %s30, 1
      %p102 = por %p100, %p101
      %p103 = scmp.ne.s32.totalorder %s92, %s93
      %p104 = scmp.eq.s32.totalorder %s30, 0
      %p105 = por %p103, %p104
      %p106 = scmp.ne.s32.totalorder %s92, %s93
      %p107 = scmp.eq.s32.totalorder %s31, 1
      %p108 = por %p106, %p107
      %p110 = scmp.ne.s32.totalorder %s93, %s109
      %p111 = scmp.eq.s32.totalorder %s31, 0
      %p112 = por %p110, %p111
      %s113 = ssub.s32 %s25, %s32
      %p114 = scmp.eq.s32.totalorder %s113, 0
      %s116 = sadd.s32 %s115, 1
      %s117 = scalar_select %p114, %s115, %s116
      %p120 = pneg %p114
      %p121 = scmp.eq.s32.totalorder %s25, 1
      %p122 = por %p120, %p121
      %p123 = scmp.ne.s32.totalorder %s115, %s118
      %p124 = scmp.eq.s32.totalorder %s25, 0
      %p125 = por %p123, %p124
      %p126 = scmp.ne.s32.totalorder %s115, %s118
      %p127 = scmp.eq.s32.totalorder %s30, 1
      %p128 = por %p126, %p127
      %p129 = scmp.ne.s32.totalorder %s118, %s119
      %p130 = scmp.eq.s32.totalorder %s30, 0
      %p131 = por %p129, %p130
      %p132 = scmp.ne.s32.totalorder %s118, %s119
      %p133 = scmp.eq.s32.totalorder %s31, 1
      %p134 = por %p132, %p133
      %p136 = scmp.ne.s32.totalorder %s119, %s135
      %p137 = scmp.eq.s32.totalorder %s31, 0
      %p138 = por %p136, %p137
      %s139 = ssub.s32 %s25, %s32
      %p140 = scmp.eq.s32.totalorder %s139, 0
      %s142 = sadd.s32 %s141, 1
      %s143 = scalar_select %p140, %s141, %s142
      %p146 = pneg %p140
      %p147 = scmp.eq.s32.totalorder %s25, 1
      %p148 = por %p146, %p147
      %p149 = scmp.ne.s32.totalorder %s141, %s144
      %p150 = scmp.eq.s32.totalorder %s25, 0
      %p151 = por %p149, %p150
      %p152 = scmp.ne.s32.totalorder %s141, %s144
      %p153 = scmp.eq.s32.totalorder %s30, 1
      %p154 = por %p152, %p153
      %p155 = scmp.ne.s32.totalorder %s144, %s145
      %p156 = scmp.eq.s32.totalorder %s30, 0
      %p157 = por %p155, %p156
      %p158 = scmp.ne.s32.totalorder %s144, %s145
      %p159 = scmp.eq.s32.totalorder %s31, 1
      %p160 = por %p158, %p159
      %p162 = scmp.ne.s32.totalorder %s145, %s161
      %p163 = scmp.eq.s32.totalorder %s31, 0
      %p164 = por %p162, %p163
      %s165 = ssub.s32 %s25, %s32
      %p166 = scmp.eq.s32.totalorder %s165, 0
      %s168 = sadd.s32 %s167, 1
      %s169 = scalar_select %p166, %s167, %s168
      %p172 = pneg %p166
      %p173 = scmp.eq.s32.totalorder %s25, 1
      %p174 = por %p172, %p173
      %p175 = scmp.ne.s32.totalorder %s167, %s170
      %p176 = scmp.eq.s32.totalorder %s25, 0
      %p177 = por %p175, %p176
      %p178 = scmp.ne.s32.totalorder %s167, %s170
      %p179 = scmp.eq.s32.totalorder %s30, 1
      %p180 = por %p178, %p179
      %p181 = scmp.ne.s32.totalorder %s170, %s171
      %p182 = scmp.eq.s32.totalorder %s30, 0
      %p183 = por %p181, %p182
      %p184 = scmp.ne.s32.totalorder %s170, %s171
      %p185 = scmp.eq.s32.totalorder %s31, 1
      %p186 = por %p184, %p185
      %p188 = scmp.ne.s32.totalorder %s171, %s187
      %p189 = scmp.eq.s32.totalorder %s31, 0
      %p190 = por %p188, %p189
      %s191 = ssub.s32 %s25, %s32
      %p192 = scmp.eq.s32.totalorder %s191, 0
      %s194 = sadd.s32 %s193, 1
      %s195 = scalar_select %p192, %s193, %s194
      %p198 = pneg %p192
      %p199 = scmp.eq.s32.totalorder %s25, 1
      %p200 = por %p198, %p199
      %p201 = scmp.ne.s32.totalorder %s193, %s196
      %p202 = scmp.eq.s32.totalorder %s25, 0
      %p203 = por %p201, %p202
      %p204 = scmp.ne.s32.totalorder %s193, %s196
      %p205 = scmp.eq.s32.totalorder %s30, 1
      %p206 = por %p204, %p205
      %p207 = scmp.ne.s32.totalorder %s196, %s197
      %p208 = scmp.eq.s32.totalorder %s30, 0
      %p209 = por %p207, %p208
      %p210 = scmp.ne.s32.totalorder %s196, %s197
      %p211 = scmp.eq.s32.totalorder %s31, 1
      %p212 = por %p210, %p211
      %p214 = scmp.ne.s32.totalorder %s197, %s213
      %p215 = scmp.eq.s32.totalorder %s31, 0
      %p216 = por %p214, %p215
      %s217 = ssub.s32 %s25, %s32
      %p218 = scmp.eq.s32.totalorder %s217, 0
      %s220 = sadd.s32 %s219, 1
      %s221 = scalar_select %p218, %s219, %s220
      %p224 = pneg %p218
      %p225 = scmp.eq.s32.totalorder %s25, 1
      %p226 = por %p224, %p225
      %p227 = scmp.ne.s32.totalorder %s219, %s222
      %p228 = scmp.eq.s32.totalorder %s25, 0
      %p229 = por %p227, %p228
      %p230 = scmp.ne.s32.totalorder %s219, %s222
      %p231 = scmp.eq.s32.totalorder %s30, 1
      %p232 = por %p230, %p231
      %p233 = scmp.ne.s32.totalorder %s222, %s223
      %p234 = scmp.eq.s32.totalorder %s30, 0
      %p235 = por %p233, %p234
      %p236 = scmp.ne.s32.totalorder %s222, %s223
      %p237 = scmp.eq.s32.totalorder %s31, 1
      %p238 = por %p236, %p237
      %p240 = scmp.ne.s32.totalorder %s223, %s239
      %p241 = scmp.eq.s32.totalorder %s31, 0
      %p242 = por %p240, %p241
      %s243 = ssub.s32 %s25, %s32
      %p244 = scmp.eq.s32.totalorder %s243, 0
      %s246 = sadd.s32 %s245, 1
      %s247 = scalar_select %p244, %s245, %s246
      %p250 = pneg %p244
      %p251 = scmp.eq.s32.totalorder %s25, 1
      %p252 = por %p250, %p251
      %p253 = scmp.ne.s32.totalorder %s245, %s248
      %p254 = scmp.eq.s32.totalorder %s25, 0
      %p255 = por %p253, %p254
      %p256 = scmp.ne.s32.totalorder %s245, %s248
      %p257 = scmp.eq.s32.totalorder %s30, 1
      %p258 = por %p256, %p257
      %p259 = scmp.ne.s32.totalorder %s248, %s249
      %p260 = scmp.eq.s32.totalorder %s30, 0
      %p261 = por %p259, %p260
      %p262 = scmp.ne.s32.totalorder %s248, %s249
      %p263 = scmp.eq.s32.totalorder %s31, 1
      %p264 = por %p262, %p263
      %p266 = scmp.ne.s32.totalorder %s249, %s265
      %p267 = scmp.eq.s32.totalorder %s31, 0
      %p268 = por %p266, %p267
      %s269 = ssub.s32 %s25, %s32
      %p270 = scmp.eq.s32.totalorder %s269, 0
      %s272 = sadd.s32 %s271, 1
      %s273 = scalar_select %p270, %s271, %s272
      %p276 = pneg %p270
      %p277 = scmp.eq.s32.totalorder %s25, 1
      %p278 = por %p276, %p277
      %p279 = scmp.ne.s32.totalorder %s271, %s274
      %p280 = scmp.eq.s32.totalorder %s25, 0
      %p281 = por %p279, %p280
      %p282 = scmp.ne.s32.totalorder %s271, %s274
      %p283 = scmp.eq.s32.totalorder %s30, 1
      %p284 = por %p282, %p283
      %p285 = scmp.ne.s32.totalorder %s274, %s275
      %p286 = scmp.eq.s32.totalorder %s30, 0
      %p287 = por %p285, %p286
      %p288 = scmp.ne.s32.totalorder %s274, %s275
      %p289 = scmp.eq.s32.totalorder %s31, 1
      %p290 = por %p288, %p289
      %p292 = scmp.ne.s32.totalorder %s275, %s291
      %p293 = scmp.eq.s32.totalorder %s31, 0
      %p294 = por %p292, %p293
      %s295 = ssub.s32 %s25, %s32
      %p296 = scmp.eq.s32.totalorder %s295, 0
      %s298 = sadd.s32 %s297, 1
      %s299 = scalar_select %p296, %s297, %s298
      %p302 = pneg %p296
      %p303 = scmp.eq.s32.totalorder %s25, 1
      %p304 = por %p302, %p303
      %p305 = scmp.ne.s32.totalorder %s297, %s300
      %p306 = scmp.eq.s32.totalorder %s25, 0
      %p307 = por %p305, %p306
      %p308 = scmp.ne.s32.totalorder %s297, %s300
      %p309 = scmp.eq.s32.totalorder %s30, 1
      %p310 = por %p308, %p309
      %p311 = scmp.ne.s32.totalorder %s300, %s301
      %p312 = scmp.eq.s32.totalorder %s30, 0
      %p313 = por %p311, %p312
      %p314 = scmp.ne.s32.totalorder %s300, %s301
      %p315 = scmp.eq.s32.totalorder %s31, 1
      %p316 = por %p314, %p315
      %p318 = scmp.ne.s32.totalorder %s301, %s317
      %p319 = scmp.eq.s32.totalorder %s31, 0
      %p320 = por %p318, %p319
      %s321 = ssub.s32 %s25, %s32
      %p322 = scmp.eq.s32.totalorder %s321, 0
      %s324 = sadd.s32 %s323, 1
      %s325 = scalar_select %p322, %s323, %s324
      %p328 = pneg %p322
      %p329 = scmp.eq.s32.totalorder %s25, 1
      %p330 = por %p328, %p329
      %p331 = scmp.ne.s32.totalorder %s323, %s326
      %p332 = scmp.eq.s32.totalorder %s25, 0
      %p333 = por %p331, %p332
      %p334 = scmp.ne.s32.totalorder %s323, %s326
      %p335 = scmp.eq.s32.totalorder %s30, 1
      %p336 = por %p334, %p335
      %p337 = scmp.ne.s32.totalorder %s326, %s327
      %p338 = scmp.eq.s32.totalorder %s30, 0
      %p339 = por %p337, %p338
      %p340 = scmp.ne.s32.totalorder %s326, %s327
      %p341 = scmp.eq.s32.totalorder %s31, 1
      %p342 = por %p340, %p341
      %p344 = scmp.ne.s32.totalorder %s327, %s343
      %p345 = scmp.eq.s32.totalorder %s31, 0
      %p346 = por %p344, %p345
      %s347 = ssub.s32 %s25, %s32
      %p348 = scmp.eq.s32.totalorder %s347, 0
      %s350 = sadd.s32 %s349, 1
      %s351 = scalar_select %p348, %s349, %s350
      %p354 = pneg %p348
      %p355 = scmp.eq.s32.totalorder %s25, 1
      %p356 = por %p354, %p355
      %p357 = scmp.ne.s32.totalorder %s349, %s352
      %p358 = scmp.eq.s32.totalorder %s25, 0
      %p359 = por %p357, %p358
      %p360 = scmp.ne.s32.totalorder %s349, %s352
      %p361 = scmp.eq.s32.totalorder %s30, 1
      %p362 = por %p360, %p361
      %p363 = scmp.ne.s32.totalorder %s352, %s353
      %p364 = scmp.eq.s32.totalorder %s30, 0
      %p365 = por %p363, %p364
      %p366 = scmp.ne.s32.totalorder %s352, %s353
      %p367 = scmp.eq.s32.totalorder %s31, 1
      %p368 = por %p366, %p367
      %p370 = scmp.ne.s32.totalorder %s353, %s369
      %p371 = scmp.eq.s32.totalorder %s31, 0
      %p372 = por %p370, %p371
      %s373 = ssub.s32 %s25, %s32
      %p374 = scmp.eq.s32.totalorder %s373, 0
      %s376 = sadd.s32 %s375, 1
      %s377 = scalar_select %p374, %s375, %s376
      %p380 = pneg %p374
      %p381 = scmp.eq.s32.totalorder %s25, 1
      %p382 = por %p380, %p381
      %p383 = scmp.ne.s32.totalorder %s375, %s378
      %p384 = scmp.eq.s32.totalorder %s25, 0
      %p385 = por %p383, %p384
      %p386 = scmp.ne.s32.totalorder %s375, %s378
      %p387 = scmp.eq.s32.totalorder %s30, 1
      %p388 = por %p386, %p387
      %p389 = scmp.ne.s32.totalorder %s378, %s379
      %p390 = scmp.eq.s32.totalorder %s30, 0
      %p391 = por %p389, %p390
      %p392 = scmp.ne.s32.totalorder %s378, %s379
      %p393 = scmp.eq.s32.totalorder %s31, 1
      %p394 = por %p392, %p393
      %p396 = scmp.ne.s32.totalorder %s379, %s395
      %p397 = scmp.eq.s32.totalorder %s31, 0
      %p398 = por %p396, %p397
      %s399 = ssub.s32 %s25, %s32
      %p400 = scmp.eq.s32.totalorder %s399, 0
      %s402 = sadd.s32 %s401, 1
      %s403 = scalar_select %p400, %s401, %s402
      %p406 = pneg %p400
      %p407 = scmp.eq.s32.totalorder %s25, 1
      %p408 = por %p406, %p407
      %p409 = scmp.ne.s32.totalorder %s401, %s404
      %p410 = scmp.eq.s32.totalorder %s25, 0
      %p411 = por %p409, %p410
      %p412 = scmp.ne.s32.totalorder %s401, %s404
      %p413 = scmp.eq.s32.totalorder %s30, 1
      %p414 = por %p412, %p413
      %p415 = scmp.ne.s32.totalorder %s404, %s405
      %p416 = scmp.eq.s32.totalorder %s30, 0
      %p417 = por %p415, %p416
      %p418 = scmp.ne.s32.totalorder %s404, %s405
      %p419 = scmp.eq.s32.totalorder %s31, 1
      %p420 = por %p418, %p419
      %p422 = scmp.ne.s32.totalorder %s405, %s421
      %p423 = scmp.eq.s32.totalorder %s31, 0
      %p424 = por %p422, %p423
      %s425 = ssub.s32 %s25, %s32
      %p426 = scmp.eq.s32.totalorder %s425, 0
      %s428 = sadd.s32 %s427, 1
      %s429 = scalar_select %p426, %s427, %s428
      %p432 = pneg %p426
      %p433 = scmp.eq.s32.totalorder %s25, 1
      %p434 = por %p432, %p433
      %p435 = scmp.ne.s32.totalorder %s427, %s430
      %p436 = scmp.eq.s32.totalorder %s25, 0
      %p437 = por %p435, %p436
      %p438 = scmp.ne.s32.totalorder %s427, %s430
      %p439 = scmp.eq.s32.totalorder %s30, 1
      %p440 = por %p438, %p439
      %p441 = scmp.ne.s32.totalorder %s430, %s431
      %p442 = scmp.eq.s32.totalorder %s30, 0
      %p443 = por %p441, %p442
      %p444 = scmp.ne.s32.totalorder %s430, %s431
      %p445 = scmp.eq.s32.totalorder %s31, 1
      %p446 = por %p444, %p445
      %p448 = scmp.ne.s32.totalorder %s431, %s447
      %p449 = scmp.eq.s32.totalorder %s31, 0
      %p450 = por %p448, %p449
      %p451 = scmp.le.s32.totalorder 1, %s25
      %p452 = scmp.lt.s32.totalorder %s25, 3
      %p453 = pnand %p451, %p452
      %p454 = pneg %p453
      // Predicated region
      $region9: #{hgt_forward.3} parent=5 // pred_check
        _
      $region10: #{hgt_forward.3} parent=5 // pred_check_branch
        %456 = sbr.rel (%p453) target = $region12
      $region11: #{hgt_forward.3} parent=5 // pred_region
        %s457 = ssub.s32 %s25, 1
      $region12: #{hgt_forward.3} parent=5 // pred_fallthru
        _
      %p458 = scmp.lt.s32.totalorder %s25, 2
      // Predicated region
      $region13: #{hgt_forward.3} parent=5 // pred_check
        %p459 = pneg %p458
      $region14: #{hgt_forward.3} parent=5 // pred_check_branch
        %461 = sbr.rel (%p459) target = $region16
      $region15: #{hgt_forward.3} parent=5 // pred_region
        // Predicated region
        $region17: #{hgt_forward.3} parent=15 // pred_check
          %p462 = pneg %p45
        $region18: #{hgt_forward.3} parent=15 // pred_check_branch
          %464 = sbr.rel (%p462) target = $region20
        $region19: #{hgt_forward.3} parent=15 // pred_region
          %p465 = scmp.lt.s32.totalorder %s25, 1
          %s466 = scalar_select %p465, %s25, 1
          %s467 = smul.addr %s466, 2
          %s468 = smul.addr %s467, 8
          %s469 = scalar_lea.vmem %s0, %s468
        $region20: #{hgt_forward.3} parent=15 // pred_fallthru
          _
        // Predicated region
        $region21: #{hgt_forward.3} parent=15 // pred_check
          %p470 = pneg %p73
        $region22: #{hgt_forward.3} parent=15 // pred_check_branch
          %472 = sbr.rel (%p470) target = $region24
        $region23: #{hgt_forward.3} parent=15 // pred_region
          %s473 = ssub.s32 1, %s25
          %p474 = scmp.lt.s32.totalorder %s473, 1
          %s475 = scalar_select %p474, %s473, 1
          %s476 = smul.addr %s475, 2
          %s477 = smul.addr %s476, 8
          %s478 = scalar_lea.vmem %s1, %s477
          %s479 = ssub.s32 1, %s25
        $region24: #{hgt_forward.3} parent=15 // pred_fallthru
          _
        // Predicated region
        $region25: #{hgt_forward.3} parent=15 // pred_check
          %p480 = pneg %p99
        $region26: #{hgt_forward.3} parent=15 // pred_check_branch
          %482 = sbr.rel (%p480) target = $region28
        $region27: #{hgt_forward.3} parent=15 // pred_region
          %p483 = scmp.lt.s32.totalorder %s25, 1
          %s484 = scalar_select %p483, %s25, 1
          %s485 = smul.addr %s484, 8
          %s486 = scalar_lea.vmem %s2, %s485
        $region28: #{hgt_forward.3} parent=15 // pred_fallthru
          _
        // Predicated region
        $region29: #{hgt_forward.3} parent=15 // pred_check
          %p487 = pneg %p125
        $region30: #{hgt_forward.3} parent=15 // pred_check_branch
          %489 = sbr.rel (%p487) target = $region32
        $region31: #{hgt_forward.3} parent=15 // pred_region
          %p490 = scmp.lt.s32.totalorder %s25, 1
          %s491 = scalar_select %p490, %s25, 1
          %s492 = scalar_lea.vmem %s3, %s491
        $region32: #{hgt_forward.3} parent=15 // pred_fallthru
          _
        // Predicated region
        $region33: #{hgt_forward.3} parent=15 // pred_check
          %p493 = pneg %p151
        $region34: #{hgt_forward.3} parent=15 // pred_check_branch
          %495 = sbr.rel (%p493) target = $region36
        $region35: #{hgt_forward.3} parent=15 // pred_region
          %p496 = scmp.lt.s32.totalorder %s25, 1
          %s497 = scalar_select %p496, %s25, 1
          %s498 = smul.addr %s497, 8
          %s499 = scalar_lea.vmem %s4, %s498
        $region36: #{hgt_forward.3} parent=15 // pred_fallthru
          _
        // Predicated region
        $region37: #{hgt_forward.3} parent=15 // pred_check
          %p500 = pneg %p177
        $region38: #{hgt_forward.3} parent=15 // pred_check_branch
          %502 = sbr.rel (%p500) target = $region40
        $region39: #{hgt_forward.3} parent=15 // pred_region
          %p503 = scmp.lt.s32.totalorder %s25, 1
          %s504 = scalar_select %p503, %s25, 1
          %s505 = scalar_lea.vmem %s5, %s504
        $region40: #{hgt_forward.3} parent=15 // pred_fallthru
          _
        // Predicated region
        $region41: #{hgt_forward.3} parent=15 // pred_check
          %p506 = pneg %p203
        $region42: #{hgt_forward.3} parent=15 // pred_check_branch
          %508 = sbr.rel (%p506) target = $region44
        $region43: #{hgt_forward.3} parent=15 // pred_region
          %p509 = scmp.lt.s32.totalorder %s25, 1
          %s510 = scalar_select %p509, %s25, 1
          %s511 = smul.addr %s510, 2
          %s512 = smul.addr %s511, 8
          %s513 = scalar_lea.vmem %s6, %s512
        $region44: #{hgt_forward.3} parent=15 // pred_fallthru
          _
        // Predicated region
        $region45: #{hgt_forward.3} parent=15 // pred_check
          %p514 = pneg %p229
        $region46: #{hgt_forward.3} parent=15 // pred_check_branch
          %516 = sbr.rel (%p514) target = $region48
        $region47: #{hgt_forward.3} parent=15 // pred_region
          %p517 = scmp.lt.s32.totalorder %s25, 1
          %s518 = scalar_select %p517, %s25, 1
          %s519 = smul.addr %s518, 4
          %s520 = smul.addr %s519, 8
          %s521 = scalar_lea.vmem %s7, %s520
        $region48: #{hgt_forward.3} parent=15 // pred_fallthru
          _
        // Predicated region
        $region49: #{hgt_forward.3} parent=15 // pred_check
          %p522 = pneg %p255
        $region50: #{hgt_forward.3} parent=15 // pred_check_branch
          %524 = sbr.rel (%p522) target = $region52
        $region51: #{hgt_forward.3} parent=15 // pred_region
          %p525 = scmp.lt.s32.totalorder %s25, 1
          %s526 = scalar_select %p525, %s25, 1
          %s527 = scalar_lea.vmem %s8, %s526
        $region52: #{hgt_forward.3} parent=15 // pred_fallthru
          _
        // Predicated region
        $region53: #{hgt_forward.3} parent=15 // pred_check
          %p528 = pneg %p281
        $region54: #{hgt_forward.3} parent=15 // pred_check_branch
          %530 = sbr.rel (%p528) target = $region56
        $region55: #{hgt_forward.3} parent=15 // pred_region
          %p531 = scmp.lt.s32.totalorder %s25, 1
          %s532 = scalar_select %p531, %s25, 1
          %s533 = scalar_lea.vmem %s9, %s532
        $region56: #{hgt_forward.3} parent=15 // pred_fallthru
          _
        // Predicated region
        $region57: #{hgt_forward.3} parent=15 // pred_check
          %p534 = pneg %p307
        $region58: #{hgt_forward.3} parent=15 // pred_check_branch
          %536 = sbr.rel (%p534) target = $region60
        $region59: #{hgt_forward.3} parent=15 // pred_region
          %p537 = scmp.lt.s32.totalorder %s25, 1
          %s538 = scalar_select %p537, %s25, 1
          %s539 = scalar_lea.vmem %s10, %s538
        $region60: #{hgt_forward.3} parent=15 // pred_fallthru
          _
        // Predicated region
        $region61: #{hgt_forward.3} parent=15 // pred_check
          %p540 = pneg %p333
        $region62: #{hgt_forward.3} parent=15 // pred_check_branch
          %542 = sbr.rel (%p540) target = $region64
        $region63: #{hgt_forward.3} parent=15 // pred_region
          %p543 = scmp.lt.s32.totalorder %s25, 1
          %s544 = scalar_select %p543, %s25, 1
          %s545 = scalar_lea.vmem %s11, %s544
        $region64: #{hgt_forward.3} parent=15 // pred_fallthru
          _
        // Predicated region
        $region65: #{hgt_forward.3} parent=15 // pred_check
          %p546 = pneg %p359
        $region66: #{hgt_forward.3} parent=15 // pred_check_branch
          %548 = sbr.rel (%p546) target = $region68
        $region67: #{hgt_forward.3} parent=15 // pred_region
          %p549 = scmp.lt.s32.totalorder %s25, 1
          %s550 = scalar_select %p549, %s25, 1
          %s551 = smul.addr %s550, 4
          %s552 = smul.addr %s551, 8
          %s553 = scalar_lea.vmem %s12, %s552
        $region68: #{hgt_forward.3} parent=15 // pred_fallthru
          _
        // Predicated region
        $region69: #{hgt_forward.3} parent=15 // pred_check
          %p554 = pneg %p385
        $region70: #{hgt_forward.3} parent=15 // pred_check_branch
          %556 = sbr.rel (%p554) target = $region72
        $region71: #{hgt_forward.3} parent=15 // pred_region
          %p557 = scmp.lt.s32.totalorder %s25, 1
          %s558 = scalar_select %p557, %s25, 1
          %s559 = scalar_lea.vmem %s13, %s558
        $region72: #{hgt_forward.3} parent=15 // pred_fallthru
          _
      $region16: #{hgt_forward.3} parent=5 // pred_fallthru
        _
      %p560 = scmp.le.s32.totalorder 1, %s25
      %p561 = scmp.lt.s32.totalorder %s25, 3
      %p562 = pnand %p560, %p561
      %p563 = pneg %p562
      // Predicated region
      $region73: #{hgt_forward.3} parent=5 // pred_check
        _
      $region74: #{hgt_forward.3} parent=5 // pred_check_branch
        %565 = sbr.rel (%p562) target = $region76
      $region75: #{hgt_forward.3} parent=5 // pred_region
        %s566 = ssub.s32 %s25, 1
        %p567 = scmp.lt.s32.totalorder %s30, 1
        %s568 = scalar_select %p567, %s30, 1
        %s569 = smul.addr %s568, 2
        %s570 = smul.addr %s569, 8
        %s571 = scalar_lea.vmem %s0, %s570
        %p572 = pneg %p51
        %p573 = pneg %p48
        %s574 = ssub.s32 1, %s30
        %p575 = scmp.lt.s32.totalorder %s574, 1
        %s576 = scalar_select %p575, %s574, 1
        %s577 = smul.addr %s576, 2
        %s578 = smul.addr %s577, 8
        %s579 = scalar_lea.vmem %s1, %s578
        %p580 = pneg %p79
        %p581 = pneg %p76
        %p582 = scmp.lt.s32.totalorder %s30, 1
        %s583 = scalar_select %p582, %s30, 1
        %s584 = smul.addr %s583, 8
        %s585 = scalar_lea.vmem %s2, %s584
        %p586 = pneg %p105
        %p587 = pneg %p102
        %p588 = scmp.lt.s32.totalorder %s30, 1
        %s589 = scalar_select %p588, %s30, 1
        %s590 = scalar_lea.vmem %s3, %s589
        %p591 = pneg %p131
        %p592 = pneg %p128
        %p593 = scmp.lt.s32.totalorder %s30, 1
        %s594 = scalar_select %p593, %s30, 1
        %s595 = smul.addr %s594, 8
        %s596 = scalar_lea.vmem %s4, %s595
        %p597 = pneg %p157
        %p598 = pneg %p154
        %p599 = scmp.lt.s32.totalorder %s30, 1
        %s600 = scalar_select %p599, %s30, 1
        %s601 = scalar_lea.vmem %s5, %s600
        %p602 = pneg %p183
        %p603 = pneg %p180
        %p604 = scmp.lt.s32.totalorder %s30, 1
        %s605 = scalar_select %p604, %s30, 1
        %s606 = smul.addr %s605, 2
        %s607 = smul.addr %s606, 8
        %s608 = scalar_lea.vmem %s6, %s607
        %p609 = pneg %p209
        %p610 = pneg %p206
        %p611 = scmp.lt.s32.totalorder %s30, 1
        %s612 = scalar_select %p611, %s30, 1
        %s613 = smul.addr %s612, 4
        %s614 = smul.addr %s613, 8
        %s615 = scalar_lea.vmem %s7, %s614
        %p616 = pneg %p235
        %p617 = pneg %p232
        %p618 = scmp.lt.s32.totalorder %s30, 1
        %s619 = scalar_select %p618, %s30, 1
        %s620 = scalar_lea.vmem %s8, %s619
        %p621 = pneg %p261
        %p622 = pneg %p258
        %p623 = scmp.lt.s32.totalorder %s30, 1
        %s624 = scalar_select %p623, %s30, 1
        %s625 = scalar_lea.vmem %s9, %s624
        %p626 = pneg %p287
        %p627 = pneg %p284
        %p628 = scmp.lt.s32.totalorder %s30, 1
        %s629 = scalar_select %p628, %s30, 1
        %s630 = scalar_lea.vmem %s10, %s629
        %p631 = pneg %p313
        %p632 = pneg %p310
        %p633 = scmp.lt.s32.totalorder %s30, 1
        %s634 = scalar_select %p633, %s30, 1
        %s635 = scalar_lea.vmem %s11, %s634
        %p636 = pneg %p339
        %p637 = pneg %p336
        %p638 = scmp.lt.s32.totalorder %s30, 1
        %s639 = scalar_select %p638, %s30, 1
        %s640 = smul.addr %s639, 4
        %s641 = smul.addr %s640, 8
        %s642 = scalar_lea.vmem %s12, %s641
        %p643 = pneg %p365
        %p644 = pneg %p362
        %p645 = scmp.lt.s32.totalorder %s30, 1
        %s646 = scalar_select %p645, %s30, 1
        %s647 = scalar_lea.vmem %s13, %s646
        %p648 = pneg %p391
        %p649 = pneg %p388
        %p650 = pneg %p417
        %p651 = pneg %p414
        %p652 = scmp.lt.s32.totalorder %s30, 1
        %s653 = scalar_select %p652, %s30, 1
        %s654 = smul.addr %s653, 2
        %s655 = smul.addr %s654, 8
        %s656 = scalar_lea.vmem %s14, %s655
        %p657 = pneg %p443
        %p658 = pneg %p440
        %s659 = sand.u32 %s430, 1
        %s660 = scalar_lea.sflag [#allocation3], %s659
        %s661 = sand.u32 %s430, 1
        %s662 = smul.addr %s661, 16
        %s663 = scalar_lea.vmem [#allocation2], %s662
        %p664 = scmp.lt.s32.totalorder %s30, 1
        %s665 = scalar_select %p664, %s30, 1
        %s666 = smul.addr %s665, 2
        %s667 = smul.addr %s666, 8
        %s668 = scalar_lea.vmem %s0, %s667
        %s669 = ssub.s32 1, %s30
        %p670 = scmp.lt.s32.totalorder %s669, 1
        %s671 = scalar_select %p670, %s669, 1
        %s672 = smul.addr %s671, 2
        %s673 = smul.addr %s672, 8
        %s674 = scalar_lea.vmem %s1, %s673
        %s675 = ssub.s32 1, %s30
        %p676 = scmp.lt.s32.totalorder %s30, 1
        %s677 = scalar_select %p676, %s30, 1
        %s678 = smul.addr %s677, 8
        %s679 = scalar_lea.vmem %s2, %s678
        %p680 = scmp.lt.s32.totalorder %s30, 1
        %s681 = scalar_select %p680, %s30, 1
        %s682 = scalar_lea.vmem %s3, %s681
        %p683 = scmp.lt.s32.totalorder %s30, 1
        %s684 = scalar_select %p683, %s30, 1
        %s685 = smul.addr %s684, 8
        %s686 = scalar_lea.vmem %s4, %s685
        %p687 = scmp.lt.s32.totalorder %s30, 1
        %s688 = scalar_select %p687, %s30, 1
        %s689 = scalar_lea.vmem %s5, %s688
        %p690 = scmp.lt.s32.totalorder %s30, 1
        %s691 = scalar_select %p690, %s30, 1
        %s692 = smul.addr %s691, 2
        %s693 = smul.addr %s692, 8
        %s694 = scalar_lea.vmem %s6, %s693
        %p695 = scmp.lt.s32.totalorder %s30, 1
        %s696 = scalar_select %p695, %s30, 1
        %s697 = smul.addr %s696, 4
        %s698 = smul.addr %s697, 8
        %s699 = scalar_lea.vmem %s7, %s698
        %p700 = scmp.lt.s32.totalorder %s30, 1
        %s701 = scalar_select %p700, %s30, 1
        %s702 = scalar_lea.vmem %s8, %s701
        %p703 = scmp.lt.s32.totalorder %s30, 1
        %s704 = scalar_select %p703, %s30, 1
        %s705 = scalar_lea.vmem %s9, %s704
        %p706 = scmp.lt.s32.totalorder %s30, 1
        %s707 = scalar_select %p706, %s30, 1
        %s708 = scalar_lea.vmem %s10, %s707
        %p709 = scmp.lt.s32.totalorder %s30, 1
        %s710 = scalar_select %p709, %s30, 1
        %s711 = scalar_lea.vmem %s11, %s710
        %p712 = scmp.lt.s32.totalorder %s30, 1
        %s713 = scalar_select %p712, %s30, 1
        %s714 = smul.addr %s713, 4
        %s715 = smul.addr %s714, 8
        %s716 = scalar_lea.vmem %s12, %s715
        %p717 = scmp.lt.s32.totalorder %s30, 1
        %s718 = scalar_select %p717, %s30, 1
        %s719 = scalar_lea.vmem %s13, %s718
        %p720 = scmp.lt.s32.totalorder %s30, 1
        %s721 = scalar_select %p720, %s30, 1
        %s722 = smul.addr %s721, 2
        %s723 = smul.addr %s722, 8
        %s724 = scalar_lea.vmem %s14, %s723
        %v725 = vld [vmem:[%s668] sm:$0xff]
        %v726 = vld [vmem:[%s668 + $0x8] sm:$0xff]
        %v727 = vld [vmem:[%s674] sm:$0xff]
        %v728 = vld [vmem:[%s674 + $0x8] sm:$0xff]
        %v729 = vld [vmem:[%s679] sm:$0xff]
        %v730 = vld [vmem:[%s682] sm:$0x1]
        %v732 = vlaneseq
        %v733 = vshrl.u32 %v732, 7
        %v734 = vsub.s32 0, %v733
        %v735 = vrot.slane %v730, %v734
        %vm737 = vcmask 64512
        %v739 = vsel %vm737, %v725, 0
        %v742 = vsel %vm737, %v726, 0
        %744 = vmatprep.subr.mxu0 0.0
        %745 = vmatpush1.msra.mxu0 %v729
        %746 = vmatprep.subr.mxu0 0.0
        %747 = vmatpush1.msra.mxu0 0.0
        %748 = vmatprep.subr.mxu0 0.0
        %749 = vmatpush1.msra.mxu0 0.0
        %750 = vmatprep.subr.mxu0 0.0
        %751 = vmatpush1.msra.mxu0 0.0
        %752 = vmatprep.subr.mxu0 0.0
        %753 = vmatpush1.msra.mxu0 0.0
        %754 = vmatprep.subr.mxu0 0.0
        %755 = vmatpush1.msra.mxu0 0.0
        %756 = vmatprep.subr.mxu0 0.0
        %757 = vmatpush1.msra.mxu0 0.0
        %758 = vmatprep.subr.mxu0 0.0
        %759 = vmatpush1.msra.mxu0 0.0
        %760 = vmatprep.subr.mxu0 0.0
        %761 = vmatpush1.msra.mxu0 0.0
        %762 = vmatprep.subr.mxu0 0.0
        %763 = vmatpush1.msra.mxu0 0.0
        %764 = vmatprep.subr.mxu0 0.0
        %765 = vmatpush1.msra.mxu0 0.0
        %766 = vmatprep.subr.mxu0 0.0
        %767 = vmatpush1.msra.mxu0 0.0
        %768 = vmatprep.subr.mxu0 0.0
        %769 = vmatpush1.msra.mxu0 0.0
        %770 = vmatprep.subr.mxu0 0.0
        %771 = vmatpush1.msra.mxu0 0.0
        %772 = vmatprep.subr.mxu0 0.0
        %773 = vmatpush1.msra.mxu0 0.0
        %774 = vmatprep.subr.mxu0 0.0
        %775 = vmatpush1.msra.mxu0 0.0
        %776 = vmatprep.subr.mxu0 0.0
        %777 = vmatpush1.msra.mxu0 0.0
        %778 = vmatprep.subr.mxu0 0.0
        %779 = vmatpush1.msra.mxu0 0.0
        %780 = vmatprep.subr.mxu0 0.0
        %781 = vmatpush1.msra.mxu0 0.0
        %782 = vmatprep.subr.mxu0 0.0
        %783 = vmatpush1.msra.mxu0 0.0
        %784 = vmatprep.subr.mxu0 0.0
        %785 = vmatpush1.msra.mxu0 0.0
        %786 = vmatprep.subr.mxu0 0.0
        %787 = vmatpush1.msra.mxu0 0.0
        %788 = vmatprep.subr.mxu0 0.0
        %789 = vmatpush1.msra.mxu0 0.0
        %790 = vmatprep.subr.mxu0 0.0
        %791 = vmatpush1.msra.mxu0 0.0
        %792 = vmatprep.subr.mxu0 0.0
        %793 = vmatpush1.msra.mxu0 0.0
        %794 = vmatprep.subr.mxu0 0.0
        %795 = vmatpush1.msra.mxu0 0.0
        %796 = vmatprep.subr.mxu0 0.0
        %797 = vmatpush1.msra.mxu0 0.0
        %798 = vmatprep.subr.mxu0 0.0
        %799 = vmatpush1.msra.mxu0 0.0
        %800 = vmatprep.subr.mxu0 0.0
        %801 = vmatpush1.msra.mxu0 0.0
        %802 = vmatprep.subr.mxu0 0.0
        %803 = vmatpush1.msra.mxu0 0.0
        %804 = vmatprep.subr.mxu0 0.0
        %805 = vmatpush1.msra.mxu0 0.0
        %806 = vmatprep.subr.mxu0 0.0
        %807 = vmatpush1.msra.mxu0 0.0
        %808 = vmatprep.mubr.f32.mxu0 0.0
        %809 = vmatmul.mubr.f32.gmra.mrb[0].mxu0 %v739
        %v810 = vpop.f32.mrb[0].mxu0
        %v811 = vadd.f32 %v735, %v810
        %v812 = vpop.f32.mrb[0].mxu0
        %813 = vmatprep.mubr.f32.mxu0 0.0
        %814 = vmatmul.mubr.f32.gmra.mrb[0].mxu0 %v742
        %v815 = vpop.f32.mrb[0].mxu0
        %v816 = vadd.f32 %v735, %v815
        %v817 = vpop.f32.mrb[0].mxu0
        %818 = vdwg.mxu0
        %v819 = vld [vmem:[%s686] sm:$0xff]
        %v820 = vld [vmem:[%s689] sm:$0x1]
        %v822 = vlaneseq
        %v823 = vshrl.u32 %v822, 7
        %v824 = vsub.s32 0, %v823
        %v825 = vrot.slane %v820, %v824
        %v828 = vsel %vm737, %v727, 0
        %v831 = vsel %vm737, %v728, 0
        %833 = vmatprep.subr.mxu0 0.0
        %834 = vmatpush1.msra.mxu0 %v819
        %835 = vmatprep.subr.mxu0 0.0
        %836 = vmatpush1.msra.mxu0 0.0
        %837 = vmatprep.subr.mxu0 0.0
        %838 = vmatpush1.msra.mxu0 0.0
        %839 = vmatprep.subr.mxu0 0.0
        %840 = vmatpush1.msra.mxu0 0.0
        %841 = vmatprep.subr.mxu0 0.0
        %842 = vmatpush1.msra.mxu0 0.0
        %843 = vmatprep.subr.mxu0 0.0
        %844 = vmatpush1.msra.mxu0 0.0
        %845 = vmatprep.subr.mxu0 0.0
        %846 = vmatpush1.msra.mxu0 0.0
        %847 = vmatprep.subr.mxu0 0.0
        %848 = vmatpush1.msra.mxu0 0.0
        %849 = vmatprep.subr.mxu0 0.0
        %850 = vmatpush1.msra.mxu0 0.0
        %851 = vmatprep.subr.mxu0 0.0
        %852 = vmatpush1.msra.mxu0 0.0
        %853 = vmatprep.subr.mxu0 0.0
        %854 = vmatpush1.msra.mxu0 0.0
        %855 = vmatprep.subr.mxu0 0.0
        %856 = vmatpush1.msra.mxu0 0.0
        %857 = vmatprep.subr.mxu0 0.0
        %858 = vmatpush1.msra.mxu0 0.0
        %859 = vmatprep.subr.mxu0 0.0
        %860 = vmatpush1.msra.mxu0 0.0
        %861 = vmatprep.subr.mxu0 0.0
        %862 = vmatpush1.msra.mxu0 0.0
        %863 = vmatprep.subr.mxu0 0.0
        %864 = vmatpush1.msra.mxu0 0.0
        %865 = vmatprep.subr.mxu0 0.0
        %866 = vmatpush1.msra.mxu0 0.0
        %867 = vmatprep.subr.mxu0 0.0
        %868 = vmatpush1.msra.mxu0 0.0
        %869 = vmatprep.subr.mxu0 0.0
        %870 = vmatpush1.msra.mxu0 0.0
        %871 = vmatprep.subr.mxu0 0.0
        %872 = vmatpush1.msra.mxu0 0.0
        %873 = vmatprep.subr.mxu0 0.0
        %874 = vmatpush1.msra.mxu0 0.0
        %875 = vmatprep.subr.mxu0 0.0
        %876 = vmatpush1.msra.mxu0 0.0
        %877 = vmatprep.subr.mxu0 0.0
        %878 = vmatpush1.msra.mxu0 0.0
        %879 = vmatprep.subr.mxu0 0.0
        %880 = vmatpush1.msra.mxu0 0.0
        %881 = vmatprep.subr.mxu0 0.0
        %882 = vmatpush1.msra.mxu0 0.0
        %883 = vmatprep.subr.mxu0 0.0
        %884 = vmatpush1.msra.mxu0 0.0
        %885 = vmatprep.subr.mxu0 0.0
        %886 = vmatpush1.msra.mxu0 0.0
        %887 = vmatprep.subr.mxu0 0.0
        %888 = vmatpush1.msra.mxu0 0.0
        %889 = vmatprep.subr.mxu0 0.0
        %890 = vmatpush1.msra.mxu0 0.0
        %891 = vmatprep.subr.mxu0 0.0
        %892 = vmatpush1.msra.mxu0 0.0
        %893 = vmatprep.subr.mxu0 0.0
        %894 = vmatpush1.msra.mxu0 0.0
        %895 = vmatprep.subr.mxu0 0.0
        %896 = vmatpush1.msra.mxu0 0.0
        %897 = vmatprep.mubr.f32.mxu0 0.0
        %898 = vmatmul.mubr.f32.gmra.mrb[0].mxu0 %v828
        %v899 = vpop.f32.mrb[0].mxu0
        %v900 = vadd.f32 %v825, %v899
        %v901 = vpop.f32.mrb[0].mxu0
        %902 = vmatprep.mubr.f32.mxu0 0.0
        %903 = vmatmul.mubr.f32.gmra.mrb[0].mxu0 %v831
        %v904 = vpop.f32.mrb[0].mxu0
        %v905 = vadd.f32 %v825, %v904
        %v906 = vpop.f32.mrb[0].mxu0
        %907 = vdwg.mxu0
        %v908 = vld [vmem:[%s694] sm:$0xff]
        %v909 = vld [vmem:[%s694 + $0x8] sm:$0xff]
        %vm910 = vcmask 130048
        %v912 = vsel %vm910, %v811, 0
        %v915 = vsel %vm910, %v816, 0
        %v918 = vsel %vm910, %v900, 0
        %v921 = vsel %vm910, %v905, 0
        %923 = vmatprep.subr.mxu0 0.0
        %924 = vmatpush1.xpose.msra.mxu0 %v918
        %925 = vmatprep.subr.mxu0 0.0
        %926 = vmatpush1.xpose.msra.mxu0 %v921
        %927 = vmatprep.subr.mxu0 0.0
        %928 = vmatpush1.xpose.msra.mxu0 0.0
        %929 = vmatprep.subr.mxu0 0.0
        %930 = vmatpush1.xpose.msra.mxu0 0.0
        %931 = vmatprep.subr.mxu0 0.0
        %932 = vmatpush1.xpose.msra.mxu0 0.0
        %933 = vmatprep.subr.mxu0 0.0
        %934 = vmatpush1.xpose.msra.mxu0 0.0
        %935 = vmatprep.subr.mxu0 0.0
        %936 = vmatpush1.xpose.msra.mxu0 0.0
        %937 = vmatprep.subr.mxu0 0.0
        %938 = vmatpush1.xpose.msra.mxu0 0.0
        %939 = vmatprep.subr.mxu0 0.0
        %940 = vmatpush1.xpose.msra.mxu0 0.0
        %941 = vmatprep.subr.mxu0 0.0
        %942 = vmatpush1.xpose.msra.mxu0 0.0
        %943 = vmatprep.subr.mxu0 0.0
        %944 = vmatpush1.xpose.msra.mxu0 0.0
        %945 = vmatprep.subr.mxu0 0.0
        %946 = vmatpush1.xpose.msra.mxu0 0.0
        %947 = vmatprep.subr.mxu0 0.0
        %948 = vmatpush1.xpose.msra.mxu0 0.0
        %949 = vmatprep.subr.mxu0 0.0
        %950 = vmatpush1.xpose.msra.mxu0 0.0
        %951 = vmatprep.subr.mxu0 0.0
        %952 = vmatpush1.xpose.msra.mxu0 0.0
        %953 = vmatprep.subr.mxu0 0.0
        %954 = vmatpush1.xpose.msra.mxu0 0.0
        %955 = vmatprep.subr.mxu0 0.0
        %956 = vmatpush1.xpose.msra.mxu0 0.0
        %957 = vmatprep.subr.mxu0 0.0
        %958 = vmatpush1.xpose.msra.mxu0 0.0
        %959 = vmatprep.subr.mxu0 0.0
        %960 = vmatpush1.xpose.msra.mxu0 0.0
        %961 = vmatprep.subr.mxu0 0.0
        %962 = vmatpush1.xpose.msra.mxu0 0.0
        %963 = vmatprep.subr.mxu0 0.0
        %964 = vmatpush1.xpose.msra.mxu0 0.0
        %965 = vmatprep.subr.mxu0 0.0
        %966 = vmatpush1.xpose.msra.mxu0 0.0
        %967 = vmatprep.subr.mxu0 0.0
        %968 = vmatpush1.xpose.msra.mxu0 0.0
        %969 = vmatprep.subr.mxu0 0.0
        %970 = vmatpush1.xpose.msra.mxu0 0.0
        %971 = vmatprep.subr.mxu0 0.0
        %972 = vmatpush1.xpose.msra.mxu0 0.0
        %973 = vmatprep.subr.mxu0 0.0
        %974 = vmatpush1.xpose.msra.mxu0 0.0
        %975 = vmatprep.subr.mxu0 0.0
        %976 = vmatpush1.xpose.msra.mxu0 0.0
        %977 = vmatprep.subr.mxu0 0.0
        %978 = vmatpush1.xpose.msra.mxu0 0.0
        %979 = vmatprep.subr.mxu0 0.0
        %980 = vmatpush1.xpose.msra.mxu0 0.0
        %981 = vmatprep.subr.mxu0 0.0
        %982 = vmatpush1.xpose.msra.mxu0 0.0
        %983 = vmatprep.subr.mxu0 0.0
        %984 = vmatpush1.xpose.msra.mxu0 0.0
        %985 = vmatprep.subr.mxu0 0.0
        %986 = vmatpush1.xpose.msra.mxu0 0.0
        %987 = vmatprep.mubr.f32.mxu0 0.0
        %988 = vmatmul.mubr.f32.gmra.mrb[0].mxu0 %v912
        %v989 = vpop.f32.mrb[0].mxu0
        %v990 = vadd.f32 0.0, %v989
        %v991 = vpop.f32.mrb[0].mxu0
        %992 = vmatprep.mubr.f32.mxu0 0.0
        %993 = vmatmul.mubr.f32.gmra.mrb[0].mxu0 %v915
        %v994 = vpop.f32.mrb[0].mxu0
        %v995 = vadd.f32 0.0, %v994
        %v996 = vpop.f32.mrb[0].mxu0
        %997 = vdwg.mxu0
        %v998 = vmul.f32 %v990, 0.25
        %v999 = vmul.f32 %v995, 0.25
        %vm1000 = vcmp.gt.f32.partialorder %v908, 0.0
        %vm1001 = vcmp.gt.f32.partialorder %v909, 0.0
        %v1002 = vsel %vm1000, %v998, -1e+30
        %v1003 = vsel %vm1001, %v999, -1e+30
        %v1004 = vsel %vm910, %v1002, -inf
        %1005 = vmax.xlane.f32.xlu0 %v1004
        %v1006 = vpop.xlane.xlu0 %1005
        %v1007 = vsel %vm910, %v1003, -inf
        %1008 = vmax.xlane.f32.xlu0 %v1007
        %v1009 = vpop.xlane.xlu0 %1008
        %v1010 = vsub.f32 %v1002, %v1006
        %v1011 = vsub.f32 %v1003, %v1009
        %v1012 = vmul.f32 %v1010, 1.442695
        %v1013 = vpow.pop %v1012
        %v1014 = vmul.f32 %v1011, 1.442695
        %v1015 = vpow.pop %v1014
        %v1016 = vmul.f32 %v1013, %v908
        %v1017 = vmul.f32 %v1015, %v909
        %v1018 = vsel %vm910, %v1016, 0.0
        %1019 = vadd.xlane.f32.xlu0 %v1018
        %v1020 = vpop.xlane.xlu0 %1019
        %v1021 = vsel %vm910, %v1017, 0.0
        %1022 = vadd.xlane.f32.xlu0 %v1021
        %v1023 = vpop.xlane.xlu0 %1022
        %v1024 = vadd.f32 %v1020, 1e-16
        %v1025 = vadd.f32 %v1023, 1e-16
        %v1026 = vrcp.pop %v1024
        %v1027 = vmul.f32 %v1016, %v1026
        %v1028 = vrcp.pop %v1025
        %v1029 = vmul.f32 %v1017, %v1028
        %1030 = vrot.lane.b32.xlu0 %v900, 96
        %v1031 = vpop.permute.xlu0 %1030
        %1032 = vrot.lane.b32.xlu0 %v905, 96
        %v1033 = vpop.permute.xlu0 %1032
        %v1037 = vsel %vm910, %v1027, 0
        %v1040 = vsel %vm910, %v1029, 0
        %1042 = vmatprep.subr.mxu0 0.0
        %1043 = vmatpush1.msra.mxu0 %v1031
        %1044 = vmatprep.subr.mxu0 0.0
        %1045 = vmatpush1.msra.mxu0 %v1033
        %1046 = vmatprep.subr.mxu0 0.0
        %1047 = vmatpush1.msra.mxu0 0.0
        %1048 = vmatprep.subr.mxu0 0.0
        %1049 = vmatpush1.msra.mxu0 0.0
        %1050 = vmatprep.subr.mxu0 0.0
        %1051 = vmatpush1.msra.mxu0 0.0
        %1052 = vmatprep.subr.mxu0 0.0
        %1053 = vmatpush1.msra.mxu0 0.0
        %1054 = vmatprep.subr.mxu0 0.0
        %1055 = vmatpush1.msra.mxu0 0.0
        %1056 = vmatprep.subr.mxu0 0.0
        %1057 = vmatpush1.msra.mxu0 0.0
        %1058 = vmatprep.subr.mxu0 0.0
        %1059 = vmatpush1.msra.mxu0 0.0
        %1060 = vmatprep.subr.mxu0 0.0
        %1061 = vmatpush1.msra.mxu0 0.0
        %1062 = vmatprep.subr.mxu0 0.0
        %1063 = vmatpush1.msra.mxu0 0.0
        %1064 = vmatprep.subr.mxu0 0.0
        %1065 = vmatpush1.msra.mxu0 0.0
        %1066 = vmatprep.subr.mxu0 0.0
        %1067 = vmatpush1.msra.mxu0 0.0
        %1068 = vmatprep.subr.mxu0 0.0
        %1069 = vmatpush1.msra.mxu0 0.0
        %1070 = vmatprep.subr.mxu0 0.0
        %1071 = vmatpush1.msra.mxu0 0.0
        %1072 = vmatprep.subr.mxu0 0.0
        %1073 = vmatpush1.msra.mxu0 0.0
        %1074 = vmatprep.subr.mxu0 0.0
        %1075 = vmatpush1.msra.mxu0 0.0
        %1076 = vmatprep.subr.mxu0 0.0
        %1077 = vmatpush1.msra.mxu0 0.0
        %1078 = vmatprep.subr.mxu0 0.0
        %1079 = vmatpush1.msra.mxu0 0.0
        %1080 = vmatprep.subr.mxu0 0.0
        %1081 = vmatpush1.msra.mxu0 0.0
        %1082 = vmatprep.subr.mxu0 0.0
        %1083 = vmatpush1.msra.mxu0 0.0
        %1084 = vmatprep.subr.mxu0 0.0
        %1085 = vmatpush1.msra.mxu0 0.0
        %1086 = vmatprep.subr.mxu0 0.0
        %1087 = vmatpush1.msra.mxu0 0.0
        %1088 = vmatprep.subr.mxu0 0.0
        %1089 = vmatpush1.msra.mxu0 0.0
        %1090 = vmatprep.subr.mxu0 0.0
        %1091 = vmatpush1.msra.mxu0 0.0
        %1092 = vmatprep.subr.mxu0 0.0
        %1093 = vmatpush1.msra.mxu0 0.0
        %1094 = vmatprep.subr.mxu0 0.0
        %1095 = vmatpush1.msra.mxu0 0.0
        %1096 = vmatprep.subr.mxu0 0.0
        %1097 = vmatpush1.msra.mxu0 0.0
        %1098 = vmatprep.subr.mxu0 0.0
        %1099 = vmatpush1.msra.mxu0 0.0
        %1100 = vmatprep.subr.mxu0 0.0
        %1101 = vmatpush1.msra.mxu0 0.0
        %1102 = vmatprep.subr.mxu0 0.0
        %1103 = vmatpush1.msra.mxu0 0.0
        %1104 = vmatprep.subr.mxu0 0.0
        %1105 = vmatpush1.msra.mxu0 0.0
        %1106 = vmatprep.mubr.f32.mxu0 0.0
        %1107 = vmatmul.mubr.f32.gmra.mrb[0].mxu0 %v1037
        %v1108 = vpop.f32.mrb[0].mxu0
        %v1109 = vadd.f32 0.0, %v1108
        %v1110 = vpop.f32.mrb[0].mxu0
        %1111 = vmatprep.mubr.f32.mxu0 0.0
        %1112 = vmatmul.mubr.f32.gmra.mrb[0].mxu0 %v1040
        %v1113 = vpop.f32.mrb[0].mxu0
        %v1114 = vadd.f32 0.0, %v1113
        %v1115 = vpop.f32.mrb[0].mxu0
        %1116 = vdwg.mxu0
        %1117 = vrot.lane.b32.xlu0 %v811, 112
        %v1118 = vpop.permute.xlu0 %1117
        %1119 = vrot.lane.b32.xlu0 %v816, 112
        %v1120 = vpop.permute.xlu0 %1119
        %1121 = vrot.lane.b32.xlu0 %v900, 112
        %v1122 = vpop.permute.xlu0 %1121
        %1123 = vrot.lane.b32.xlu0 %v905, 112
        %v1124 = vpop.permute.xlu0 %1123
        %v1125 = vsel %vm910, %v1118, 0
        %v1127 = vsel %vm910, %v1120, 0
        %v1129 = vsel %vm910, %v1122, 0
        %v1131 = vsel %vm910, %v1124, 0
        %1133 = vmatprep.subr.mxu0 0.0
        %1134 = vmatpush1.xpose.msra.mxu0 %v1129
        %1135 = vmatprep.subr.mxu0 0.0
        %1136 = vmatpush1.xpose.msra.mxu0 %v1131
        %1137 = vmatprep.subr.mxu0 0.0
        %1138 = vmatpush1.xpose.msra.mxu0 0.0
        %1139 = vmatprep.subr.mxu0 0.0
        %1140 = vmatpush1.xpose.msra.mxu0 0.0
        %1141 = vmatprep.subr.mxu0 0.0
        %1142 = vmatpush1.xpose.msra.mxu0 0.0
        %1143 = vmatprep.subr.mxu0 0.0
        %1144 = vmatpush1.xpose.msra.mxu0 0.0
        %1145 = vmatprep.subr.mxu0 0.0
        %1146 = vmatpush1.xpose.msra.mxu0 0.0
        %1147 = vmatprep.subr.mxu0 0.0
        %1148 = vmatpush1.xpose.msra.mxu0 0.0
        %1149 = vmatprep.subr.mxu0 0.0
        %1150 = vmatpush1.xpose.msra.mxu0 0.0
        %1151 = vmatprep.subr.mxu0 0.0
        %1152 = vmatpush1.xpose.msra.mxu0 0.0
        %1153 = vmatprep.subr.mxu0 0.0
        %1154 = vmatpush1.xpose.msra.mxu0 0.0
        %1155 = vmatprep.subr.mxu0 0.0
        %1156 = vmatpush1.xpose.msra.mxu0 0.0
        %1157 = vmatprep.subr.mxu0 0.0
        %1158 = vmatpush1.xpose.msra.mxu0 0.0
        %1159 = vmatprep.subr.mxu0 0.0
        %1160 = vmatpush1.xpose.msra.mxu0 0.0
        %1161 = vmatprep.subr.mxu0 0.0
        %1162 = vmatpush1.xpose.msra.mxu0 0.0
        %1163 = vmatprep.subr.mxu0 0.0
        %1164 = vmatpush1.xpose.msra.mxu0 0.0
        %1165 = vmatprep.subr.mxu0 0.0
        %1166 = vmatpush1.xpose.msra.mxu0 0.0
        %1167 = vmatprep.subr.mxu0 0.0
        %1168 = vmatpush1.xpose.msra.mxu0 0.0
        %1169 = vmatprep.subr.mxu0 0.0
        %1170 = vmatpush1.xpose.msra.mxu0 0.0
        %1171 = vmatprep.subr.mxu0 0.0
        %1172 = vmatpush1.xpose.msra.mxu0 0.0
        %1173 = vmatprep.subr.mxu0 0.0
        %1174 = vmatpush1.xpose.msra.mxu0 0.0
        %1175 = vmatprep.subr.mxu0 0.0
        %1176 = vmatpush1.xpose.msra.mxu0 0.0
        %1177 = vmatprep.subr.mxu0 0.0
        %1178 = vmatpush1.xpose.msra.mxu0 0.0
        %1179 = vmatprep.subr.mxu0 0.0
        %1180 = vmatpush1.xpose.msra.mxu0 0.0
        %1181 = vmatprep.subr.mxu0 0.0
        %1182 = vmatpush1.xpose.msra.mxu0 0.0
        %1183 = vmatprep.subr.mxu0 0.0
        %1184 = vmatpush1.xpose.msra.mxu0 0.0
        %1185 = vmatprep.subr.mxu0 0.0
        %1186 = vmatpush1.xpose.msra.mxu0 0.0
        %1187 = vmatprep.subr.mxu0 0.0
        %1188 = vmatpush1.xpose.msra.mxu0 0.0
        %1189 = vmatprep.subr.mxu0 0.0
        %1190 = vmatpush1.xpose.msra.mxu0 0.0
        %1191 = vmatprep.subr.mxu0 0.0
        %1192 = vmatpush1.xpose.msra.mxu0 0.0
        %1193 = vmatprep.subr.mxu0 0.0
        %1194 = vmatpush1.xpose.msra.mxu0 0.0
        %1195 = vmatprep.subr.mxu0 0.0
        %1196 = vmatpush1.xpose.msra.mxu0 0.0
        %1197 = vmatprep.mubr.f32.mxu0 0.0
        %1198 = vmatmul.mubr.f32.gmra.mrb[0].mxu0 %v1125
        %v1199 = vpop.f32.mrb[0].mxu0
        %v1200 = vadd.f32 0.0, %v1199
        %v1201 = vpop.f32.mrb[0].mxu0
        %1202 = vmatprep.mubr.f32.mxu0 0.0
        %1203 = vmatmul.mubr.f32.gmra.mrb[0].mxu0 %v1127
        %v1204 = vpop.f32.mrb[0].mxu0
        %v1205 = vadd.f32 0.0, %v1204
        %v1206 = vpop.f32.mrb[0].mxu0
        %1207 = vdwg.mxu0
        %v1208 = vmul.f32 %v1200, 0.25
        %v1209 = vmul.f32 %v1205, 0.25
        %v1210 = vsel %vm1000, %v1208, -1e+30
        %v1211 = vsel %vm1001, %v1209, -1e+30
        %v1212 = vsel %vm910, %v1210, -inf
        %1213 = vmax.xlane.f32.xlu0 %v1212
        %v1214 = vpop.xlane.xlu0 %1213
        %v1215 = vsel %vm910, %v1211, -inf
        %1216 = vmax.xlane.f32.xlu0 %v1215
        %v1217 = vpop.xlane.xlu0 %1216
        %v1218 = vsub.f32 %v1210, %v1214
        %v1219 = vsub.f32 %v1211, %v1217
        %v1220 = vmul.f32 %v1218, 1.442695
        %v1221 = vpow.pop %v1220
        %v1222 = vmul.f32 %v1219, 1.442695
        %v1223 = vpow.pop %v1222
        %v1224 = vmul.f32 %v1221, %v908
        %v1225 = vmul.f32 %v1223, %v909
        %v1226 = vsel %vm910, %v1224, 0.0
        %1227 = vadd.xlane.f32.xlu0 %v1226
        %v1228 = vpop.xlane.xlu0 %1227
        %v1229 = vsel %vm910, %v1225, 0.0
        %1230 = vadd.xlane.f32.xlu0 %v1229
        %v1231 = vpop.xlane.xlu0 %1230
        %v1232 = vadd.f32 %v1228, 1e-16
        %v1233 = vadd.f32 %v1231, 1e-16
        %v1234 = vrcp.pop %v1232
        %v1235 = vmul.f32 %v1224, %v1234
        %v1236 = vrcp.pop %v1233
        %v1237 = vmul.f32 %v1225, %v1236
        %1238 = vrot.lane.b32.xlu0 %v900, 80
        %v1239 = vpop.permute.xlu0 %1238
        %1240 = vrot.lane.b32.xlu0 %v905, 80
        %v1241 = vpop.permute.xlu0 %1240
        %v1245 = vsel %vm910, %v1235, 0
        %v1248 = vsel %vm910, %v1237, 0
        %1250 = vmatprep.subr.mxu0 0.0
        %1251 = vmatpush1.msra.mxu0 %v1239
        %1252 = vmatprep.subr.mxu0 0.0
        %1253 = vmatpush1.msra.mxu0 %v1241
        %1254 = vmatprep.subr.mxu0 0.0
        %1255 = vmatpush1.msra.mxu0 0.0
        %1256 = vmatprep.subr.mxu0 0.0
        %1257 = vmatpush1.msra.mxu0 0.0
        %1258 = vmatprep.subr.mxu0 0.0
        %1259 = vmatpush1.msra.mxu0 0.0
        %1260 = vmatprep.subr.mxu0 0.0
        %1261 = vmatpush1.msra.mxu0 0.0
        %1262 = vmatprep.subr.mxu0 0.0
        %1263 = vmatpush1.msra.mxu0 0.0
        %1264 = vmatprep.subr.mxu0 0.0
        %1265 = vmatpush1.msra.mxu0 0.0
        %1266 = vmatprep.subr.mxu0 0.0
        %1267 = vmatpush1.msra.mxu0 0.0
        %1268 = vmatprep.subr.mxu0 0.0
        %1269 = vmatpush1.msra.mxu0 0.0
        %1270 = vmatprep.subr.mxu0 0.0
        %1271 = vmatpush1.msra.mxu0 0.0
        %1272 = vmatprep.subr.mxu0 0.0
        %1273 = vmatpush1.msra.mxu0 0.0
        %1274 = vmatprep.subr.mxu0 0.0
        %1275 = vmatpush1.msra.mxu0 0.0
        %1276 = vmatprep.subr.mxu0 0.0
        %1277 = vmatpush1.msra.mxu0 0.0
        %1278 = vmatprep.subr.mxu0 0.0
        %1279 = vmatpush1.msra.mxu0 0.0
        %1280 = vmatprep.subr.mxu0 0.0
        %1281 = vmatpush1.msra.mxu0 0.0
        %1282 = vmatprep.subr.mxu0 0.0
        %1283 = vmatpush1.msra.mxu0 0.0
        %1284 = vmatprep.subr.mxu0 0.0
        %1285 = vmatpush1.msra.mxu0 0.0
        %1286 = vmatprep.subr.mxu0 0.0
        %1287 = vmatpush1.msra.mxu0 0.0
        %1288 = vmatprep.subr.mxu0 0.0
        %1289 = vmatpush1.msra.mxu0 0.0
        %1290 = vmatprep.subr.mxu0 0.0
        %1291 = vmatpush1.msra.mxu0 0.0
        %1292 = vmatprep.subr.mxu0 0.0
        %1293 = vmatpush1.msra.mxu0 0.0
        %1294 = vmatprep.subr.mxu0 0.0
        %1295 = vmatpush1.msra.mxu0 0.0
        %1296 = vmatprep.subr.mxu0 0.0
        %1297 = vmatpush1.msra.mxu0 0.0
        %1298 = vmatprep.subr.mxu0 0.0
        %1299 = vmatpush1.msra.mxu0 0.0
        %1300 = vmatprep.subr.mxu0 0.0
        %1301 = vmatpush1.msra.mxu0 0.0
        %1302 = vmatprep.subr.mxu0 0.0
        %1303 = vmatpush1.msra.mxu0 0.0
        %1304 = vmatprep.subr.mxu0 0.0
        %1305 = vmatpush1.msra.mxu0 0.0
        %1306 = vmatprep.subr.mxu0 0.0
        %1307 = vmatpush1.msra.mxu0 0.0
        %1308 = vmatprep.subr.mxu0 0.0
        %1309 = vmatpush1.msra.mxu0 0.0
        %1310 = vmatprep.subr.mxu0 0.0
        %1311 = vmatpush1.msra.mxu0 0.0
        %1312 = vmatprep.subr.mxu0 0.0
        %1313 = vmatpush1.msra.mxu0 0.0
        %1314 = vmatprep.mubr.f32.mxu0 0.0
        %1315 = vmatmul.mubr.f32.gmra.mrb[0].mxu0 %v1245
        %v1316 = vpop.f32.mrb[0].mxu0
        %v1317 = vadd.f32 0.0, %v1316
        %v1318 = vpop.f32.mrb[0].mxu0
        %1319 = vmatprep.mubr.f32.mxu0 0.0
        %1320 = vmatmul.mubr.f32.gmra.mrb[0].mxu0 %v1248
        %v1321 = vpop.f32.mrb[0].mxu0
        %v1322 = vadd.f32 0.0, %v1321
        %v1323 = vpop.f32.mrb[0].mxu0
        %1324 = vdwg.mxu0
        %1327 = vrot.lane.b32.xlu0 %v1317, 16
        %v1328 = vpop.permute.xlu0 %1327
        %1329 = vrot.lane.b32.xlu0 %v1322, 16
        %v1330 = vpop.permute.xlu0 %1329
        %v1333 = vsel %vm910, %v1109, %v1328
        %v1334 = vsel %vm910, %v1114, %v1330
        %v1335 = vmul.f32 %v1333, 0.5
        %v1336 = vmul.f32 %v1334, 0.5
        %v1337 = vmul.f32 %v1333, 0.044715
        %v1338 = vmul.f32 %v1334, 0.044715
        %v1339 = vmul.f32 %v1337, %v1333
        %v1340 = vmul.f32 %v1338, %v1334
        %v1341 = vmul.f32 %v1339, %v1333
        %v1342 = vmul.f32 %v1340, %v1334
        %v1343 = vadd.f32 %v1333, %v1341
        %v1344 = vadd.f32 %v1334, %v1342
        %v1345 = vmul.f32 %v1343, 0.7978846
        %v1346 = vmul.f32 %v1344, 0.7978846
        %v1347 = vtanh.pop %v1345
        %v1348 = vtanh.pop %v1346
        %v1349 = vadd.f32 %v1347, 1.0
        %v1350 = vadd.f32 %v1348, 1.0
        %v1351 = vmul.f32 %v1335, %v1349
        %v1352 = vmul.f32 %v1336, %v1350
        %v1353 = vld [vmem:[%s699] sm:$0xff]
        %v1354 = vld [vmem:[%s699 + $0x8] sm:$0xff]
        %v1355 = vld [vmem:[%s699 + $0x10] sm:$0xff]
        %v1356 = vld [vmem:[%s699 + $0x18] sm:$0xff]
        %v1357 = vld [vmem:[%s702] sm:$0x1]
        %v1359 = vlaneseq
        %v1360 = vshrl.u32 %v1359, 7
        %v1361 = vsub.s32 0, %v1360
        %v1362 = vrot.slane %v1357, %v1361
        %vm1364 = vcmask 261120
        %v1366 = vsel %vm1364, %v1351, 0
        %v1369 = vsel %vm1364, %v1352, 0
        %1371 = vmatprep.subr.mxu0 0.0
        %1372 = vmatpush1.msra.mxu0 %v1353
        %1373 = vmatprep.subr.mxu0 0.0
        %1374 = vmatpush1.msra.mxu0 %v1354
        %1375 = vmatprep.subr.mxu0 0.0
        %1376 = vmatpush1.msra.mxu0 %v1355
        %1377 = vmatprep.subr.mxu0 0.0
        %1378 = vmatpush1.msra.mxu0 %v1356
        %1379 = vmatprep.subr.mxu0 0.0
        %1380 = vmatpush1.msra.mxu0 0.0
        %1381 = vmatprep.subr.mxu0 0.0
        %1382 = vmatpush1.msra.mxu0 0.0
        %1383 = vmatprep.subr.mxu0 0.0
        %1384 = vmatpush1.msra.mxu0 0.0
        %1385 = vmatprep.subr.mxu0 0.0
        %1386 = vmatpush1.msra.mxu0 0.0
        %1387 = vmatprep.subr.mxu0 0.0
        %1388 = vmatpush1.msra.mxu0 0.0
        %1389 = vmatprep.subr.mxu0 0.0
        %1390 = vmatpush1.msra.mxu0 0.0
        %1391 = vmatprep.subr.mxu0 0.0
        %1392 = vmatpush1.msra.mxu0 0.0
        %1393 = vmatprep.subr.mxu0 0.0
        %1394 = vmatpush1.msra.mxu0 0.0
        %1395 = vmatprep.subr.mxu0 0.0
        %1396 = vmatpush1.msra.mxu0 0.0
        %1397 = vmatprep.subr.mxu0 0.0
        %1398 = vmatpush1.msra.mxu0 0.0
        %1399 = vmatprep.subr.mxu0 0.0
        %1400 = vmatpush1.msra.mxu0 0.0
        %1401 = vmatprep.subr.mxu0 0.0
        %1402 = vmatpush1.msra.mxu0 0.0
        %1403 = vmatprep.subr.mxu0 0.0
        %1404 = vmatpush1.msra.mxu0 0.0
        %1405 = vmatprep.subr.mxu0 0.0
        %1406 = vmatpush1.msra.mxu0 0.0
        %1407 = vmatprep.subr.mxu0 0.0
        %1408 = vmatpush1.msra.mxu0 0.0
        %1409 = vmatprep.subr.mxu0 0.0
        %1410 = vmatpush1.msra.mxu0 0.0
        %1411 = vmatprep.subr.mxu0 0.0
        %1412 = vmatpush1.msra.mxu0 0.0
        %1413 = vmatprep.subr.mxu0 0.0
        %1414 = vmatpush1.msra.mxu0 0.0
        %1415 = vmatprep.subr.mxu0 0.0
        %1416 = vmatpush1.msra.mxu0 0.0
        %1417 = vmatprep.subr.mxu0 0.0
        %1418 = vmatpush1.msra.mxu0 0.0
        %1419 = vmatprep.subr.mxu0 0.0
        %1420 = vmatpush1.msra.mxu0 0.0
        %1421 = vmatprep.subr.mxu0 0.0
        %1422 = vmatpush1.msra.mxu0 0.0
        %1423 = vmatprep.subr.mxu0 0.0
        %1424 = vmatpush1.msra.mxu0 0.0
        %1425 = vmatprep.subr.mxu0 0.0
        %1426 = vmatpush1.msra.mxu0 0.0
        %1427 = vmatprep.subr.mxu0 0.0
        %1428 = vmatpush1.msra.mxu0 0.0
        %1429 = vmatprep.subr.mxu0 0.0
        %1430 = vmatpush1.msra.mxu0 0.0
        %1431 = vmatprep.subr.mxu0 0.0
        %1432 = vmatpush1.msra.mxu0 0.0
        %1433 = vmatprep.subr.mxu0 0.0
        %1434 = vmatpush1.msra.mxu0 0.0
        %1435 = vmatprep.mubr.f32.mxu0 0.0
        %1436 = vmatmul.mubr.f32.gmra.mrb[0].mxu0 %v1366
        %v1437 = vpop.f32.mrb[0].mxu0
        %v1438 = vadd.f32 %v1362, %v1437
        %v1439 = vpop.f32.mrb[0].mxu0
        %1440 = vmatprep.mubr.f32.mxu0 0.0
        %1441 = vmatmul.mubr.f32.gmra.mrb[0].mxu0 %v1369
        %v1442 = vpop.f32.mrb[0].mxu0
        %v1443 = vadd.f32 %v1362, %v1442
        %v1444 = vpop.f32.mrb[0].mxu0
        %1445 = vdwg.mxu0
        %v1446 = vsel %vm1364, %v1438, 0.0
        %1447 = vadd.xlane.f32.xlu0 %v1446
        %v1448 = vpop.xlane.xlu0 %1447
        %v1449 = vsel %vm1364, %v1443, 0.0
        %1450 = vadd.xlane.f32.xlu0 %v1449
        %v1451 = vpop.xlane.xlu0 %1450
        %v1452 = vrcp.pop 32.0
        %v1453 = vmul.f32 %v1448, %v1452
        %v1454 = vmul.f32 %v1451, %v1452
        %v1455 = vsub.f32 %v1438, %v1453
        %v1456 = vsub.f32 %v1443, %v1454
        %v1457 = vmul.f32 %v1455, %v1455
        %v1458 = vmul.f32 %v1456, %v1456
        %v1459 = vsel %vm1364, %v1457, 0.0
        %1460 = vadd.xlane.f32.xlu0 %v1459
        %v1461 = vpop.xlane.xlu0 %1460
        %v1462 = vsel %vm1364, %v1458, 0.0
        %1463 = vadd.xlane.f32.xlu0 %v1462
        %v1464 = vpop.xlane.xlu0 %1463
        %v1465 = vmul.f32 %v1461, %v1452
        %v1466 = vmul.f32 %v1464, %v1452
        %v1467 = vadd.f32 %v1465, 1e-05
        %v1468 = vadd.f32 %v1466, 1e-05
        %v1469 = vrsqrt.pop %v1467
        %v1470 = vrsqrt.pop %v1468
        %v1471 = vmul.f32 %v1455, %v1469
        %v1472 = vmul.f32 %v1456, %v1470
        %v1473 = vld [vmem:[%s708] sm:$0x1]
        %v1475 = vlaneseq
        %v1476 = vshrl.u32 %v1475, 7
        %v1477 = vsub.s32 0, %v1476
        %v1478 = vrot.slane %v1473, %v1477
        %v1480 = vmul.f32 %v1471, %v1478
        %v1481 = vmul.f32 %v1472, %v1478
        %v1482 = vld [vmem:[%s711] sm:$0x1]
        %v1484 = vlaneseq
        %v1485 = vshrl.u32 %v1484, 7
        %v1486 = vsub.s32 0, %v1485
        %v1487 = vrot.slane %v1482, %v1486
        %v1489 = vadd.f32 %v1480, %v1487
        %v1490 = vadd.f32 %v1481, %v1487
        %v1491 = vmul.f32 %v1489, 0.5
        %v1492 = vmul.f32 %v1490, 0.5
        %v1493 = vmul.f32 %v1489, 0.044715
        %v1494 = vmul.f32 %v1490, 0.044715
        %v1495 = vmul.f32 %v1493, %v1489
        %v1496 = vmul.f32 %v1494, %v1490
        %v1497 = vmul.f32 %v1495, %v1489
        %v1498 = vmul.f32 %v1496, %v1490
        %v1499 = vadd.f32 %v1489, %v1497
        %v1500 = vadd.f32 %v1490, %v1498
        %v1501 = vmul.f32 %v1499, 0.7978846
        %v1502 = vmul.f32 %v1500, 0.7978846
        %v1503 = vtanh.pop %v1501
        %v1504 = vtanh.pop %v1502
        %v1505 = vadd.f32 %v1503, 1.0
        %v1506 = vadd.f32 %v1504, 1.0
        %v1507 = vmul.f32 %v1491, %v1505
        %v1508 = vmul.f32 %v1492, %v1506
        %1509 = vst.msk [vmem:[%s724] sm:$0xff] %vm1364, %v1507
        %1510 = vst.msk [vmem:[%s724 + $0x8] sm:$0xff] %vm1364, %v1508
        %v1511 = vld [vmem:[%s716] sm:$0xff]
        %v1512 = vld [vmem:[%s716 + $0x8] sm:$0xff]
        %v1513 = vld [vmem:[%s716 + $0x10] sm:$0xff]
        %v1514 = vld [vmem:[%s716 + $0x18] sm:$0xff]
        %v1515 = vld [vmem:[%s719] sm:$0x1]
        %v1517 = vlaneseq
        %v1518 = vshrl.u32 %v1517, 7
        %v1519 = vsub.s32 0, %v1518
        %v1520 = vrot.slane %v1515, %v1519
        %v1523 = vsel %vm1364, %v1507, 0
        %v1526 = vsel %vm1364, %v1508, 0
        %1528 = vmatprep.subr.mxu0 0.0
        %1529 = vmatpush1.msra.mxu0 %v1511
        %1530 = vmatprep.subr.mxu0 0.0
        %1531 = vmatpush1.msra.mxu0 %v1512
        %1532 = vmatprep.subr.mxu0 0.0
        %1533 = vmatpush1.msra.mxu0 %v1513
        %1534 = vmatprep.subr.mxu0 0.0
        %1535 = vmatpush1.msra.mxu0 %v1514
        %1536 = vmatprep.subr.mxu0 0.0
        %1537 = vmatpush1.msra.mxu0 0.0
        %1538 = vmatprep.subr.mxu0 0.0
        %1539 = vmatpush1.msra.mxu0 0.0
        %1540 = vmatprep.subr.mxu0 0.0
        %1541 = vmatpush1.msra.mxu0 0.0
        %1542 = vmatprep.subr.mxu0 0.0
        %1543 = vmatpush1.msra.mxu0 0.0
        %1544 = vmatprep.subr.mxu0 0.0
        %1545 = vmatpush1.msra.mxu0 0.0
        %1546 = vmatprep.subr.mxu0 0.0
        %1547 = vmatpush1.msra.mxu0 0.0
        %1548 = vmatprep.subr.mxu0 0.0
        %1549 = vmatpush1.msra.mxu0 0.0
        %1550 = vmatprep.subr.mxu0 0.0
        %1551 = vmatpush1.msra.mxu0 0.0
        %1552 = vmatprep.subr.mxu0 0.0
        %1553 = vmatpush1.msra.mxu0 0.0
        %1554 = vmatprep.subr.mxu0 0.0
        %1555 = vmatpush1.msra.mxu0 0.0
        %1556 = vmatprep.subr.mxu0 0.0
        %1557 = vmatpush1.msra.mxu0 0.0
        %1558 = vmatprep.subr.mxu0 0.0
        %1559 = vmatpush1.msra.mxu0 0.0
        %1560 = vmatprep.subr.mxu0 0.0
        %1561 = vmatpush1.msra.mxu0 0.0
        %1562 = vmatprep.subr.mxu0 0.0
        %1563 = vmatpush1.msra.mxu0 0.0
        %1564 = vmatprep.subr.mxu0 0.0
        %1565 = vmatpush1.msra.mxu0 0.0
        %1566 = vmatprep.subr.mxu0 0.0
        %1567 = vmatpush1.msra.mxu0 0.0
        %1568 = vmatprep.subr.mxu0 0.0
        %1569 = vmatpush1.msra.mxu0 0.0
        %1570 = vmatprep.subr.mxu0 0.0
        %1571 = vmatpush1.msra.mxu0 0.0
        %1572 = vmatprep.subr.mxu0 0.0
        %1573 = vmatpush1.msra.mxu0 0.0
        %1574 = vmatprep.subr.mxu0 0.0
        %1575 = vmatpush1.msra.mxu0 0.0
        %1576 = vmatprep.subr.mxu0 0.0
        %1577 = vmatpush1.msra.mxu0 0.0
        %1578 = vmatprep.subr.mxu0 0.0
        %1579 = vmatpush1.msra.mxu0 0.0
        %1580 = vmatprep.subr.mxu0 0.0
        %1581 = vmatpush1.msra.mxu0 0.0
        %1582 = vmatprep.subr.mxu0 0.0
        %1583 = vmatpush1.msra.mxu0 0.0
        %1584 = vmatprep.subr.mxu0 0.0
        %1585 = vmatpush1.msra.mxu0 0.0
        %1586 = vmatprep.subr.mxu0 0.0
        %1587 = vmatpush1.msra.mxu0 0.0
        %1588 = vmatprep.subr.mxu0 0.0
        %1589 = vmatpush1.msra.mxu0 0.0
        %1590 = vmatprep.subr.mxu0 0.0
        %1591 = vmatpush1.msra.mxu0 0.0
        %1592 = vmatprep.mubr.f32.mxu0 0.0
        %1593 = vmatmul.mubr.f32.gmra.mrb[0].mxu0 %v1523
        %v1594 = vpop.f32.mrb[0].mxu0
        %v1595 = vadd.f32 %v1520, %v1594
        %v1596 = vpop.f32.mrb[0].mxu0
        %1597 = vmatprep.mubr.f32.mxu0 0.0
        %1598 = vmatmul.mubr.f32.gmra.mrb[0].mxu0 %v1526
        %v1599 = vpop.f32.mrb[0].mxu0
        %v1600 = vadd.f32 %v1520, %v1599
        %v1601 = vpop.f32.mrb[0].mxu0
        %1602 = vdwg.mxu0
        %vm1603 = vcmask 7168
        %1604 = vst.msk [vmem:[%s663] sm:$0xff] %vm1603, %v1595
        %1605 = vst.msk [vmem:[%s663 + $0x8] sm:$0xff] %vm1603, %v1600
        %p1606 = scmp.lt.s32.totalorder %s30, 1
        %s1607 = scalar_select %p1606, %s30, 1
        %s1608 = smul.addr %s1607, 2
        %s1609 = smul.addr %s1608, 8
        %s1610 = scalar_lea.vmem %s14, %s1609
        %s1611 = sand.u32 %s430, 1
        %s1612 = scalar_lea.sflag [#allocation3], %s1611
        %s1613 = sand.u32 %s430, 1
        %s1614 = smul.addr %s1613, 16
        %s1615 = scalar_lea.vmem [#allocation2], %s1614
        // Predicated region
        $region77: #{hgt_forward.3} parent=75 // pred_check
          %p1616 = pneg %p414
        $region78: #{hgt_forward.3} parent=75 // pred_check_branch
          %1618 = sbr.rel (%p1616) target = $region80
        $region79: #{hgt_forward.3} parent=75 // pred_region
          _
        $region80: #{hgt_forward.3} parent=75 // pred_fallthru
          _
        // Predicated region
        $region81: #{hgt_forward.3} parent=75 // pred_check
          %p1619 = pneg %p440
        $region82: #{hgt_forward.3} parent=75 // pred_check_branch
          %1621 = sbr.rel (%p1619) target = $region84
        $region83: #{hgt_forward.3} parent=75 // pred_region
          %s1623 = ssub.s32 256, 256
          %1624 = vsyncadd %s1612, %s1623
          %s1625 = smul.addr %s30, 2
          %s1626 = smul.addr %s1625, 128
          %s1627 = scalar_lea.hbm %s15, %s1626
          %s1628 = sshll.u32 %s1615, 4
          %s1629 = int_to_ptr.vmem [resolvable:$true] %s1628
          %1634 = dma.vmem_to_hbm [thread:$0]  %s1629, 256, %s1627, %s1612, 128, 128, 8
        $region84: #{hgt_forward.3} parent=75 // pred_fallthru
          _
      $region76: #{hgt_forward.3} parent=5 // pred_fallthru
        _
      %p1635 = scmp.le.s32.totalorder 2, %s25
      // Predicated region
      $region85: #{hgt_forward.3} parent=5 // pred_check
        %p1636 = pneg %p1635
      $region86: #{hgt_forward.3} parent=5 // pred_check_branch
        %1638 = sbr.rel (%p1636) target = $region88
      $region87: #{hgt_forward.3} parent=5 // pred_region
        %s1639 = ssub.s32 %s25, 2
        // Predicated region
        $region89: #{hgt_forward.3} parent=87 // pred_check
          %p1640 = pneg %p420
        $region90: #{hgt_forward.3} parent=87 // pred_check_branch
          %1642 = sbr.rel (%p1640) target = $region92
        $region91: #{hgt_forward.3} parent=87 // pred_region
          %p1643 = scmp.lt.s32.totalorder %s31, 1
          %s1644 = scalar_select %p1643, %s31, 1
          %s1645 = smul.addr %s1644, 2
          %s1646 = smul.addr %s1645, 8
          %s1647 = scalar_lea.vmem %s14, %s1646
        $region92: #{hgt_forward.3} parent=87 // pred_fallthru
          _
        // Predicated region
        $region93: #{hgt_forward.3} parent=87 // pred_check
          %p1648 = pneg %p446
        $region94: #{hgt_forward.3} parent=87 // pred_check_branch
          %1650 = sbr.rel (%p1648) target = $region96
        $region95: #{hgt_forward.3} parent=87 // pred_region
          %s1651 = sand.u32 %s431, 1
          %s1652 = scalar_lea.sflag [#allocation3], %s1651
          %s1653 = sand.u32 %s431, 1
          %s1654 = smul.addr %s1653, 16
          %s1655 = scalar_lea.vmem [#allocation2], %s1654
          %1656 = dma.done %s1652, 256
        $region96: #{hgt_forward.3} parent=87 // pred_fallthru
          _
      $region88: #{hgt_forward.3} parent=5 // pred_fallthru
        _
    $region6: #{hgt_forward.3} parent=1 // loop_footer
      %s29 = sadd.s32 1, %s25
    $region7: #{hgt_forward.3} parent=1 // loop_footer_branch
      %24 = sbr.rel target = $region3
    $region8: #{hgt_forward.3} parent=1 // loop_exit
      _
    %1657 = vsyncpa [#allocation3], 1
    %s1658 = scalar_lea.sflag [#allocation3], 1
    %1659 = vsyncpa %s1658, 1

// kernel: hgt_forward.5
$region0: #{hgt_forward.5}
  #allocation0 [shape = 'u32[]', space=smem, size = 0x4, offset = 0x4, fixed_abs, tag = 'smem constant byte address 0x4 - core index']
  #allocation1 [shape = 'u32[144,128]{1,0:T(1,128)}', space=vmem, size = 0x12000, scoped, tag = 'internal scratch']
  %s0 = inlined_call_operand.vmem [shape: f32[1,128], index: 0, kind: input, shape index: {}]
  %s1 = inlined_call_operand.vmem [shape: f32[128,64], index: 1, kind: input, shape index: {}]
  %s2 = inlined_call_operand.vmem [shape: f32[1,64], index: 2, kind: input, shape index: {}]
  %s3 = inlined_call_operand.vmem [shape: f32[64,32], index: 3, kind: input, shape index: {}]
  %s4 = inlined_call_operand.vmem [shape: f32[1,32], index: 4, kind: input, shape index: {}]
  %s5 = inlined_call_operand.vmem [shape: f32[32,4], index: 5, kind: input, shape index: {}]
  %s6 = inlined_call_operand.vmem [shape: f32[1,4], index: 6, kind: input, shape index: {}]
  %s7 = inlined_call_operand.vmem [shape: f32[1,4], index: 7, kind: output, shape index: {}]
  %s8 = sld [smem:[#allocation0]]
  $region38: #{hgt_forward.5} parent=0
    _
  %s10 = ssub.s32 1, %s8
  %s11 = scalar_select 0, %s10, %s8
  // Predicated region
  $region2: #{hgt_forward.5} parent=0 // pred_check
    _
  $region3: #{hgt_forward.5} parent=0 // pred_check_branch
    %13 = sbr.rel (0) target = $region5
  $region4: #{hgt_forward.5} parent=0 // pred_region
    _
  $region5: #{hgt_forward.5} parent=0 // pred_fallthru
    _
  // Predicated region
  $region6: #{hgt_forward.5} parent=0 // pred_check
    _
  $region7: #{hgt_forward.5} parent=0 // pred_check_branch
    %15 = sbr.rel (0) target = $region9
  $region8: #{hgt_forward.5} parent=0 // pred_region
    _
  $region9: #{hgt_forward.5} parent=0 // pred_fallthru
    _
  // Predicated region
  $region10: #{hgt_forward.5} parent=0 // pred_check
    _
  $region11: #{hgt_forward.5} parent=0 // pred_check_branch
    %17 = sbr.rel (0) target = $region13
  $region12: #{hgt_forward.5} parent=0 // pred_region
    _
  $region13: #{hgt_forward.5} parent=0 // pred_fallthru
    _
  // Predicated region
  $region14: #{hgt_forward.5} parent=0 // pred_check
    _
  $region15: #{hgt_forward.5} parent=0 // pred_check_branch
    %19 = sbr.rel (0) target = $region17
  $region16: #{hgt_forward.5} parent=0 // pred_region
    _
  $region17: #{hgt_forward.5} parent=0 // pred_fallthru
    _
  // Predicated region
  $region18: #{hgt_forward.5} parent=0 // pred_check
    _
  $region19: #{hgt_forward.5} parent=0 // pred_check_branch
    %21 = sbr.rel (0) target = $region21
  $region20: #{hgt_forward.5} parent=0 // pred_region
    _
  $region21: #{hgt_forward.5} parent=0 // pred_fallthru
    _
  // Predicated region
  $region22: #{hgt_forward.5} parent=0 // pred_check
    _
  $region23: #{hgt_forward.5} parent=0 // pred_check_branch
    %23 = sbr.rel (0) target = $region25
  $region24: #{hgt_forward.5} parent=0 // pred_region
    _
  $region25: #{hgt_forward.5} parent=0 // pred_fallthru
    _
  // Predicated region
  $region26: #{hgt_forward.5} parent=0 // pred_check
    _
  $region27: #{hgt_forward.5} parent=0 // pred_check_branch
    %25 = sbr.rel (0) target = $region29
  $region28: #{hgt_forward.5} parent=0 // pred_region
    _
  $region29: #{hgt_forward.5} parent=0 // pred_fallthru
    _
  %v26 = vld [vmem:[%s0] sm:$0x1]
  %v27 = vld [vmem:[%s1] sm:$0xff]
  %v28 = vld [vmem:[%s1 + $0x8] sm:$0xff]
  %v29 = vld [vmem:[%s1 + $0x10] sm:$0xff]
  %v30 = vld [vmem:[%s1 + $0x18] sm:$0xff]
  %v31 = vld [vmem:[%s1 + $0x20] sm:$0xff]
  %v32 = vld [vmem:[%s1 + $0x28] sm:$0xff]
  %v33 = vld [vmem:[%s1 + $0x30] sm:$0xff]
  %v34 = vld [vmem:[%s1 + $0x38] sm:$0xff]
  %v35 = vld [vmem:[%s1 + $0x40] sm:$0xff]
  %v36 = vld [vmem:[%s1 + $0x48] sm:$0xff]
  %v37 = vld [vmem:[%s1 + $0x50] sm:$0xff]
  %v38 = vld [vmem:[%s1 + $0x58] sm:$0xff]
  %v39 = vld [vmem:[%s1 + $0x60] sm:$0xff]
  %v40 = vld [vmem:[%s1 + $0x68] sm:$0xff]
  %v41 = vld [vmem:[%s1 + $0x70] sm:$0xff]
  %v42 = vld [vmem:[%s1 + $0x78] sm:$0xff]
  %v43 = vld [vmem:[%s2] sm:$0x1]
  %44 = vmatprep.subr.mxu0 0.0
  %45 = vmatpush1.msra.mxu0 %v27
  %46 = vmatprep.subr.mxu0 0.0
  %47 = vmatpush1.msra.mxu0 %v28
  %48 = vmatprep.subr.mxu0 0.0
  %49 = vmatpush1.msra.mxu0 %v29
  %50 = vmatprep.subr.mxu0 0.0
  %51 = vmatpush1.msra.mxu0 %v30
  %52 = vmatprep.subr.mxu0 0.0
  %53 = vmatpush1.msra.mxu0 %v31
  %54 = vmatprep.subr.mxu0 0.0
  %55 = vmatpush1.msra.mxu0 %v32
  %56 = vmatprep.subr.mxu0 0.0
  %57 = vmatpush1.msra.mxu0 %v33
  %58 = vmatprep.subr.mxu0 0.0
  %59 = vmatpush1.msra.mxu0 %v34
  %60 = vmatprep.subr.mxu0 0.0
  %61 = vmatpush1.msra.mxu0 %v35
  %62 = vmatprep.subr.mxu0 0.0
  %63 = vmatpush1.msra.mxu0 %v36
  %64 = vmatprep.subr.mxu0 0.0
  %65 = vmatpush1.msra.mxu0 %v37
  %66 = vmatprep.subr.mxu0 0.0
  %67 = vmatpush1.msra.mxu0 %v38
  %68 = vmatprep.subr.mxu0 0.0
  %69 = vmatpush1.msra.mxu0 %v39
  %70 = vmatprep.subr.mxu0 0.0
  %71 = vmatpush1.msra.mxu0 %v40
  %72 = vmatprep.subr.mxu0 0.0
  %73 = vmatpush1.msra.mxu0 %v41
  %74 = vmatprep.subr.mxu0 0.0
  %75 = vmatpush1.msra.mxu0 %v42
  %76 = vmatprep.subr.mxu0 0.0
  %77 = vmatpush1.msra.mxu0 0.0
  %78 = vmatprep.subr.mxu0 0.0
  %79 = vmatpush1.msra.mxu0 0.0
  %80 = vmatprep.subr.mxu0 0.0
  %81 = vmatpush1.msra.mxu0 0.0
  %82 = vmatprep.subr.mxu0 0.0
  %83 = vmatpush1.msra.mxu0 0.0
  %84 = vmatprep.subr.mxu0 0.0
  %85 = vmatpush1.msra.mxu0 0.0
  %86 = vmatprep.subr.mxu0 0.0
  %87 = vmatpush1.msra.mxu0 0.0
  %88 = vmatprep.subr.mxu0 0.0
  %89 = vmatpush1.msra.mxu0 0.0
  %90 = vmatprep.subr.mxu0 0.0
  %91 = vmatpush1.msra.mxu0 0.0
  %92 = vmatprep.subr.mxu0 0.0
  %93 = vmatpush1.msra.mxu0 0.0
  %94 = vmatprep.subr.mxu0 0.0
  %95 = vmatpush1.msra.mxu0 0.0
  %96 = vmatprep.subr.mxu0 0.0
  %97 = vmatpush1.msra.mxu0 0.0
  %98 = vmatprep.subr.mxu0 0.0
  %99 = vmatpush1.msra.mxu0 0.0
  %100 = vmatprep.subr.mxu0 0.0
  %101 = vmatpush1.msra.mxu0 0.0
  %102 = vmatprep.subr.mxu0 0.0
  %103 = vmatpush1.msra.mxu0 0.0
  %104 = vmatprep.subr.mxu0 0.0
  %105 = vmatpush1.msra.mxu0 0.0
  %106 = vmatprep.subr.mxu0 0.0
  %107 = vmatpush1.msra.mxu0 0.0
  %108 = vmatprep.mubr.f32.mxu0 0.0
  %109 = vmatmul.mubr.f32.gmra.mrb[0].mxu0 %v26
  %v110 = vpop.f32.mrb[0].mxu0
  %v111 = vadd.f32 %v43, %v110
  %v112 = vpop.f32.mrb[0].mxu0
  %113 = vdwg.mxu0
  %v114 = vmul.f32 %v111, 0.5
  %v115 = vmul.f32 %v111, 0.044715
  %v116 = vmul.f32 %v115, %v111
  %v117 = vmul.f32 %v116, %v111
  %v118 = vadd.f32 %v111, %v117
  %v119 = vmul.f32 %v118, 0.7978846
  %v120 = vtanh.pop %v119
  %v121 = vadd.f32 %v120, 1.0
  %v122 = vmul.f32 %v114, %v121
  %v123 = vld [vmem:[%s3] sm:$0xff]
  %v124 = vld [vmem:[%s3 + $0x8] sm:$0xff]
  %v125 = vld [vmem:[%s3 + $0x10] sm:$0xff]
  %v126 = vld [vmem:[%s3 + $0x18] sm:$0xff]
  %v127 = vld [vmem:[%s3 + $0x20] sm:$0xff]
  %v128 = vld [vmem:[%s3 + $0x28] sm:$0xff]
  %v129 = vld [vmem:[%s3 + $0x30] sm:$0xff]
  %v130 = vld [vmem:[%s3 + $0x38] sm:$0xff]
  %v131 = vld [vmem:[%s4] sm:$0x1]
  %vm132 = vcmask 523264
  %v134 = vsel %vm132, %v122, 0
  %136 = vmatprep.subr.mxu0 0.0
  %137 = vmatpush1.msra.mxu0 %v123
  %138 = vmatprep.subr.mxu0 0.0
  %139 = vmatpush1.msra.mxu0 %v124
  %140 = vmatprep.subr.mxu0 0.0
  %141 = vmatpush1.msra.mxu0 %v125
  %142 = vmatprep.subr.mxu0 0.0
  %143 = vmatpush1.msra.mxu0 %v126
  %144 = vmatprep.subr.mxu0 0.0
  %145 = vmatpush1.msra.mxu0 %v127
  %146 = vmatprep.subr.mxu0 0.0
  %147 = vmatpush1.msra.mxu0 %v128
  %148 = vmatprep.subr.mxu0 0.0
  %149 = vmatpush1.msra.mxu0 %v129
  %150 = vmatprep.subr.mxu0 0.0
  %151 = vmatpush1.msra.mxu0 %v130
  %152 = vmatprep.subr.mxu0 0.0
  %153 = vmatpush1.msra.mxu0 0.0
  %154 = vmatprep.subr.mxu0 0.0
  %155 = vmatpush1.msra.mxu0 0.0
  %156 = vmatprep.subr.mxu0 0.0
  %157 = vmatpush1.msra.mxu0 0.0
  %158 = vmatprep.subr.mxu0 0.0
  %159 = vmatpush1.msra.mxu0 0.0
  %160 = vmatprep.subr.mxu0 0.0
  %161 = vmatpush1.msra.mxu0 0.0
  %162 = vmatprep.subr.mxu0 0.0
  %163 = vmatpush1.msra.mxu0 0.0
  %164 = vmatprep.subr.mxu0 0.0
  %165 = vmatpush1.msra.mxu0 0.0
  %166 = vmatprep.subr.mxu0 0.0
  %167 = vmatpush1.msra.mxu0 0.0
  %168 = vmatprep.subr.mxu0 0.0
  %169 = vmatpush1.msra.mxu0 0.0
  %170 = vmatprep.subr.mxu0 0.0
  %171 = vmatpush1.msra.mxu0 0.0
  %172 = vmatprep.subr.mxu0 0.0
  %173 = vmatpush1.msra.mxu0 0.0
  %174 = vmatprep.subr.mxu0 0.0
  %175 = vmatpush1.msra.mxu0 0.0
  %176 = vmatprep.subr.mxu0 0.0
  %177 = vmatpush1.msra.mxu0 0.0
  %178 = vmatprep.subr.mxu0 0.0
  %179 = vmatpush1.msra.mxu0 0.0
  %180 = vmatprep.subr.mxu0 0.0
  %181 = vmatpush1.msra.mxu0 0.0
  %182 = vmatprep.subr.mxu0 0.0
  %183 = vmatpush1.msra.mxu0 0.0
  %184 = vmatprep.subr.mxu0 0.0
  %185 = vmatpush1.msra.mxu0 0.0
  %186 = vmatprep.subr.mxu0 0.0
  %187 = vmatpush1.msra.mxu0 0.0
  %188 = vmatprep.subr.mxu0 0.0
  %189 = vmatpush1.msra.mxu0 0.0
  %190 = vmatprep.subr.mxu0 0.0
  %191 = vmatpush1.msra.mxu0 0.0
  %192 = vmatprep.subr.mxu0 0.0
  %193 = vmatpush1.msra.mxu0 0.0
  %194 = vmatprep.subr.mxu0 0.0
  %195 = vmatpush1.msra.mxu0 0.0
  %196 = vmatprep.subr.mxu0 0.0
  %197 = vmatpush1.msra.mxu0 0.0
  %198 = vmatprep.subr.mxu0 0.0
  %199 = vmatpush1.msra.mxu0 0.0
  %200 = vmatprep.mubr.f32.mxu0 0.0
  %201 = vmatmul.mubr.f32.gmra.mrb[0].mxu0 %v134
  %v202 = vpop.f32.mrb[0].mxu0
  %v203 = vadd.f32 %v131, %v202
  %v204 = vpop.f32.mrb[0].mxu0
  %205 = vdwg.mxu0
  %v206 = vmul.f32 %v203, 0.5
  %v207 = vmul.f32 %v203, 0.044715
  %v208 = vmul.f32 %v207, %v203
  %v209 = vmul.f32 %v208, %v203
  %v210 = vadd.f32 %v203, %v209
  %v211 = vmul.f32 %v210, 0.7978846
  %v212 = vtanh.pop %v211
  %v213 = vadd.f32 %v212, 1.0
  %v214 = vmul.f32 %v206, %v213
  %v215 = vld [vmem:[%s5] sm:$0xff]
  %v216 = vld [vmem:[%s5 + $0x8] sm:$0xff]
  %v217 = vld [vmem:[%s5 + $0x10] sm:$0xff]
  %v218 = vld [vmem:[%s5 + $0x18] sm:$0xff]
  %v219 = vld [vmem:[%s6] sm:$0x1]
  %vm220 = vcmask 261120
  %v222 = vsel %vm220, %v214, 0
  %224 = vmatprep.subr.mxu0 0.0
  %225 = vmatpush1.msra.mxu0 %v215
  %226 = vmatprep.subr.mxu0 0.0
  %227 = vmatpush1.msra.mxu0 %v216
  %228 = vmatprep.subr.mxu0 0.0
  %229 = vmatpush1.msra.mxu0 %v217
  %230 = vmatprep.subr.mxu0 0.0
  %231 = vmatpush1.msra.mxu0 %v218
  %232 = vmatprep.subr.mxu0 0.0
  %233 = vmatpush1.msra.mxu0 0.0
  %234 = vmatprep.subr.mxu0 0.0
  %235 = vmatpush1.msra.mxu0 0.0
  %236 = vmatprep.subr.mxu0 0.0
  %237 = vmatpush1.msra.mxu0 0.0
  %238 = vmatprep.subr.mxu0 0.0
  %239 = vmatpush1.msra.mxu0 0.0
  %240 = vmatprep.subr.mxu0 0.0
  %241 = vmatpush1.msra.mxu0 0.0
  %242 = vmatprep.subr.mxu0 0.0
  %243 = vmatpush1.msra.mxu0 0.0
  %244 = vmatprep.subr.mxu0 0.0
  %245 = vmatpush1.msra.mxu0 0.0
  %246 = vmatprep.subr.mxu0 0.0
  %247 = vmatpush1.msra.mxu0 0.0
  %248 = vmatprep.subr.mxu0 0.0
  %249 = vmatpush1.msra.mxu0 0.0
  %250 = vmatprep.subr.mxu0 0.0
  %251 = vmatpush1.msra.mxu0 0.0
  %252 = vmatprep.subr.mxu0 0.0
  %253 = vmatpush1.msra.mxu0 0.0
  %254 = vmatprep.subr.mxu0 0.0
  %255 = vmatpush1.msra.mxu0 0.0
  %256 = vmatprep.subr.mxu0 0.0
  %257 = vmatpush1.msra.mxu0 0.0
  %258 = vmatprep.subr.mxu0 0.0
  %259 = vmatpush1.msra.mxu0 0.0
  %260 = vmatprep.subr.mxu0 0.0
  %261 = vmatpush1.msra.mxu0 0.0
  %262 = vmatprep.subr.mxu0 0.0
  %263 = vmatpush1.msra.mxu0 0.0
  %264 = vmatprep.subr.mxu0 0.0
  %265 = vmatpush1.msra.mxu0 0.0
  %266 = vmatprep.subr.mxu0 0.0
  %267 = vmatpush1.msra.mxu0 0.0
  %268 = vmatprep.subr.mxu0 0.0
  %269 = vmatpush1.msra.mxu0 0.0
  %270 = vmatprep.subr.mxu0 0.0
  %271 = vmatpush1.msra.mxu0 0.0
  %272 = vmatprep.subr.mxu0 0.0
  %273 = vmatpush1.msra.mxu0 0.0
  %274 = vmatprep.subr.mxu0 0.0
  %275 = vmatpush1.msra.mxu0 0.0
  %276 = vmatprep.subr.mxu0 0.0
  %277 = vmatpush1.msra.mxu0 0.0
  %278 = vmatprep.subr.mxu0 0.0
  %279 = vmatpush1.msra.mxu0 0.0
  %280 = vmatprep.subr.mxu0 0.0
  %281 = vmatpush1.msra.mxu0 0.0
  %282 = vmatprep.subr.mxu0 0.0
  %283 = vmatpush1.msra.mxu0 0.0
  %284 = vmatprep.subr.mxu0 0.0
  %285 = vmatpush1.msra.mxu0 0.0
  %286 = vmatprep.subr.mxu0 0.0
  %287 = vmatpush1.msra.mxu0 0.0
  %288 = vmatprep.mubr.f32.mxu0 0.0
  %289 = vmatmul.mubr.f32.gmra.mrb[0].mxu0 %v222
  %v290 = vpop.f32.mrb[0].mxu0
  %v291 = vadd.f32 %v219, %v290
  %v292 = vpop.f32.mrb[0].mxu0
  %293 = vdwg.mxu0
  %vm294 = vcmask 24576
  %295 = vst.msk [vmem:[%s7] sm:$0x1] %vm294, %v291
  // Predicated region
  $region30: #{hgt_forward.5} parent=0 // pred_check
    _
  $region31: #{hgt_forward.5} parent=0 // pred_check_branch
    %297 = sbr.rel (0) target = $region33
  $region32: #{hgt_forward.5} parent=0 // pred_region
    _
  $region33: #{hgt_forward.5} parent=0 // pred_fallthru
    _
  // Predicated region
  $region34: #{hgt_forward.5} parent=0 // pred_check
    _
  $region35: #{hgt_forward.5} parent=0 // pred_check_branch
    %299 = sbr.rel (0) target = $region37
  $region36: #{hgt_forward.5} parent=0 // pred_region
    _
  $region37: #{hgt_forward.5} parent=0 // pred_fallthru
    _

</llo_original>
